<compile_context>
chip_gen: v7x
topology: tpu7x:2x2x1
jax: 0.10.0
libtpu: 0.0.40
codegen_flags: <defaults>
</compile_context>

<pallas_src>
import jax
import jax.numpy as jnp
from jax.experimental import pallas as pl
from jax.experimental.pallas import tpu as pltpu


def _mul_add_kernel(x_ref, y_ref, o_ref):
    # fn(x, y) = x * y + y   (the wrapped function's forward)
    y = y_ref[...]
    o_ref[...] = x_ref[...] * y + y


def _round_up(n: int, m: int) -> int:
    return ((n + m - 1) // m) * m


def _sublane_multiple(dtype) -> int:
    """Minimum sublane tile height for a dtype (packed dtypes stack along sublanes)."""
    itemsize = jnp.dtype(dtype).itemsize
    if itemsize >= 4:
        return 8
    if itemsize == 2:
        return 16
    return 32


_LANE_WIDTHS = (1024, 512, 256, 128)    # lane-dense candidates (multiples of 128)
_TARGET_BLOCK_BYTES = 2 * 1024 * 1024   # ~2 MiB per operand per block
_BYPASS_BYTES = 256 * 1024              # below this, fused XLA is strictly cheaper


def _xla_fallback(x: jax.Array, y: jax.Array) -> jax.Array:
    # Single fused elementwise pass; also covers torch-style broadcasting.
    return x * y + y


def wrapper_module_forward(x: jax.Array, y: jax.Array) -> jax.Array:
    """Pallas equivalent of WrapperModule(fn)(x, y) with fn = lambda a, b: a*b + b."""
    # Broadcasting / mixed-dtype inputs (torch.mul semantics): defer to XLA.
    if x.shape != y.shape or x.dtype != y.dtype:
        return _xla_fallback(x, y)

    n_elem = x.size
    itemsize = jnp.dtype(x.dtype).itemsize

    # Tiny inputs: pallas_call fixed overhead dominates; XLA fuses mul+add.
    if n_elem == 0 or n_elem * itemsize < _BYPASS_BYTES:
        return _xla_fallback(x, y)

    # Find a lane-dense width dividing the element count exactly, so the
    # flatten+reshape below is a free bitcast (no pad, no slice, no extra copies).
    wide = next((w for w in _LANE_WIDTHS if n_elem % w == 0), None)
    if wide is None:
        # No zero-copy lane-aligned view exists (e.g. odd element counts); any
        # pad/slice/concat around a Pallas call adds full extra HBM passes,
        # while the fused XLA elementwise is already bandwidth-optimal.
        return _xla_fallback(x, y)

    orig_shape = x.shape
    rows = n_elem // wide
    sub = _sublane_multiple(x.dtype)

    # Block height: ~2 MiB per operand, rounded to the dtype's sublane multiple,
    # capped so the grid has >= 2 steps (keeps both v7x TensorCores streaming).
    target_rows = max(sub, _round_up(_TARGET_BLOCK_BYTES // (wide * itemsize), sub))
    if rows <= sub:
        block_rows = sub
    else:
        block_rows = min(target_rows, _round_up(pl.cdiv(rows, 2), sub))
    grid = (pl.cdiv(rows, block_rows),)  # last block may be partial -> masked edge

    # Explicit scoped-VMEM budget: 3 operands x 2 pipeline buffers + headroom.
    block_bytes = block_rows * wide * itemsize
    vmem_limit = min(48 * 1024 * 1024,
                     max(16 * 1024 * 1024, 3 * 2 * block_bytes + 8 * 1024 * 1024))

    x2 = x.reshape(rows, wide)  # contiguous reshape: free bitcast
    y2 = y.reshape(rows, wide)

    spec = pl.BlockSpec((block_rows, wide), lambda i: (i, 0))

    out2 = pl.pallas_call(
        _mul_add_kernel,
        out_shape=jax.ShapeDtypeStruct((rows, wide), x.dtype),
        grid_spec=pltpu.PrefetchScalarGridSpec(
            num_scalar_prefetch=0,
            grid=grid,
            in_specs=[spec, spec],
            out_specs=spec,
        ),
        compiler_params=pltpu.CompilerParams(
            dimension_semantics=("parallel",),
            vmem_limit_bytes=vmem_limit,
        ),
    )(x2, y2)

    return out2.reshape(orig_shape)


if __name__ == "__main__":
    key = jax.random.PRNGKey(0)
    keys = jax.random.split(key, 10)

    def check(xx, yy, atol=1e-6, rtol=1e-6):
        out = jax.block_until_ready(wrapper_module_forward(xx, yy))
        ref = xx * yy + yy
        assert out.shape == ref.shape and out.dtype == ref.dtype
        assert jnp.allclose(out, ref, atol=atol, rtol=rtol)

    # Small NCHW-style shape from the test (tiny -> fused-XLA bypass path).
    x = jax.random.normal(keys[0], (2, 4, 16, 16), dtype=jnp.float32)
    y = jax.random.normal(keys[1], (2, 4, 16, 16), dtype=jnp.float32)
    check(x, y)

    # Odd, non-lane-alignable shape: XLA fallback path (no padding copies).
    a = jax.random.normal(keys[2], (3, 5, 17, 19), dtype=jnp.float32)
    b = jax.random.normal(keys[3], (3, 5, 17, 19), dtype=jnp.float32)
    check(a, b)

    # Pallas path, exact tiling: 1M elems -> rows=1024, block_rows=512, grid=2.
    p = jax.random.normal(keys[4], (4, 8, 256, 128), dtype=jnp.float32)
    q = jax.random.normal(keys[5], (4, 8, 256, 128), dtype=jnp.float32)
    check(p, q)

    # Pallas path, partial last block (rows=520, block_rows=264 -> masked edge).
    r = jax.random.normal(keys[6], (8, 4, 128, 130), dtype=jnp.float32)
    s = jax.random.normal(keys[7], (8, 4, 128, 130), dtype=jnp.float32)
    check(r, s)

    # Pallas path, packed dtype (bf16 -> 16-row sublane multiple).
    u = jax.random.normal(keys[8], (4, 8, 256, 128), dtype=jnp.bfloat16)
    v = jax.random.normal(keys[9], (4, 8, 256, 128), dtype=jnp.bfloat16)
    check(u, v, atol=1e-2, rtol=1e-2)

    print("KERNEL_OK")
</pallas_src>

<mosaic_0001>
module attributes {stable_mosaic.version = 11 : i64} {
  func.func @_mul_add_kernel(%arg0: i32, %arg1: memref<512x1024xf32, #tpu.memory_space<vmem>>, %arg2: memref<512x1024xf32, #tpu.memory_space<vmem>>, %arg3: memref<512x1024xf32, #tpu.memory_space<vmem>>) attributes {dimension_semantics = [#tpu.dimension_semantics<parallel>], iteration_bounds = array<i64: 2>, scalar_prefetch = 0 : i64, scratch_operands = 0 : i64, tpu.core_type = #tpu.core_type<tc>, window_params = [{transform_indices = @transform_0, window_bounds = array<i64: 512, 1024>}, {transform_indices = @transform_1, window_bounds = array<i64: 512, 1024>}, {transform_indices = @transform_2, window_bounds = array<i64: 512, 1024>}]} {
    %c0 = arith.constant 0 : index
    %c0_0 = arith.constant 0 : index
    %0 = vector.load %arg2[%c0, %c0_0] : memref<512x1024xf32, #tpu.memory_space<vmem>>, vector<512x1024xf32>
    %c0_1 = arith.constant 0 : index
    %c0_2 = arith.constant 0 : index
    %1 = vector.load %arg1[%c0_1, %c0_2] : memref<512x1024xf32, #tpu.memory_space<vmem>>, vector<512x1024xf32>
    %2 = arith.mulf %1, %0 : vector<512x1024xf32>
    %3 = arith.addf %2, %0 : vector<512x1024xf32>
    %c0_3 = arith.constant 0 : index
    %c0_4 = arith.constant 0 : index
    %4 = vector.load %arg3[%c0_3, %c0_4] : memref<512x1024xf32, #tpu.memory_space<vmem>>, vector<512x1024xf32>
    tpu.vector_store %arg3[%c0_3, %c0_4], %3 {strides = array<i32>} : memref<512x1024xf32, #tpu.memory_space<vmem>>, vector<512x1024xf32>,
    return
  }
  func.func @transform_0(%arg0: i32) -> (i32, i32) {
    %c0_i32 = arith.constant 0 : i32
    %c0_i32_0 = arith.constant 0 : i32
    return %arg0, %c0_i32 : i32, i32
  }
  func.func @transform_1(%arg0: i32) -> (i32, i32) {
    %c0_i32 = arith.constant 0 : i32
    %c0_i32_0 = arith.constant 0 : i32
    return %arg0, %c0_i32 : i32, i32
  }
  func.func @transform_2(%arg0: i32) -> (i32, i32) {
    %c0_i32 = arith.constant 0 : i32
    %c0_i32_0 = arith.constant 0 : i32
    return %arg0, %c0_i32 : i32, i32
  }
}

</mosaic_0001>

<llo_original>
// kernel: tpu_custom_call.1
$region0: #{tpu_custom_call.1}
  #allocation0 [shape = 'u32[]', space=smem, size = 0x4, offset = 0x4, fixed_abs, tag = 'smem constant byte address 0x4 - core index']
  #allocation1 [shape = 'u32[144,128]{1,0:T(1,128)}', space=vmem, size = 0x12000, scoped, tag = 'internal scratch']
  %s0 = inlined_call_operand.hbm [shape: f32[1024,1024], index: 0, kind: input, shape index: {}]
  %s1 = inlined_call_operand.hbm [shape: f32[1024,1024], index: 1, kind: input, shape index: {}]
  %s2 = inlined_call_operand.hbm [shape: f32[1024,1024], index: 2, kind: output, shape index: {}]
  %s3 = sld [smem:[#allocation0]]
  $region49: #{tpu_custom_call.1} parent=0
    _
  %s5 = ssub.s32 1, %s3
  %s6 = scalar_select 0, %s5, %s3
  $region1: #{tpu_custom_call.1} parent=0
    #allocation2 [shape = 'u8[4194304]{0}', space=vmem, size = 0x400000, scoped, tag = 'input window, operand 0']
    #allocation3 [shape = 's32[2]{0}', space=sflag, size = 0x8, scoped, tag = 'scoped memory for tpu_custom_call.1']
    #allocation4 [shape = 's32[2]{0}', space=sflag, size = 0x8, scoped, tag = 'scoped memory for tpu_custom_call.1']
    #allocation5 [shape = 'u8[4194304]{0}', space=vmem, size = 0x400000, scoped, tag = 'input window, operand 1']
    #allocation6 [shape = 's32[2]{0}', space=sflag, size = 0x8, scoped, tag = 'scoped memory for tpu_custom_call.1']
    #allocation7 [shape = 'u8[4194304]{0}', space=vmem, size = 0x400000, scoped, tag = 'output window, operand 0']
    %7 = vsyncpa [#allocation3], 0
    %s8 = scalar_lea.sflag [#allocation3], 1
    %9 = vsyncpa %s8, 0
    %10 = vsyncpa [#allocation6], 0
    %s11 = scalar_lea.sflag [#allocation6], 1
    %12 = vsyncpa %s11, 0
    %13 = vsyncpa [#allocation4], 0
    %s14 = scalar_lea.sflag [#allocation4], 1
    %15 = vsyncpa %s14, 0
    loop: start=0, step=1, limit=4
    $region2: #{tpu_custom_call.1} parent=1 // loop_pre_header
      _
    $region3: #{tpu_custom_call.1} parent=1 // loop_header
      %s17 = sphi 0, %s21
      %p18 = scmp.ge.s32.totalorder %s17, 4
      %s27 = sphi 0, %s29
      %s30 = sphi 0, %s27
      %s31 = sphi 0, %s30
      %s47 = sphi 0, %s31
      %s53 = sphi 0, %s55
      %s56 = sphi 0, %s53
      %s57 = sphi 0, %s56
      %s73 = sphi 0, %s57
      %s79 = sphi 0, %s81
      %s82 = sphi 0, %s79
      %s83 = sphi 0, %s82
      %s99 = sphi 0, %s83
    $region4: #{tpu_custom_call.1} parent=1 // loop_header_branch
      %20 = sbr.rel (%p18) target = $region8
    $region5: #{tpu_custom_call.1} parent=1 // loop_body
      %s22 = ssub.s32 %s17, 1
      %s23 = ssub.s32 %s17, 2
      %s24 = sadd.s32 %s17, 1
      %s25 = ssub.s32 %s17, %s24
      %p26 = scmp.eq.s32.totalorder %s25, 0
      %s28 = sadd.s32 %s27, 1
      %s29 = scalar_select %p26, %s27, %s28
      %p32 = pneg %p26
      %p33 = scmp.eq.s32.totalorder %s17, 1
      %p34 = por %p32, %p33
      %p35 = scmp.ne.s32.totalorder %s27, %s30
      %p36 = scmp.eq.s32.totalorder %s17, 0
      %p37 = por %p35, %p36
      %p38 = scmp.ne.s32.totalorder %s27, %s30
      %p39 = scmp.eq.s32.totalorder %s22, 1
      %p40 = por %p38, %p39
      %p41 = scmp.ne.s32.totalorder %s30, %s31
      %p42 = scmp.eq.s32.totalorder %s22, 0
      %p43 = por %p41, %p42
      %p44 = scmp.ne.s32.totalorder %s30, %s31
      %p45 = scmp.eq.s32.totalorder %s23, 1
      %p46 = por %p44, %p45
      %p48 = scmp.ne.s32.totalorder %s31, %s47
      %p49 = scmp.eq.s32.totalorder %s23, 0
      %p50 = por %p48, %p49
      %s51 = ssub.s32 %s17, %s24
      %p52 = scmp.eq.s32.totalorder %s51, 0
      %s54 = sadd.s32 %s53, 1
      %s55 = scalar_select %p52, %s53, %s54
      %p58 = pneg %p52
      %p59 = scmp.eq.s32.totalorder %s17, 1
      %p60 = por %p58, %p59
      %p61 = scmp.ne.s32.totalorder %s53, %s56
      %p62 = scmp.eq.s32.totalorder %s17, 0
      %p63 = por %p61, %p62
      %p64 = scmp.ne.s32.totalorder %s53, %s56
      %p65 = scmp.eq.s32.totalorder %s22, 1
      %p66 = por %p64, %p65
      %p67 = scmp.ne.s32.totalorder %s56, %s57
      %p68 = scmp.eq.s32.totalorder %s22, 0
      %p69 = por %p67, %p68
      %p70 = scmp.ne.s32.totalorder %s56, %s57
      %p71 = scmp.eq.s32.totalorder %s23, 1
      %p72 = por %p70, %p71
      %p74 = scmp.ne.s32.totalorder %s57, %s73
      %p75 = scmp.eq.s32.totalorder %s23, 0
      %p76 = por %p74, %p75
      %s77 = ssub.s32 %s17, %s24
      %p78 = scmp.eq.s32.totalorder %s77, 0
      %s80 = sadd.s32 %s79, 1
      %s81 = scalar_select %p78, %s79, %s80
      %p84 = pneg %p78
      %p85 = scmp.eq.s32.totalorder %s17, 1
      %p86 = por %p84, %p85
      %p87 = scmp.ne.s32.totalorder %s79, %s82
      %p88 = scmp.eq.s32.totalorder %s17, 0
      %p89 = por %p87, %p88
      %p90 = scmp.ne.s32.totalorder %s79, %s82
      %p91 = scmp.eq.s32.totalorder %s22, 1
      %p92 = por %p90, %p91
      %p93 = scmp.ne.s32.totalorder %s82, %s83
      %p94 = scmp.eq.s32.totalorder %s22, 0
      %p95 = por %p93, %p94
      %p96 = scmp.ne.s32.totalorder %s82, %s83
      %p97 = scmp.eq.s32.totalorder %s23, 1
      %p98 = por %p96, %p97
      %p100 = scmp.ne.s32.totalorder %s83, %s99
      %p101 = scmp.eq.s32.totalorder %s23, 0
      %p102 = por %p100, %p101
      %p103 = scmp.le.s32.totalorder 1, %s17
      %p104 = scmp.lt.s32.totalorder %s17, 3
      %p105 = pnand %p103, %p104
      %p106 = pneg %p105
      // Predicated region
      $region9: #{tpu_custom_call.1} parent=5 // pred_check
        _
      $region10: #{tpu_custom_call.1} parent=5 // pred_check_branch
        %108 = sbr.rel (%p105) target = $region12
      $region11: #{tpu_custom_call.1} parent=5 // pred_region
        %s109 = ssub.s32 %s17, 1
      $region12: #{tpu_custom_call.1} parent=5 // pred_fallthru
        _
      %p110 = scmp.lt.s32.totalorder %s17, 2
      // Predicated region
      $region13: #{tpu_custom_call.1} parent=5 // pred_check
        %p111 = pneg %p110
      $region14: #{tpu_custom_call.1} parent=5 // pred_check_branch
        %113 = sbr.rel (%p111) target = $region16
      $region15: #{tpu_custom_call.1} parent=5 // pred_region
        // Predicated region
        $region17: #{tpu_custom_call.1} parent=15 // pred_check
          %p114 = pneg %p37
        $region18: #{tpu_custom_call.1} parent=15 // pred_check_branch
          %116 = sbr.rel (%p114) target = $region20
        $region19: #{tpu_custom_call.1} parent=15 // pred_region
          %s117 = sand.u32 %s27, 1
          %s118 = scalar_lea.sflag [#allocation3], %s117
          %s119 = sand.u32 %s27, 1
          %s120 = smul.addr %s119, 4096
          %s121 = scalar_lea.vmem [#allocation2], %s120
          %s122 = smul.u32 64, %s17
          %s124 = ssub.s32 65536, 65536
          %125 = vsyncadd %s118, %s124
          %s126 = smul.addr %s122, 8
          %s127 = smul.addr %s126, 128
          %s128 = scalar_lea.hbm %s0, %s127
          %s129 = sshll.u32 %s121, 4
          %s130 = int_to_ptr.vmem [resolvable:$true] %s129
          %135 = dma.hbm_to_vmem [thread:$0]  %s128, 65536, %s130, %s118, 1024, 1024, 64
        $region20: #{tpu_custom_call.1} parent=15 // pred_fallthru
          _
        // Predicated region
        $region21: #{tpu_custom_call.1} parent=15 // pred_check
          %p136 = pneg %p63
        $region22: #{tpu_custom_call.1} parent=15 // pred_check_branch
          %138 = sbr.rel (%p136) target = $region24
        $region23: #{tpu_custom_call.1} parent=15 // pred_region
          %s139 = sand.u32 %s53, 1
          %s140 = scalar_lea.sflag [#allocation6], %s139
          %s141 = sand.u32 %s53, 1
          %s142 = smul.addr %s141, 4096
          %s143 = scalar_lea.vmem [#allocation5], %s142
          %s144 = smul.u32 64, %s17
          %s146 = ssub.s32 65536, 65536
          %147 = vsyncadd %s140, %s146
          %s148 = smul.addr %s144, 8
          %s149 = smul.addr %s148, 128
          %s150 = scalar_lea.hbm %s1, %s149
          %s151 = sshll.u32 %s143, 4
          %s152 = int_to_ptr.vmem [resolvable:$true] %s151
          %157 = dma.hbm_to_vmem [thread:$0]  %s150, 65536, %s152, %s140, 1024, 1024, 64
        $region24: #{tpu_custom_call.1} parent=15 // pred_fallthru
          _
      $region16: #{tpu_custom_call.1} parent=5 // pred_fallthru
        _
      %p158 = scmp.le.s32.totalorder 1, %s17
      %p159 = scmp.lt.s32.totalorder %s17, 3
      %p160 = pnand %p158, %p159
      %p161 = pneg %p160
      // Predicated region
      $region25: #{tpu_custom_call.1} parent=5 // pred_check
        _
      $region26: #{tpu_custom_call.1} parent=5 // pred_check_branch
        %163 = sbr.rel (%p160) target = $region28
      $region27: #{tpu_custom_call.1} parent=5 // pred_region
        %s164 = ssub.s32 %s17, 1
        %s165 = sand.u32 %s30, 1
        %s166 = scalar_lea.sflag [#allocation3], %s165
        %s167 = sand.u32 %s30, 1
        %s168 = smul.addr %s167, 4096
        %s169 = scalar_lea.vmem [#allocation2], %s168
        // Predicated region
        $region29: #{tpu_custom_call.1} parent=27 // pred_check
          %p170 = pneg %p43
        $region30: #{tpu_custom_call.1} parent=27 // pred_check_branch
          %172 = sbr.rel (%p170) target = $region32
        $region31: #{tpu_custom_call.1} parent=27 // pred_region
          %173 = dma.done %s166, 65536
        $region32: #{tpu_custom_call.1} parent=27 // pred_fallthru
          _
        %s174 = sand.u32 %s56, 1
        %s175 = scalar_lea.sflag [#allocation6], %s174
        %s176 = sand.u32 %s56, 1
        %s177 = smul.addr %s176, 4096
        %s178 = scalar_lea.vmem [#allocation5], %s177
        // Predicated region
        $region33: #{tpu_custom_call.1} parent=27 // pred_check
          %p179 = pneg %p69
        $region34: #{tpu_custom_call.1} parent=27 // pred_check_branch
          %181 = sbr.rel (%p179) target = $region36
        $region35: #{tpu_custom_call.1} parent=27 // pred_region
          %182 = dma.done %s175, 65536
        $region36: #{tpu_custom_call.1} parent=27 // pred_fallthru
          _
        %s183 = sand.u32 %s30, 1
        %s184 = scalar_lea.sflag [#allocation3], %s183
        %s185 = sand.u32 %s30, 1
        %s186 = smul.addr %s185, 4096
        %s187 = scalar_lea.vmem [#allocation2], %s186
        %p188 = pneg %p43
        %p189 = pneg %p40
        %s190 = sand.u32 %s56, 1
        %s191 = scalar_lea.sflag [#allocation6], %s190
        %s192 = sand.u32 %s56, 1
        %s193 = smul.addr %s192, 4096
        %s194 = scalar_lea.vmem [#allocation5], %s193
        %p195 = pneg %p69
        %p196 = pneg %p66
        %p197 = pneg %p95
        %p198 = pneg %p92
        %s199 = sand.u32 %s82, 1
        %s200 = scalar_lea.sflag [#allocation4], %s199
        %s201 = sand.u32 %s82, 1
        %s202 = smul.addr %s201, 4096
        %s203 = scalar_lea.vmem [#allocation7], %s202
        %s204 = smul.u32 64, %s22
        %s205 = smul.u32 64, %s22
        %s206 = smul.u32 64, %s22
        %v207 = vld [vmem:[%s178] sm:$0xff]
        %v208 = vld [vmem:[%s178 + $0x8] sm:$0xff]
        %v209 = vld [vmem:[%s178 + $0x10] sm:$0xff]
        %v210 = vld [vmem:[%s178 + $0x18] sm:$0xff]
        %v211 = vld [vmem:[%s178 + $0x20] sm:$0xff]
        %v212 = vld [vmem:[%s178 + $0x28] sm:$0xff]
        %v213 = vld [vmem:[%s178 + $0x30] sm:$0xff]
        %v214 = vld [vmem:[%s178 + $0x38] sm:$0xff]
        %v215 = vld [vmem:[%s178 + $0x40] sm:$0xff]
        %v216 = vld [vmem:[%s178 + $0x48] sm:$0xff]
        %v217 = vld [vmem:[%s178 + $0x50] sm:$0xff]
        %v218 = vld [vmem:[%s178 + $0x58] sm:$0xff]
        %v219 = vld [vmem:[%s178 + $0x60] sm:$0xff]
        %v220 = vld [vmem:[%s178 + $0x68] sm:$0xff]
        %v221 = vld [vmem:[%s178 + $0x70] sm:$0xff]
        %v222 = vld [vmem:[%s178 + $0x78] sm:$0xff]
        %v223 = vld [vmem:[%s178 + $0x80] sm:$0xff]
        %v224 = vld [vmem:[%s178 + $0x88] sm:$0xff]
        %v225 = vld [vmem:[%s178 + $0x90] sm:$0xff]
        %v226 = vld [vmem:[%s178 + $0x98] sm:$0xff]
        %v227 = vld [vmem:[%s178 + $0xa0] sm:$0xff]
        %v228 = vld [vmem:[%s178 + $0xa8] sm:$0xff]
        %v229 = vld [vmem:[%s178 + $0xb0] sm:$0xff]
        %v230 = vld [vmem:[%s178 + $0xb8] sm:$0xff]
        %v231 = vld [vmem:[%s178 + $0xc0] sm:$0xff]
        %v232 = vld [vmem:[%s178 + $0xc8] sm:$0xff]
        %v233 = vld [vmem:[%s178 + $0xd0] sm:$0xff]
        %v234 = vld [vmem:[%s178 + $0xd8] sm:$0xff]
        %v235 = vld [vmem:[%s178 + $0xe0] sm:$0xff]
        %v236 = vld [vmem:[%s178 + $0xe8] sm:$0xff]
        %v237 = vld [vmem:[%s178 + $0xf0] sm:$0xff]
        %v238 = vld [vmem:[%s178 + $0xf8] sm:$0xff]
        %v239 = vld [vmem:[%s178 + $0x100] sm:$0xff]
        %v240 = vld [vmem:[%s178 + $0x108] sm:$0xff]
        %v241 = vld [vmem:[%s178 + $0x110] sm:$0xff]
        %v242 = vld [vmem:[%s178 + $0x118] sm:$0xff]
        %v243 = vld [vmem:[%s178 + $0x120] sm:$0xff]
        %v244 = vld [vmem:[%s178 + $0x128] sm:$0xff]
        %v245 = vld [vmem:[%s178 + $0x130] sm:$0xff]
        %v246 = vld [vmem:[%s178 + $0x138] sm:$0xff]
        %v247 = vld [vmem:[%s178 + $0x140] sm:$0xff]
        %v248 = vld [vmem:[%s178 + $0x148] sm:$0xff]
        %v249 = vld [vmem:[%s178 + $0x150] sm:$0xff]
        %v250 = vld [vmem:[%s178 + $0x158] sm:$0xff]
        %v251 = vld [vmem:[%s178 + $0x160] sm:$0xff]
        %v252 = vld [vmem:[%s178 + $0x168] sm:$0xff]
        %v253 = vld [vmem:[%s178 + $0x170] sm:$0xff]
        %v254 = vld [vmem:[%s178 + $0x178] sm:$0xff]
        %v255 = vld [vmem:[%s178 + $0x180] sm:$0xff]
        %v256 = vld [vmem:[%s178 + $0x188] sm:$0xff]
        %v257 = vld [vmem:[%s178 + $0x190] sm:$0xff]
        %v258 = vld [vmem:[%s178 + $0x198] sm:$0xff]
        %v259 = vld [vmem:[%s178 + $0x1a0] sm:$0xff]
        %v260 = vld [vmem:[%s178 + $0x1a8] sm:$0xff]
        %v261 = vld [vmem:[%s178 + $0x1b0] sm:$0xff]
        %v262 = vld [vmem:[%s178 + $0x1b8] sm:$0xff]
        %v263 = vld [vmem:[%s178 + $0x1c0] sm:$0xff]
        %v264 = vld [vmem:[%s178 + $0x1c8] sm:$0xff]
        %v265 = vld [vmem:[%s178 + $0x1d0] sm:$0xff]
        %v266 = vld [vmem:[%s178 + $0x1d8] sm:$0xff]
        %v267 = vld [vmem:[%s178 + $0x1e0] sm:$0xff]
        %v268 = vld [vmem:[%s178 + $0x1e8] sm:$0xff]
        %v269 = vld [vmem:[%s178 + $0x1f0] sm:$0xff]
        %v270 = vld [vmem:[%s178 + $0x1f8] sm:$0xff]
        %v271 = vld [vmem:[%s178 + $0x200] sm:$0xff]
        %v272 = vld [vmem:[%s178 + $0x208] sm:$0xff]
        %v273 = vld [vmem:[%s178 + $0x210] sm:$0xff]
        %v274 = vld [vmem:[%s178 + $0x218] sm:$0xff]
        %v275 = vld [vmem:[%s178 + $0x220] sm:$0xff]
        %v276 = vld [vmem:[%s178 + $0x228] sm:$0xff]
        %v277 = vld [vmem:[%s178 + $0x230] sm:$0xff]
        %v278 = vld [vmem:[%s178 + $0x238] sm:$0xff]
        %v279 = vld [vmem:[%s178 + $0x240] sm:$0xff]
        %v280 = vld [vmem:[%s178 + $0x248] sm:$0xff]
        %v281 = vld [vmem:[%s178 + $0x250] sm:$0xff]
        %v282 = vld [vmem:[%s178 + $0x258] sm:$0xff]
        %v283 = vld [vmem:[%s178 + $0x260] sm:$0xff]
        %v284 = vld [vmem:[%s178 + $0x268] sm:$0xff]
        %v285 = vld [vmem:[%s178 + $0x270] sm:$0xff]
        %v286 = vld [vmem:[%s178 + $0x278] sm:$0xff]
        %v287 = vld [vmem:[%s178 + $0x280] sm:$0xff]
        %v288 = vld [vmem:[%s178 + $0x288] sm:$0xff]
        %v289 = vld [vmem:[%s178 + $0x290] sm:$0xff]
        %v290 = vld [vmem:[%s178 + $0x298] sm:$0xff]
        %v291 = vld [vmem:[%s178 + $0x2a0] sm:$0xff]
        %v292 = vld [vmem:[%s178 + $0x2a8] sm:$0xff]
        %v293 = vld [vmem:[%s178 + $0x2b0] sm:$0xff]
        %v294 = vld [vmem:[%s178 + $0x2b8] sm:$0xff]
        %v295 = vld [vmem:[%s178 + $0x2c0] sm:$0xff]
        %v296 = vld [vmem:[%s178 + $0x2c8] sm:$0xff]
        %v297 = vld [vmem:[%s178 + $0x2d0] sm:$0xff]
        %v298 = vld [vmem:[%s178 + $0x2d8] sm:$0xff]
        %v299 = vld [vmem:[%s178 + $0x2e0] sm:$0xff]
        %v300 = vld [vmem:[%s178 + $0x2e8] sm:$0xff]
        %v301 = vld [vmem:[%s178 + $0x2f0] sm:$0xff]
        %v302 = vld [vmem:[%s178 + $0x2f8] sm:$0xff]
        %v303 = vld [vmem:[%s178 + $0x300] sm:$0xff]
        %v304 = vld [vmem:[%s178 + $0x308] sm:$0xff]
        %v305 = vld [vmem:[%s178 + $0x310] sm:$0xff]
        %v306 = vld [vmem:[%s178 + $0x318] sm:$0xff]
        %v307 = vld [vmem:[%s178 + $0x320] sm:$0xff]
        %v308 = vld [vmem:[%s178 + $0x328] sm:$0xff]
        %v309 = vld [vmem:[%s178 + $0x330] sm:$0xff]
        %v310 = vld [vmem:[%s178 + $0x338] sm:$0xff]
        %v311 = vld [vmem:[%s178 + $0x340] sm:$0xff]
        %v312 = vld [vmem:[%s178 + $0x348] sm:$0xff]
        %v313 = vld [vmem:[%s178 + $0x350] sm:$0xff]
        %v314 = vld [vmem:[%s178 + $0x358] sm:$0xff]
        %v315 = vld [vmem:[%s178 + $0x360] sm:$0xff]
        %v316 = vld [vmem:[%s178 + $0x368] sm:$0xff]
        %v317 = vld [vmem:[%s178 + $0x370] sm:$0xff]
        %v318 = vld [vmem:[%s178 + $0x378] sm:$0xff]
        %v319 = vld [vmem:[%s178 + $0x380] sm:$0xff]
        %v320 = vld [vmem:[%s178 + $0x388] sm:$0xff]
        %v321 = vld [vmem:[%s178 + $0x390] sm:$0xff]
        %v322 = vld [vmem:[%s178 + $0x398] sm:$0xff]
        %v323 = vld [vmem:[%s178 + $0x3a0] sm:$0xff]
        %v324 = vld [vmem:[%s178 + $0x3a8] sm:$0xff]
        %v325 = vld [vmem:[%s178 + $0x3b0] sm:$0xff]
        %v326 = vld [vmem:[%s178 + $0x3b8] sm:$0xff]
        %v327 = vld [vmem:[%s178 + $0x3c0] sm:$0xff]
        %v328 = vld [vmem:[%s178 + $0x3c8] sm:$0xff]
        %v329 = vld [vmem:[%s178 + $0x3d0] sm:$0xff]
        %v330 = vld [vmem:[%s178 + $0x3d8] sm:$0xff]
        %v331 = vld [vmem:[%s178 + $0x3e0] sm:$0xff]
        %v332 = vld [vmem:[%s178 + $0x3e8] sm:$0xff]
        %v333 = vld [vmem:[%s178 + $0x3f0] sm:$0xff]
        %v334 = vld [vmem:[%s178 + $0x3f8] sm:$0xff]
        %v335 = vld [vmem:[%s178 + $0x400] sm:$0xff]
        %v336 = vld [vmem:[%s178 + $0x408] sm:$0xff]
        %v337 = vld [vmem:[%s178 + $0x410] sm:$0xff]
        %v338 = vld [vmem:[%s178 + $0x418] sm:$0xff]
        %v339 = vld [vmem:[%s178 + $0x420] sm:$0xff]
        %v340 = vld [vmem:[%s178 + $0x428] sm:$0xff]
        %v341 = vld [vmem:[%s178 + $0x430] sm:$0xff]
        %v342 = vld [vmem:[%s178 + $0x438] sm:$0xff]
        %v343 = vld [vmem:[%s178 + $0x440] sm:$0xff]
        %v344 = vld [vmem:[%s178 + $0x448] sm:$0xff]
        %v345 = vld [vmem:[%s178 + $0x450] sm:$0xff]
        %v346 = vld [vmem:[%s178 + $0x458] sm:$0xff]
        %v347 = vld [vmem:[%s178 + $0x460] sm:$0xff]
        %v348 = vld [vmem:[%s178 + $0x468] sm:$0xff]
        %v349 = vld [vmem:[%s178 + $0x470] sm:$0xff]
        %v350 = vld [vmem:[%s178 + $0x478] sm:$0xff]
        %v351 = vld [vmem:[%s178 + $0x480] sm:$0xff]
        %v352 = vld [vmem:[%s178 + $0x488] sm:$0xff]
        %v353 = vld [vmem:[%s178 + $0x490] sm:$0xff]
        %v354 = vld [vmem:[%s178 + $0x498] sm:$0xff]
        %v355 = vld [vmem:[%s178 + $0x4a0] sm:$0xff]
        %v356 = vld [vmem:[%s178 + $0x4a8] sm:$0xff]
        %v357 = vld [vmem:[%s178 + $0x4b0] sm:$0xff]
        %v358 = vld [vmem:[%s178 + $0x4b8] sm:$0xff]
        %v359 = vld [vmem:[%s178 + $0x4c0] sm:$0xff]
        %v360 = vld [vmem:[%s178 + $0x4c8] sm:$0xff]
        %v361 = vld [vmem:[%s178 + $0x4d0] sm:$0xff]
        %v362 = vld [vmem:[%s178 + $0x4d8] sm:$0xff]
        %v363 = vld [vmem:[%s178 + $0x4e0] sm:$0xff]
        %v364 = vld [vmem:[%s178 + $0x4e8] sm:$0xff]
        %v365 = vld [vmem:[%s178 + $0x4f0] sm:$0xff]
        %v366 = vld [vmem:[%s178 + $0x4f8] sm:$0xff]
        %v367 = vld [vmem:[%s178 + $0x500] sm:$0xff]
        %v368 = vld [vmem:[%s178 + $0x508] sm:$0xff]
        %v369 = vld [vmem:[%s178 + $0x510] sm:$0xff]
        %v370 = vld [vmem:[%s178 + $0x518] sm:$0xff]
        %v371 = vld [vmem:[%s178 + $0x520] sm:$0xff]
        %v372 = vld [vmem:[%s178 + $0x528] sm:$0xff]
        %v373 = vld [vmem:[%s178 + $0x530] sm:$0xff]
        %v374 = vld [vmem:[%s178 + $0x538] sm:$0xff]
        %v375 = vld [vmem:[%s178 + $0x540] sm:$0xff]
        %v376 = vld [vmem:[%s178 + $0x548] sm:$0xff]
        %v377 = vld [vmem:[%s178 + $0x550] sm:$0xff]
        %v378 = vld [vmem:[%s178 + $0x558] sm:$0xff]
        %v379 = vld [vmem:[%s178 + $0x560] sm:$0xff]
        %v380 = vld [vmem:[%s178 + $0x568] sm:$0xff]
        %v381 = vld [vmem:[%s178 + $0x570] sm:$0xff]
        %v382 = vld [vmem:[%s178 + $0x578] sm:$0xff]
        %v383 = vld [vmem:[%s178 + $0x580] sm:$0xff]
        %v384 = vld [vmem:[%s178 + $0x588] sm:$0xff]
        %v385 = vld [vmem:[%s178 + $0x590] sm:$0xff]
        %v386 = vld [vmem:[%s178 + $0x598] sm:$0xff]
        %v387 = vld [vmem:[%s178 + $0x5a0] sm:$0xff]
        %v388 = vld [vmem:[%s178 + $0x5a8] sm:$0xff]
        %v389 = vld [vmem:[%s178 + $0x5b0] sm:$0xff]
        %v390 = vld [vmem:[%s178 + $0x5b8] sm:$0xff]
        %v391 = vld [vmem:[%s178 + $0x5c0] sm:$0xff]
        %v392 = vld [vmem:[%s178 + $0x5c8] sm:$0xff]
        %v393 = vld [vmem:[%s178 + $0x5d0] sm:$0xff]
        %v394 = vld [vmem:[%s178 + $0x5d8] sm:$0xff]
        %v395 = vld [vmem:[%s178 + $0x5e0] sm:$0xff]
        %v396 = vld [vmem:[%s178 + $0x5e8] sm:$0xff]
        %v397 = vld [vmem:[%s178 + $0x5f0] sm:$0xff]
        %v398 = vld [vmem:[%s178 + $0x5f8] sm:$0xff]
        %v399 = vld [vmem:[%s178 + $0x600] sm:$0xff]
        %v400 = vld [vmem:[%s178 + $0x608] sm:$0xff]
        %v401 = vld [vmem:[%s178 + $0x610] sm:$0xff]
        %v402 = vld [vmem:[%s178 + $0x618] sm:$0xff]
        %v403 = vld [vmem:[%s178 + $0x620] sm:$0xff]
        %v404 = vld [vmem:[%s178 + $0x628] sm:$0xff]
        %v405 = vld [vmem:[%s178 + $0x630] sm:$0xff]
        %v406 = vld [vmem:[%s178 + $0x638] sm:$0xff]
        %v407 = vld [vmem:[%s178 + $0x640] sm:$0xff]
        %v408 = vld [vmem:[%s178 + $0x648] sm:$0xff]
        %v409 = vld [vmem:[%s178 + $0x650] sm:$0xff]
        %v410 = vld [vmem:[%s178 + $0x658] sm:$0xff]
        %v411 = vld [vmem:[%s178 + $0x660] sm:$0xff]
        %v412 = vld [vmem:[%s178 + $0x668] sm:$0xff]
        %v413 = vld [vmem:[%s178 + $0x670] sm:$0xff]
        %v414 = vld [vmem:[%s178 + $0x678] sm:$0xff]
        %v415 = vld [vmem:[%s178 + $0x680] sm:$0xff]
        %v416 = vld [vmem:[%s178 + $0x688] sm:$0xff]
        %v417 = vld [vmem:[%s178 + $0x690] sm:$0xff]
        %v418 = vld [vmem:[%s178 + $0x698] sm:$0xff]
        %v419 = vld [vmem:[%s178 + $0x6a0] sm:$0xff]
        %v420 = vld [vmem:[%s178 + $0x6a8] sm:$0xff]
        %v421 = vld [vmem:[%s178 + $0x6b0] sm:$0xff]
        %v422 = vld [vmem:[%s178 + $0x6b8] sm:$0xff]
        %v423 = vld [vmem:[%s178 + $0x6c0] sm:$0xff]
        %v424 = vld [vmem:[%s178 + $0x6c8] sm:$0xff]
        %v425 = vld [vmem:[%s178 + $0x6d0] sm:$0xff]
        %v426 = vld [vmem:[%s178 + $0x6d8] sm:$0xff]
        %v427 = vld [vmem:[%s178 + $0x6e0] sm:$0xff]
        %v428 = vld [vmem:[%s178 + $0x6e8] sm:$0xff]
        %v429 = vld [vmem:[%s178 + $0x6f0] sm:$0xff]
        %v430 = vld [vmem:[%s178 + $0x6f8] sm:$0xff]
        %v431 = vld [vmem:[%s178 + $0x700] sm:$0xff]
        %v432 = vld [vmem:[%s178 + $0x708] sm:$0xff]
        %v433 = vld [vmem:[%s178 + $0x710] sm:$0xff]
        %v434 = vld [vmem:[%s178 + $0x718] sm:$0xff]
        %v435 = vld [vmem:[%s178 + $0x720] sm:$0xff]
        %v436 = vld [vmem:[%s178 + $0x728] sm:$0xff]
        %v437 = vld [vmem:[%s178 + $0x730] sm:$0xff]
        %v438 = vld [vmem:[%s178 + $0x738] sm:$0xff]
        %v439 = vld [vmem:[%s178 + $0x740] sm:$0xff]
        %v440 = vld [vmem:[%s178 + $0x748] sm:$0xff]
        %v441 = vld [vmem:[%s178 + $0x750] sm:$0xff]
        %v442 = vld [vmem:[%s178 + $0x758] sm:$0xff]
        %v443 = vld [vmem:[%s178 + $0x760] sm:$0xff]
        %v444 = vld [vmem:[%s178 + $0x768] sm:$0xff]
        %v445 = vld [vmem:[%s178 + $0x770] sm:$0xff]
        %v446 = vld [vmem:[%s178 + $0x778] sm:$0xff]
        %v447 = vld [vmem:[%s178 + $0x780] sm:$0xff]
        %v448 = vld [vmem:[%s178 + $0x788] sm:$0xff]
        %v449 = vld [vmem:[%s178 + $0x790] sm:$0xff]
        %v450 = vld [vmem:[%s178 + $0x798] sm:$0xff]
        %v451 = vld [vmem:[%s178 + $0x7a0] sm:$0xff]
        %v452 = vld [vmem:[%s178 + $0x7a8] sm:$0xff]
        %v453 = vld [vmem:[%s178 + $0x7b0] sm:$0xff]
        %v454 = vld [vmem:[%s178 + $0x7b8] sm:$0xff]
        %v455 = vld [vmem:[%s178 + $0x7c0] sm:$0xff]
        %v456 = vld [vmem:[%s178 + $0x7c8] sm:$0xff]
        %v457 = vld [vmem:[%s178 + $0x7d0] sm:$0xff]
        %v458 = vld [vmem:[%s178 + $0x7d8] sm:$0xff]
        %v459 = vld [vmem:[%s178 + $0x7e0] sm:$0xff]
        %v460 = vld [vmem:[%s178 + $0x7e8] sm:$0xff]
        %v461 = vld [vmem:[%s178 + $0x7f0] sm:$0xff]
        %v462 = vld [vmem:[%s178 + $0x7f8] sm:$0xff]
        %v463 = vld [vmem:[%s178 + $0x800] sm:$0xff]
        %v464 = vld [vmem:[%s178 + $0x808] sm:$0xff]
        %v465 = vld [vmem:[%s178 + $0x810] sm:$0xff]
        %v466 = vld [vmem:[%s178 + $0x818] sm:$0xff]
        %v467 = vld [vmem:[%s178 + $0x820] sm:$0xff]
        %v468 = vld [vmem:[%s178 + $0x828] sm:$0xff]
        %v469 = vld [vmem:[%s178 + $0x830] sm:$0xff]
        %v470 = vld [vmem:[%s178 + $0x838] sm:$0xff]
        %v471 = vld [vmem:[%s178 + $0x840] sm:$0xff]
        %v472 = vld [vmem:[%s178 + $0x848] sm:$0xff]
        %v473 = vld [vmem:[%s178 + $0x850] sm:$0xff]
        %v474 = vld [vmem:[%s178 + $0x858] sm:$0xff]
        %v475 = vld [vmem:[%s178 + $0x860] sm:$0xff]
        %v476 = vld [vmem:[%s178 + $0x868] sm:$0xff]
        %v477 = vld [vmem:[%s178 + $0x870] sm:$0xff]
        %v478 = vld [vmem:[%s178 + $0x878] sm:$0xff]
        %v479 = vld [vmem:[%s178 + $0x880] sm:$0xff]
        %v480 = vld [vmem:[%s178 + $0x888] sm:$0xff]
        %v481 = vld [vmem:[%s178 + $0x890] sm:$0xff]
        %v482 = vld [vmem:[%s178 + $0x898] sm:$0xff]
        %v483 = vld [vmem:[%s178 + $0x8a0] sm:$0xff]
        %v484 = vld [vmem:[%s178 + $0x8a8] sm:$0xff]
        %v485 = vld [vmem:[%s178 + $0x8b0] sm:$0xff]
        %v486 = vld [vmem:[%s178 + $0x8b8] sm:$0xff]
        %v487 = vld [vmem:[%s178 + $0x8c0] sm:$0xff]
        %v488 = vld [vmem:[%s178 + $0x8c8] sm:$0xff]
        %v489 = vld [vmem:[%s178 + $0x8d0] sm:$0xff]
        %v490 = vld [vmem:[%s178 + $0x8d8] sm:$0xff]
        %v491 = vld [vmem:[%s178 + $0x8e0] sm:$0xff]
        %v492 = vld [vmem:[%s178 + $0x8e8] sm:$0xff]
        %v493 = vld [vmem:[%s178 + $0x8f0] sm:$0xff]
        %v494 = vld [vmem:[%s178 + $0x8f8] sm:$0xff]
        %v495 = vld [vmem:[%s178 + $0x900] sm:$0xff]
        %v496 = vld [vmem:[%s178 + $0x908] sm:$0xff]
        %v497 = vld [vmem:[%s178 + $0x910] sm:$0xff]
        %v498 = vld [vmem:[%s178 + $0x918] sm:$0xff]
        %v499 = vld [vmem:[%s178 + $0x920] sm:$0xff]
        %v500 = vld [vmem:[%s178 + $0x928] sm:$0xff]
        %v501 = vld [vmem:[%s178 + $0x930] sm:$0xff]
        %v502 = vld [vmem:[%s178 + $0x938] sm:$0xff]
        %v503 = vld [vmem:[%s178 + $0x940] sm:$0xff]
        %v504 = vld [vmem:[%s178 + $0x948] sm:$0xff]
        %v505 = vld [vmem:[%s178 + $0x950] sm:$0xff]
        %v506 = vld [vmem:[%s178 + $0x958] sm:$0xff]
        %v507 = vld [vmem:[%s178 + $0x960] sm:$0xff]
        %v508 = vld [vmem:[%s178 + $0x968] sm:$0xff]
        %v509 = vld [vmem:[%s178 + $0x970] sm:$0xff]
        %v510 = vld [vmem:[%s178 + $0x978] sm:$0xff]
        %v511 = vld [vmem:[%s178 + $0x980] sm:$0xff]
        %v512 = vld [vmem:[%s178 + $0x988] sm:$0xff]
        %v513 = vld [vmem:[%s178 + $0x990] sm:$0xff]
        %v514 = vld [vmem:[%s178 + $0x998] sm:$0xff]
        %v515 = vld [vmem:[%s178 + $0x9a0] sm:$0xff]
        %v516 = vld [vmem:[%s178 + $0x9a8] sm:$0xff]
        %v517 = vld [vmem:[%s178 + $0x9b0] sm:$0xff]
        %v518 = vld [vmem:[%s178 + $0x9b8] sm:$0xff]
        %v519 = vld [vmem:[%s178 + $0x9c0] sm:$0xff]
        %v520 = vld [vmem:[%s178 + $0x9c8] sm:$0xff]
        %v521 = vld [vmem:[%s178 + $0x9d0] sm:$0xff]
        %v522 = vld [vmem:[%s178 + $0x9d8] sm:$0xff]
        %v523 = vld [vmem:[%s178 + $0x9e0] sm:$0xff]
        %v524 = vld [vmem:[%s178 + $0x9e8] sm:$0xff]
        %v525 = vld [vmem:[%s178 + $0x9f0] sm:$0xff]
        %v526 = vld [vmem:[%s178 + $0x9f8] sm:$0xff]
        %v527 = vld [vmem:[%s178 + $0xa00] sm:$0xff]
        %v528 = vld [vmem:[%s178 + $0xa08] sm:$0xff]
        %v529 = vld [vmem:[%s178 + $0xa10] sm:$0xff]
        %v530 = vld [vmem:[%s178 + $0xa18] sm:$0xff]
        %v531 = vld [vmem:[%s178 + $0xa20] sm:$0xff]
        %v532 = vld [vmem:[%s178 + $0xa28] sm:$0xff]
        %v533 = vld [vmem:[%s178 + $0xa30] sm:$0xff]
        %v534 = vld [vmem:[%s178 + $0xa38] sm:$0xff]
        %v535 = vld [vmem:[%s178 + $0xa40] sm:$0xff]
        %v536 = vld [vmem:[%s178 + $0xa48] sm:$0xff]
        %v537 = vld [vmem:[%s178 + $0xa50] sm:$0xff]
        %v538 = vld [vmem:[%s178 + $0xa58] sm:$0xff]
        %v539 = vld [vmem:[%s178 + $0xa60] sm:$0xff]
        %v540 = vld [vmem:[%s178 + $0xa68] sm:$0xff]
        %v541 = vld [vmem:[%s178 + $0xa70] sm:$0xff]
        %v542 = vld [vmem:[%s178 + $0xa78] sm:$0xff]
        %v543 = vld [vmem:[%s178 + $0xa80] sm:$0xff]
        %v544 = vld [vmem:[%s178 + $0xa88] sm:$0xff]
        %v545 = vld [vmem:[%s178 + $0xa90] sm:$0xff]
        %v546 = vld [vmem:[%s178 + $0xa98] sm:$0xff]
        %v547 = vld [vmem:[%s178 + $0xaa0] sm:$0xff]
        %v548 = vld [vmem:[%s178 + $0xaa8] sm:$0xff]
        %v549 = vld [vmem:[%s178 + $0xab0] sm:$0xff]
        %v550 = vld [vmem:[%s178 + $0xab8] sm:$0xff]
        %v551 = vld [vmem:[%s178 + $0xac0] sm:$0xff]
        %v552 = vld [vmem:[%s178 + $0xac8] sm:$0xff]
        %v553 = vld [vmem:[%s178 + $0xad0] sm:$0xff]
        %v554 = vld [vmem:[%s178 + $0xad8] sm:$0xff]
        %v555 = vld [vmem:[%s178 + $0xae0] sm:$0xff]
        %v556 = vld [vmem:[%s178 + $0xae8] sm:$0xff]
        %v557 = vld [vmem:[%s178 + $0xaf0] sm:$0xff]
        %v558 = vld [vmem:[%s178 + $0xaf8] sm:$0xff]
        %v559 = vld [vmem:[%s178 + $0xb00] sm:$0xff]
        %v560 = vld [vmem:[%s178 + $0xb08] sm:$0xff]
        %v561 = vld [vmem:[%s178 + $0xb10] sm:$0xff]
        %v562 = vld [vmem:[%s178 + $0xb18] sm:$0xff]
        %v563 = vld [vmem:[%s178 + $0xb20] sm:$0xff]
        %v564 = vld [vmem:[%s178 + $0xb28] sm:$0xff]
        %v565 = vld [vmem:[%s178 + $0xb30] sm:$0xff]
        %v566 = vld [vmem:[%s178 + $0xb38] sm:$0xff]
        %v567 = vld [vmem:[%s178 + $0xb40] sm:$0xff]
        %v568 = vld [vmem:[%s178 + $0xb48] sm:$0xff]
        %v569 = vld [vmem:[%s178 + $0xb50] sm:$0xff]
        %v570 = vld [vmem:[%s178 + $0xb58] sm:$0xff]
        %v571 = vld [vmem:[%s178 + $0xb60] sm:$0xff]
        %v572 = vld [vmem:[%s178 + $0xb68] sm:$0xff]
        %v573 = vld [vmem:[%s178 + $0xb70] sm:$0xff]
        %v574 = vld [vmem:[%s178 + $0xb78] sm:$0xff]
        %v575 = vld [vmem:[%s178 + $0xb80] sm:$0xff]
        %v576 = vld [vmem:[%s178 + $0xb88] sm:$0xff]
        %v577 = vld [vmem:[%s178 + $0xb90] sm:$0xff]
        %v578 = vld [vmem:[%s178 + $0xb98] sm:$0xff]
        %v579 = vld [vmem:[%s178 + $0xba0] sm:$0xff]
        %v580 = vld [vmem:[%s178 + $0xba8] sm:$0xff]
        %v581 = vld [vmem:[%s178 + $0xbb0] sm:$0xff]
        %v582 = vld [vmem:[%s178 + $0xbb8] sm:$0xff]
        %v583 = vld [vmem:[%s178 + $0xbc0] sm:$0xff]
        %v584 = vld [vmem:[%s178 + $0xbc8] sm:$0xff]
        %v585 = vld [vmem:[%s178 + $0xbd0] sm:$0xff]
        %v586 = vld [vmem:[%s178 + $0xbd8] sm:$0xff]
        %v587 = vld [vmem:[%s178 + $0xbe0] sm:$0xff]
        %v588 = vld [vmem:[%s178 + $0xbe8] sm:$0xff]
        %v589 = vld [vmem:[%s178 + $0xbf0] sm:$0xff]
        %v590 = vld [vmem:[%s178 + $0xbf8] sm:$0xff]
        %v591 = vld [vmem:[%s178 + $0xc00] sm:$0xff]
        %v592 = vld [vmem:[%s178 + $0xc08] sm:$0xff]
        %v593 = vld [vmem:[%s178 + $0xc10] sm:$0xff]
        %v594 = vld [vmem:[%s178 + $0xc18] sm:$0xff]
        %v595 = vld [vmem:[%s178 + $0xc20] sm:$0xff]
        %v596 = vld [vmem:[%s178 + $0xc28] sm:$0xff]
        %v597 = vld [vmem:[%s178 + $0xc30] sm:$0xff]
        %v598 = vld [vmem:[%s178 + $0xc38] sm:$0xff]
        %v599 = vld [vmem:[%s178 + $0xc40] sm:$0xff]
        %v600 = vld [vmem:[%s178 + $0xc48] sm:$0xff]
        %v601 = vld [vmem:[%s178 + $0xc50] sm:$0xff]
        %v602 = vld [vmem:[%s178 + $0xc58] sm:$0xff]
        %v603 = vld [vmem:[%s178 + $0xc60] sm:$0xff]
        %v604 = vld [vmem:[%s178 + $0xc68] sm:$0xff]
        %v605 = vld [vmem:[%s178 + $0xc70] sm:$0xff]
        %v606 = vld [vmem:[%s178 + $0xc78] sm:$0xff]
        %v607 = vld [vmem:[%s178 + $0xc80] sm:$0xff]
        %v608 = vld [vmem:[%s178 + $0xc88] sm:$0xff]
        %v609 = vld [vmem:[%s178 + $0xc90] sm:$0xff]
        %v610 = vld [vmem:[%s178 + $0xc98] sm:$0xff]
        %v611 = vld [vmem:[%s178 + $0xca0] sm:$0xff]
        %v612 = vld [vmem:[%s178 + $0xca8] sm:$0xff]
        %v613 = vld [vmem:[%s178 + $0xcb0] sm:$0xff]
        %v614 = vld [vmem:[%s178 + $0xcb8] sm:$0xff]
        %v615 = vld [vmem:[%s178 + $0xcc0] sm:$0xff]
        %v616 = vld [vmem:[%s178 + $0xcc8] sm:$0xff]
        %v617 = vld [vmem:[%s178 + $0xcd0] sm:$0xff]
        %v618 = vld [vmem:[%s178 + $0xcd8] sm:$0xff]
        %v619 = vld [vmem:[%s178 + $0xce0] sm:$0xff]
        %v620 = vld [vmem:[%s178 + $0xce8] sm:$0xff]
        %v621 = vld [vmem:[%s178 + $0xcf0] sm:$0xff]
        %v622 = vld [vmem:[%s178 + $0xcf8] sm:$0xff]
        %v623 = vld [vmem:[%s178 + $0xd00] sm:$0xff]
        %v624 = vld [vmem:[%s178 + $0xd08] sm:$0xff]
        %v625 = vld [vmem:[%s178 + $0xd10] sm:$0xff]
        %v626 = vld [vmem:[%s178 + $0xd18] sm:$0xff]
        %v627 = vld [vmem:[%s178 + $0xd20] sm:$0xff]
        %v628 = vld [vmem:[%s178 + $0xd28] sm:$0xff]
        %v629 = vld [vmem:[%s178 + $0xd30] sm:$0xff]
        %v630 = vld [vmem:[%s178 + $0xd38] sm:$0xff]
        %v631 = vld [vmem:[%s178 + $0xd40] sm:$0xff]
        %v632 = vld [vmem:[%s178 + $0xd48] sm:$0xff]
        %v633 = vld [vmem:[%s178 + $0xd50] sm:$0xff]
        %v634 = vld [vmem:[%s178 + $0xd58] sm:$0xff]
        %v635 = vld [vmem:[%s178 + $0xd60] sm:$0xff]
        %v636 = vld [vmem:[%s178 + $0xd68] sm:$0xff]
        %v637 = vld [vmem:[%s178 + $0xd70] sm:$0xff]
        %v638 = vld [vmem:[%s178 + $0xd78] sm:$0xff]
        %v639 = vld [vmem:[%s178 + $0xd80] sm:$0xff]
        %v640 = vld [vmem:[%s178 + $0xd88] sm:$0xff]
        %v641 = vld [vmem:[%s178 + $0xd90] sm:$0xff]
        %v642 = vld [vmem:[%s178 + $0xd98] sm:$0xff]
        %v643 = vld [vmem:[%s178 + $0xda0] sm:$0xff]
        %v644 = vld [vmem:[%s178 + $0xda8] sm:$0xff]
        %v645 = vld [vmem:[%s178 + $0xdb0] sm:$0xff]
        %v646 = vld [vmem:[%s178 + $0xdb8] sm:$0xff]
        %v647 = vld [vmem:[%s178 + $0xdc0] sm:$0xff]
        %v648 = vld [vmem:[%s178 + $0xdc8] sm:$0xff]
        %v649 = vld [vmem:[%s178 + $0xdd0] sm:$0xff]
        %v650 = vld [vmem:[%s178 + $0xdd8] sm:$0xff]
        %v651 = vld [vmem:[%s178 + $0xde0] sm:$0xff]
        %v652 = vld [vmem:[%s178 + $0xde8] sm:$0xff]
        %v653 = vld [vmem:[%s178 + $0xdf0] sm:$0xff]
        %v654 = vld [vmem:[%s178 + $0xdf8] sm:$0xff]
        %v655 = vld [vmem:[%s178 + $0xe00] sm:$0xff]
        %v656 = vld [vmem:[%s178 + $0xe08] sm:$0xff]
        %v657 = vld [vmem:[%s178 + $0xe10] sm:$0xff]
        %v658 = vld [vmem:[%s178 + $0xe18] sm:$0xff]
        %v659 = vld [vmem:[%s178 + $0xe20] sm:$0xff]
        %v660 = vld [vmem:[%s178 + $0xe28] sm:$0xff]
        %v661 = vld [vmem:[%s178 + $0xe30] sm:$0xff]
        %v662 = vld [vmem:[%s178 + $0xe38] sm:$0xff]
        %v663 = vld [vmem:[%s178 + $0xe40] sm:$0xff]
        %v664 = vld [vmem:[%s178 + $0xe48] sm:$0xff]
        %v665 = vld [vmem:[%s178 + $0xe50] sm:$0xff]
        %v666 = vld [vmem:[%s178 + $0xe58] sm:$0xff]
        %v667 = vld [vmem:[%s178 + $0xe60] sm:$0xff]
        %v668 = vld [vmem:[%s178 + $0xe68] sm:$0xff]
        %v669 = vld [vmem:[%s178 + $0xe70] sm:$0xff]
        %v670 = vld [vmem:[%s178 + $0xe78] sm:$0xff]
        %v671 = vld [vmem:[%s178 + $0xe80] sm:$0xff]
        %v672 = vld [vmem:[%s178 + $0xe88] sm:$0xff]
        %v673 = vld [vmem:[%s178 + $0xe90] sm:$0xff]
        %v674 = vld [vmem:[%s178 + $0xe98] sm:$0xff]
        %v675 = vld [vmem:[%s178 + $0xea0] sm:$0xff]
        %v676 = vld [vmem:[%s178 + $0xea8] sm:$0xff]
        %v677 = vld [vmem:[%s178 + $0xeb0] sm:$0xff]
        %v678 = vld [vmem:[%s178 + $0xeb8] sm:$0xff]
        %v679 = vld [vmem:[%s178 + $0xec0] sm:$0xff]
        %v680 = vld [vmem:[%s178 + $0xec8] sm:$0xff]
        %v681 = vld [vmem:[%s178 + $0xed0] sm:$0xff]
        %v682 = vld [vmem:[%s178 + $0xed8] sm:$0xff]
        %v683 = vld [vmem:[%s178 + $0xee0] sm:$0xff]
        %v684 = vld [vmem:[%s178 + $0xee8] sm:$0xff]
        %v685 = vld [vmem:[%s178 + $0xef0] sm:$0xff]
        %v686 = vld [vmem:[%s178 + $0xef8] sm:$0xff]
        %v687 = vld [vmem:[%s178 + $0xf00] sm:$0xff]
        %v688 = vld [vmem:[%s178 + $0xf08] sm:$0xff]
        %v689 = vld [vmem:[%s178 + $0xf10] sm:$0xff]
        %v690 = vld [vmem:[%s178 + $0xf18] sm:$0xff]
        %v691 = vld [vmem:[%s178 + $0xf20] sm:$0xff]
        %v692 = vld [vmem:[%s178 + $0xf28] sm:$0xff]
        %v693 = vld [vmem:[%s178 + $0xf30] sm:$0xff]
        %v694 = vld [vmem:[%s178 + $0xf38] sm:$0xff]
        %v695 = vld [vmem:[%s178 + $0xf40] sm:$0xff]
        %v696 = vld [vmem:[%s178 + $0xf48] sm:$0xff]
        %v697 = vld [vmem:[%s178 + $0xf50] sm:$0xff]
        %v698 = vld [vmem:[%s178 + $0xf58] sm:$0xff]
        %v699 = vld [vmem:[%s178 + $0xf60] sm:$0xff]
        %v700 = vld [vmem:[%s178 + $0xf68] sm:$0xff]
        %v701 = vld [vmem:[%s178 + $0xf70] sm:$0xff]
        %v702 = vld [vmem:[%s178 + $0xf78] sm:$0xff]
        %v703 = vld [vmem:[%s178 + $0xf80] sm:$0xff]
        %v704 = vld [vmem:[%s178 + $0xf88] sm:$0xff]
        %v705 = vld [vmem:[%s178 + $0xf90] sm:$0xff]
        %v706 = vld [vmem:[%s178 + $0xf98] sm:$0xff]
        %v707 = vld [vmem:[%s178 + $0xfa0] sm:$0xff]
        %v708 = vld [vmem:[%s178 + $0xfa8] sm:$0xff]
        %v709 = vld [vmem:[%s178 + $0xfb0] sm:$0xff]
        %v710 = vld [vmem:[%s178 + $0xfb8] sm:$0xff]
        %v711 = vld [vmem:[%s178 + $0xfc0] sm:$0xff]
        %v712 = vld [vmem:[%s178 + $0xfc8] sm:$0xff]
        %v713 = vld [vmem:[%s178 + $0xfd0] sm:$0xff]
        %v714 = vld [vmem:[%s178 + $0xfd8] sm:$0xff]
        %v715 = vld [vmem:[%s178 + $0xfe0] sm:$0xff]
        %v716 = vld [vmem:[%s178 + $0xfe8] sm:$0xff]
        %v717 = vld [vmem:[%s178 + $0xff0] sm:$0xff]
        %v718 = vld [vmem:[%s178 + $0xff8] sm:$0xff]
        %v719 = vld [vmem:[%s169] sm:$0xff]
        %v720 = vld [vmem:[%s169 + $0x8] sm:$0xff]
        %v721 = vld [vmem:[%s169 + $0x10] sm:$0xff]
        %v722 = vld [vmem:[%s169 + $0x18] sm:$0xff]
        %v723 = vld [vmem:[%s169 + $0x20] sm:$0xff]
        %v724 = vld [vmem:[%s169 + $0x28] sm:$0xff]
        %v725 = vld [vmem:[%s169 + $0x30] sm:$0xff]
        %v726 = vld [vmem:[%s169 + $0x38] sm:$0xff]
        %v727 = vld [vmem:[%s169 + $0x40] sm:$0xff]
        %v728 = vld [vmem:[%s169 + $0x48] sm:$0xff]
        %v729 = vld [vmem:[%s169 + $0x50] sm:$0xff]
        %v730 = vld [vmem:[%s169 + $0x58] sm:$0xff]
        %v731 = vld [vmem:[%s169 + $0x60] sm:$0xff]
        %v732 = vld [vmem:[%s169 + $0x68] sm:$0xff]
        %v733 = vld [vmem:[%s169 + $0x70] sm:$0xff]
        %v734 = vld [vmem:[%s169 + $0x78] sm:$0xff]
        %v735 = vld [vmem:[%s169 + $0x80] sm:$0xff]
        %v736 = vld [vmem:[%s169 + $0x88] sm:$0xff]
        %v737 = vld [vmem:[%s169 + $0x90] sm:$0xff]
        %v738 = vld [vmem:[%s169 + $0x98] sm:$0xff]
        %v739 = vld [vmem:[%s169 + $0xa0] sm:$0xff]
        %v740 = vld [vmem:[%s169 + $0xa8] sm:$0xff]
        %v741 = vld [vmem:[%s169 + $0xb0] sm:$0xff]
        %v742 = vld [vmem:[%s169 + $0xb8] sm:$0xff]
        %v743 = vld [vmem:[%s169 + $0xc0] sm:$0xff]
        %v744 = vld [vmem:[%s169 + $0xc8] sm:$0xff]
        %v745 = vld [vmem:[%s169 + $0xd0] sm:$0xff]
        %v746 = vld [vmem:[%s169 + $0xd8] sm:$0xff]
        %v747 = vld [vmem:[%s169 + $0xe0] sm:$0xff]
        %v748 = vld [vmem:[%s169 + $0xe8] sm:$0xff]
        %v749 = vld [vmem:[%s169 + $0xf0] sm:$0xff]
        %v750 = vld [vmem:[%s169 + $0xf8] sm:$0xff]
        %v751 = vld [vmem:[%s169 + $0x100] sm:$0xff]
        %v752 = vld [vmem:[%s169 + $0x108] sm:$0xff]
        %v753 = vld [vmem:[%s169 + $0x110] sm:$0xff]
        %v754 = vld [vmem:[%s169 + $0x118] sm:$0xff]
        %v755 = vld [vmem:[%s169 + $0x120] sm:$0xff]
        %v756 = vld [vmem:[%s169 + $0x128] sm:$0xff]
        %v757 = vld [vmem:[%s169 + $0x130] sm:$0xff]
        %v758 = vld [vmem:[%s169 + $0x138] sm:$0xff]
        %v759 = vld [vmem:[%s169 + $0x140] sm:$0xff]
        %v760 = vld [vmem:[%s169 + $0x148] sm:$0xff]
        %v761 = vld [vmem:[%s169 + $0x150] sm:$0xff]
        %v762 = vld [vmem:[%s169 + $0x158] sm:$0xff]
        %v763 = vld [vmem:[%s169 + $0x160] sm:$0xff]
        %v764 = vld [vmem:[%s169 + $0x168] sm:$0xff]
        %v765 = vld [vmem:[%s169 + $0x170] sm:$0xff]
        %v766 = vld [vmem:[%s169 + $0x178] sm:$0xff]
        %v767 = vld [vmem:[%s169 + $0x180] sm:$0xff]
        %v768 = vld [vmem:[%s169 + $0x188] sm:$0xff]
        %v769 = vld [vmem:[%s169 + $0x190] sm:$0xff]
        %v770 = vld [vmem:[%s169 + $0x198] sm:$0xff]
        %v771 = vld [vmem:[%s169 + $0x1a0] sm:$0xff]
        %v772 = vld [vmem:[%s169 + $0x1a8] sm:$0xff]
        %v773 = vld [vmem:[%s169 + $0x1b0] sm:$0xff]
        %v774 = vld [vmem:[%s169 + $0x1b8] sm:$0xff]
        %v775 = vld [vmem:[%s169 + $0x1c0] sm:$0xff]
        %v776 = vld [vmem:[%s169 + $0x1c8] sm:$0xff]
        %v777 = vld [vmem:[%s169 + $0x1d0] sm:$0xff]
        %v778 = vld [vmem:[%s169 + $0x1d8] sm:$0xff]
        %v779 = vld [vmem:[%s169 + $0x1e0] sm:$0xff]
        %v780 = vld [vmem:[%s169 + $0x1e8] sm:$0xff]
        %v781 = vld [vmem:[%s169 + $0x1f0] sm:$0xff]
        %v782 = vld [vmem:[%s169 + $0x1f8] sm:$0xff]
        %v783 = vld [vmem:[%s169 + $0x200] sm:$0xff]
        %v784 = vld [vmem:[%s169 + $0x208] sm:$0xff]
        %v785 = vld [vmem:[%s169 + $0x210] sm:$0xff]
        %v786 = vld [vmem:[%s169 + $0x218] sm:$0xff]
        %v787 = vld [vmem:[%s169 + $0x220] sm:$0xff]
        %v788 = vld [vmem:[%s169 + $0x228] sm:$0xff]
        %v789 = vld [vmem:[%s169 + $0x230] sm:$0xff]
        %v790 = vld [vmem:[%s169 + $0x238] sm:$0xff]
        %v791 = vld [vmem:[%s169 + $0x240] sm:$0xff]
        %v792 = vld [vmem:[%s169 + $0x248] sm:$0xff]
        %v793 = vld [vmem:[%s169 + $0x250] sm:$0xff]
        %v794 = vld [vmem:[%s169 + $0x258] sm:$0xff]
        %v795 = vld [vmem:[%s169 + $0x260] sm:$0xff]
        %v796 = vld [vmem:[%s169 + $0x268] sm:$0xff]
        %v797 = vld [vmem:[%s169 + $0x270] sm:$0xff]
        %v798 = vld [vmem:[%s169 + $0x278] sm:$0xff]
        %v799 = vld [vmem:[%s169 + $0x280] sm:$0xff]
        %v800 = vld [vmem:[%s169 + $0x288] sm:$0xff]
        %v801 = vld [vmem:[%s169 + $0x290] sm:$0xff]
        %v802 = vld [vmem:[%s169 + $0x298] sm:$0xff]
        %v803 = vld [vmem:[%s169 + $0x2a0] sm:$0xff]
        %v804 = vld [vmem:[%s169 + $0x2a8] sm:$0xff]
        %v805 = vld [vmem:[%s169 + $0x2b0] sm:$0xff]
        %v806 = vld [vmem:[%s169 + $0x2b8] sm:$0xff]
        %v807 = vld [vmem:[%s169 + $0x2c0] sm:$0xff]
        %v808 = vld [vmem:[%s169 + $0x2c8] sm:$0xff]
        %v809 = vld [vmem:[%s169 + $0x2d0] sm:$0xff]
        %v810 = vld [vmem:[%s169 + $0x2d8] sm:$0xff]
        %v811 = vld [vmem:[%s169 + $0x2e0] sm:$0xff]
        %v812 = vld [vmem:[%s169 + $0x2e8] sm:$0xff]
        %v813 = vld [vmem:[%s169 + $0x2f0] sm:$0xff]
        %v814 = vld [vmem:[%s169 + $0x2f8] sm:$0xff]
        %v815 = vld [vmem:[%s169 + $0x300] sm:$0xff]
        %v816 = vld [vmem:[%s169 + $0x308] sm:$0xff]
        %v817 = vld [vmem:[%s169 + $0x310] sm:$0xff]
        %v818 = vld [vmem:[%s169 + $0x318] sm:$0xff]
        %v819 = vld [vmem:[%s169 + $0x320] sm:$0xff]
        %v820 = vld [vmem:[%s169 + $0x328] sm:$0xff]
        %v821 = vld [vmem:[%s169 + $0x330] sm:$0xff]
        %v822 = vld [vmem:[%s169 + $0x338] sm:$0xff]
        %v823 = vld [vmem:[%s169 + $0x340] sm:$0xff]
        %v824 = vld [vmem:[%s169 + $0x348] sm:$0xff]
        %v825 = vld [vmem:[%s169 + $0x350] sm:$0xff]
        %v826 = vld [vmem:[%s169 + $0x358] sm:$0xff]
        %v827 = vld [vmem:[%s169 + $0x360] sm:$0xff]
        %v828 = vld [vmem:[%s169 + $0x368] sm:$0xff]
        %v829 = vld [vmem:[%s169 + $0x370] sm:$0xff]
        %v830 = vld [vmem:[%s169 + $0x378] sm:$0xff]
        %v831 = vld [vmem:[%s169 + $0x380] sm:$0xff]
        %v832 = vld [vmem:[%s169 + $0x388] sm:$0xff]
        %v833 = vld [vmem:[%s169 + $0x390] sm:$0xff]
        %v834 = vld [vmem:[%s169 + $0x398] sm:$0xff]
        %v835 = vld [vmem:[%s169 + $0x3a0] sm:$0xff]
        %v836 = vld [vmem:[%s169 + $0x3a8] sm:$0xff]
        %v837 = vld [vmem:[%s169 + $0x3b0] sm:$0xff]
        %v838 = vld [vmem:[%s169 + $0x3b8] sm:$0xff]
        %v839 = vld [vmem:[%s169 + $0x3c0] sm:$0xff]
        %v840 = vld [vmem:[%s169 + $0x3c8] sm:$0xff]
        %v841 = vld [vmem:[%s169 + $0x3d0] sm:$0xff]
        %v842 = vld [vmem:[%s169 + $0x3d8] sm:$0xff]
        %v843 = vld [vmem:[%s169 + $0x3e0] sm:$0xff]
        %v844 = vld [vmem:[%s169 + $0x3e8] sm:$0xff]
        %v845 = vld [vmem:[%s169 + $0x3f0] sm:$0xff]
        %v846 = vld [vmem:[%s169 + $0x3f8] sm:$0xff]
        %v847 = vld [vmem:[%s169 + $0x400] sm:$0xff]
        %v848 = vld [vmem:[%s169 + $0x408] sm:$0xff]
        %v849 = vld [vmem:[%s169 + $0x410] sm:$0xff]
        %v850 = vld [vmem:[%s169 + $0x418] sm:$0xff]
        %v851 = vld [vmem:[%s169 + $0x420] sm:$0xff]
        %v852 = vld [vmem:[%s169 + $0x428] sm:$0xff]
        %v853 = vld [vmem:[%s169 + $0x430] sm:$0xff]
        %v854 = vld [vmem:[%s169 + $0x438] sm:$0xff]
        %v855 = vld [vmem:[%s169 + $0x440] sm:$0xff]
        %v856 = vld [vmem:[%s169 + $0x448] sm:$0xff]
        %v857 = vld [vmem:[%s169 + $0x450] sm:$0xff]
        %v858 = vld [vmem:[%s169 + $0x458] sm:$0xff]
        %v859 = vld [vmem:[%s169 + $0x460] sm:$0xff]
        %v860 = vld [vmem:[%s169 + $0x468] sm:$0xff]
        %v861 = vld [vmem:[%s169 + $0x470] sm:$0xff]
        %v862 = vld [vmem:[%s169 + $0x478] sm:$0xff]
        %v863 = vld [vmem:[%s169 + $0x480] sm:$0xff]
        %v864 = vld [vmem:[%s169 + $0x488] sm:$0xff]
        %v865 = vld [vmem:[%s169 + $0x490] sm:$0xff]
        %v866 = vld [vmem:[%s169 + $0x498] sm:$0xff]
        %v867 = vld [vmem:[%s169 + $0x4a0] sm:$0xff]
        %v868 = vld [vmem:[%s169 + $0x4a8] sm:$0xff]
        %v869 = vld [vmem:[%s169 + $0x4b0] sm:$0xff]
        %v870 = vld [vmem:[%s169 + $0x4b8] sm:$0xff]
        %v871 = vld [vmem:[%s169 + $0x4c0] sm:$0xff]
        %v872 = vld [vmem:[%s169 + $0x4c8] sm:$0xff]
        %v873 = vld [vmem:[%s169 + $0x4d0] sm:$0xff]
        %v874 = vld [vmem:[%s169 + $0x4d8] sm:$0xff]
        %v875 = vld [vmem:[%s169 + $0x4e0] sm:$0xff]
        %v876 = vld [vmem:[%s169 + $0x4e8] sm:$0xff]
        %v877 = vld [vmem:[%s169 + $0x4f0] sm:$0xff]
        %v878 = vld [vmem:[%s169 + $0x4f8] sm:$0xff]
        %v879 = vld [vmem:[%s169 + $0x500] sm:$0xff]
        %v880 = vld [vmem:[%s169 + $0x508] sm:$0xff]
        %v881 = vld [vmem:[%s169 + $0x510] sm:$0xff]
        %v882 = vld [vmem:[%s169 + $0x518] sm:$0xff]
        %v883 = vld [vmem:[%s169 + $0x520] sm:$0xff]
        %v884 = vld [vmem:[%s169 + $0x528] sm:$0xff]
        %v885 = vld [vmem:[%s169 + $0x530] sm:$0xff]
        %v886 = vld [vmem:[%s169 + $0x538] sm:$0xff]
        %v887 = vld [vmem:[%s169 + $0x540] sm:$0xff]
        %v888 = vld [vmem:[%s169 + $0x548] sm:$0xff]
        %v889 = vld [vmem:[%s169 + $0x550] sm:$0xff]
        %v890 = vld [vmem:[%s169 + $0x558] sm:$0xff]
        %v891 = vld [vmem:[%s169 + $0x560] sm:$0xff]
        %v892 = vld [vmem:[%s169 + $0x568] sm:$0xff]
        %v893 = vld [vmem:[%s169 + $0x570] sm:$0xff]
        %v894 = vld [vmem:[%s169 + $0x578] sm:$0xff]
        %v895 = vld [vmem:[%s169 + $0x580] sm:$0xff]
        %v896 = vld [vmem:[%s169 + $0x588] sm:$0xff]
        %v897 = vld [vmem:[%s169 + $0x590] sm:$0xff]
        %v898 = vld [vmem:[%s169 + $0x598] sm:$0xff]
        %v899 = vld [vmem:[%s169 + $0x5a0] sm:$0xff]
        %v900 = vld [vmem:[%s169 + $0x5a8] sm:$0xff]
        %v901 = vld [vmem:[%s169 + $0x5b0] sm:$0xff]
        %v902 = vld [vmem:[%s169 + $0x5b8] sm:$0xff]
        %v903 = vld [vmem:[%s169 + $0x5c0] sm:$0xff]
        %v904 = vld [vmem:[%s169 + $0x5c8] sm:$0xff]
        %v905 = vld [vmem:[%s169 + $0x5d0] sm:$0xff]
        %v906 = vld [vmem:[%s169 + $0x5d8] sm:$0xff]
        %v907 = vld [vmem:[%s169 + $0x5e0] sm:$0xff]
        %v908 = vld [vmem:[%s169 + $0x5e8] sm:$0xff]
        %v909 = vld [vmem:[%s169 + $0x5f0] sm:$0xff]
        %v910 = vld [vmem:[%s169 + $0x5f8] sm:$0xff]
        %v911 = vld [vmem:[%s169 + $0x600] sm:$0xff]
        %v912 = vld [vmem:[%s169 + $0x608] sm:$0xff]
        %v913 = vld [vmem:[%s169 + $0x610] sm:$0xff]
        %v914 = vld [vmem:[%s169 + $0x618] sm:$0xff]
        %v915 = vld [vmem:[%s169 + $0x620] sm:$0xff]
        %v916 = vld [vmem:[%s169 + $0x628] sm:$0xff]
        %v917 = vld [vmem:[%s169 + $0x630] sm:$0xff]
        %v918 = vld [vmem:[%s169 + $0x638] sm:$0xff]
        %v919 = vld [vmem:[%s169 + $0x640] sm:$0xff]
        %v920 = vld [vmem:[%s169 + $0x648] sm:$0xff]
        %v921 = vld [vmem:[%s169 + $0x650] sm:$0xff]
        %v922 = vld [vmem:[%s169 + $0x658] sm:$0xff]
        %v923 = vld [vmem:[%s169 + $0x660] sm:$0xff]
        %v924 = vld [vmem:[%s169 + $0x668] sm:$0xff]
        %v925 = vld [vmem:[%s169 + $0x670] sm:$0xff]
        %v926 = vld [vmem:[%s169 + $0x678] sm:$0xff]
        %v927 = vld [vmem:[%s169 + $0x680] sm:$0xff]
        %v928 = vld [vmem:[%s169 + $0x688] sm:$0xff]
        %v929 = vld [vmem:[%s169 + $0x690] sm:$0xff]
        %v930 = vld [vmem:[%s169 + $0x698] sm:$0xff]
        %v931 = vld [vmem:[%s169 + $0x6a0] sm:$0xff]
        %v932 = vld [vmem:[%s169 + $0x6a8] sm:$0xff]
        %v933 = vld [vmem:[%s169 + $0x6b0] sm:$0xff]
        %v934 = vld [vmem:[%s169 + $0x6b8] sm:$0xff]
        %v935 = vld [vmem:[%s169 + $0x6c0] sm:$0xff]
        %v936 = vld [vmem:[%s169 + $0x6c8] sm:$0xff]
        %v937 = vld [vmem:[%s169 + $0x6d0] sm:$0xff]
        %v938 = vld [vmem:[%s169 + $0x6d8] sm:$0xff]
        %v939 = vld [vmem:[%s169 + $0x6e0] sm:$0xff]
        %v940 = vld [vmem:[%s169 + $0x6e8] sm:$0xff]
        %v941 = vld [vmem:[%s169 + $0x6f0] sm:$0xff]
        %v942 = vld [vmem:[%s169 + $0x6f8] sm:$0xff]
        %v943 = vld [vmem:[%s169 + $0x700] sm:$0xff]
        %v944 = vld [vmem:[%s169 + $0x708] sm:$0xff]
        %v945 = vld [vmem:[%s169 + $0x710] sm:$0xff]
        %v946 = vld [vmem:[%s169 + $0x718] sm:$0xff]
        %v947 = vld [vmem:[%s169 + $0x720] sm:$0xff]
        %v948 = vld [vmem:[%s169 + $0x728] sm:$0xff]
        %v949 = vld [vmem:[%s169 + $0x730] sm:$0xff]
        %v950 = vld [vmem:[%s169 + $0x738] sm:$0xff]
        %v951 = vld [vmem:[%s169 + $0x740] sm:$0xff]
        %v952 = vld [vmem:[%s169 + $0x748] sm:$0xff]
        %v953 = vld [vmem:[%s169 + $0x750] sm:$0xff]
        %v954 = vld [vmem:[%s169 + $0x758] sm:$0xff]
        %v955 = vld [vmem:[%s169 + $0x760] sm:$0xff]
        %v956 = vld [vmem:[%s169 + $0x768] sm:$0xff]
        %v957 = vld [vmem:[%s169 + $0x770] sm:$0xff]
        %v958 = vld [vmem:[%s169 + $0x778] sm:$0xff]
        %v959 = vld [vmem:[%s169 + $0x780] sm:$0xff]
        %v960 = vld [vmem:[%s169 + $0x788] sm:$0xff]
        %v961 = vld [vmem:[%s169 + $0x790] sm:$0xff]
        %v962 = vld [vmem:[%s169 + $0x798] sm:$0xff]
        %v963 = vld [vmem:[%s169 + $0x7a0] sm:$0xff]
        %v964 = vld [vmem:[%s169 + $0x7a8] sm:$0xff]
        %v965 = vld [vmem:[%s169 + $0x7b0] sm:$0xff]
        %v966 = vld [vmem:[%s169 + $0x7b8] sm:$0xff]
        %v967 = vld [vmem:[%s169 + $0x7c0] sm:$0xff]
        %v968 = vld [vmem:[%s169 + $0x7c8] sm:$0xff]
        %v969 = vld [vmem:[%s169 + $0x7d0] sm:$0xff]
        %v970 = vld [vmem:[%s169 + $0x7d8] sm:$0xff]
        %v971 = vld [vmem:[%s169 + $0x7e0] sm:$0xff]
        %v972 = vld [vmem:[%s169 + $0x7e8] sm:$0xff]
        %v973 = vld [vmem:[%s169 + $0x7f0] sm:$0xff]
        %v974 = vld [vmem:[%s169 + $0x7f8] sm:$0xff]
        %v975 = vld [vmem:[%s169 + $0x800] sm:$0xff]
        %v976 = vld [vmem:[%s169 + $0x808] sm:$0xff]
        %v977 = vld [vmem:[%s169 + $0x810] sm:$0xff]
        %v978 = vld [vmem:[%s169 + $0x818] sm:$0xff]
        %v979 = vld [vmem:[%s169 + $0x820] sm:$0xff]
        %v980 = vld [vmem:[%s169 + $0x828] sm:$0xff]
        %v981 = vld [vmem:[%s169 + $0x830] sm:$0xff]
        %v982 = vld [vmem:[%s169 + $0x838] sm:$0xff]
        %v983 = vld [vmem:[%s169 + $0x840] sm:$0xff]
        %v984 = vld [vmem:[%s169 + $0x848] sm:$0xff]
        %v985 = vld [vmem:[%s169 + $0x850] sm:$0xff]
        %v986 = vld [vmem:[%s169 + $0x858] sm:$0xff]
        %v987 = vld [vmem:[%s169 + $0x860] sm:$0xff]
        %v988 = vld [vmem:[%s169 + $0x868] sm:$0xff]
        %v989 = vld [vmem:[%s169 + $0x870] sm:$0xff]
        %v990 = vld [vmem:[%s169 + $0x878] sm:$0xff]
        %v991 = vld [vmem:[%s169 + $0x880] sm:$0xff]
        %v992 = vld [vmem:[%s169 + $0x888] sm:$0xff]
        %v993 = vld [vmem:[%s169 + $0x890] sm:$0xff]
        %v994 = vld [vmem:[%s169 + $0x898] sm:$0xff]
        %v995 = vld [vmem:[%s169 + $0x8a0] sm:$0xff]
        %v996 = vld [vmem:[%s169 + $0x8a8] sm:$0xff]
        %v997 = vld [vmem:[%s169 + $0x8b0] sm:$0xff]
        %v998 = vld [vmem:[%s169 + $0x8b8] sm:$0xff]
        %v999 = vld [vmem:[%s169 + $0x8c0] sm:$0xff]
        %v1000 = vld [vmem:[%s169 + $0x8c8] sm:$0xff]
        %v1001 = vld [vmem:[%s169 + $0x8d0] sm:$0xff]
        %v1002 = vld [vmem:[%s169 + $0x8d8] sm:$0xff]
        %v1003 = vld [vmem:[%s169 + $0x8e0] sm:$0xff]
        %v1004 = vld [vmem:[%s169 + $0x8e8] sm:$0xff]
        %v1005 = vld [vmem:[%s169 + $0x8f0] sm:$0xff]
        %v1006 = vld [vmem:[%s169 + $0x8f8] sm:$0xff]
        %v1007 = vld [vmem:[%s169 + $0x900] sm:$0xff]
        %v1008 = vld [vmem:[%s169 + $0x908] sm:$0xff]
        %v1009 = vld [vmem:[%s169 + $0x910] sm:$0xff]
        %v1010 = vld [vmem:[%s169 + $0x918] sm:$0xff]
        %v1011 = vld [vmem:[%s169 + $0x920] sm:$0xff]
        %v1012 = vld [vmem:[%s169 + $0x928] sm:$0xff]
        %v1013 = vld [vmem:[%s169 + $0x930] sm:$0xff]
        %v1014 = vld [vmem:[%s169 + $0x938] sm:$0xff]
        %v1015 = vld [vmem:[%s169 + $0x940] sm:$0xff]
        %v1016 = vld [vmem:[%s169 + $0x948] sm:$0xff]
        %v1017 = vld [vmem:[%s169 + $0x950] sm:$0xff]
        %v1018 = vld [vmem:[%s169 + $0x958] sm:$0xff]
        %v1019 = vld [vmem:[%s169 + $0x960] sm:$0xff]
        %v1020 = vld [vmem:[%s169 + $0x968] sm:$0xff]
        %v1021 = vld [vmem:[%s169 + $0x970] sm:$0xff]
        %v1022 = vld [vmem:[%s169 + $0x978] sm:$0xff]
        %v1023 = vld [vmem:[%s169 + $0x980] sm:$0xff]
        %v1024 = vld [vmem:[%s169 + $0x988] sm:$0xff]
        %v1025 = vld [vmem:[%s169 + $0x990] sm:$0xff]
        %v1026 = vld [vmem:[%s169 + $0x998] sm:$0xff]
        %v1027 = vld [vmem:[%s169 + $0x9a0] sm:$0xff]
        %v1028 = vld [vmem:[%s169 + $0x9a8] sm:$0xff]
        %v1029 = vld [vmem:[%s169 + $0x9b0] sm:$0xff]
        %v1030 = vld [vmem:[%s169 + $0x9b8] sm:$0xff]
        %v1031 = vld [vmem:[%s169 + $0x9c0] sm:$0xff]
        %v1032 = vld [vmem:[%s169 + $0x9c8] sm:$0xff]
        %v1033 = vld [vmem:[%s169 + $0x9d0] sm:$0xff]
        %v1034 = vld [vmem:[%s169 + $0x9d8] sm:$0xff]
        %v1035 = vld [vmem:[%s169 + $0x9e0] sm:$0xff]
        %v1036 = vld [vmem:[%s169 + $0x9e8] sm:$0xff]
        %v1037 = vld [vmem:[%s169 + $0x9f0] sm:$0xff]
        %v1038 = vld [vmem:[%s169 + $0x9f8] sm:$0xff]
        %v1039 = vld [vmem:[%s169 + $0xa00] sm:$0xff]
        %v1040 = vld [vmem:[%s169 + $0xa08] sm:$0xff]
        %v1041 = vld [vmem:[%s169 + $0xa10] sm:$0xff]
        %v1042 = vld [vmem:[%s169 + $0xa18] sm:$0xff]
        %v1043 = vld [vmem:[%s169 + $0xa20] sm:$0xff]
        %v1044 = vld [vmem:[%s169 + $0xa28] sm:$0xff]
        %v1045 = vld [vmem:[%s169 + $0xa30] sm:$0xff]
        %v1046 = vld [vmem:[%s169 + $0xa38] sm:$0xff]
        %v1047 = vld [vmem:[%s169 + $0xa40] sm:$0xff]
        %v1048 = vld [vmem:[%s169 + $0xa48] sm:$0xff]
        %v1049 = vld [vmem:[%s169 + $0xa50] sm:$0xff]
        %v1050 = vld [vmem:[%s169 + $0xa58] sm:$0xff]
        %v1051 = vld [vmem:[%s169 + $0xa60] sm:$0xff]
        %v1052 = vld [vmem:[%s169 + $0xa68] sm:$0xff]
        %v1053 = vld [vmem:[%s169 + $0xa70] sm:$0xff]
        %v1054 = vld [vmem:[%s169 + $0xa78] sm:$0xff]
        %v1055 = vld [vmem:[%s169 + $0xa80] sm:$0xff]
        %v1056 = vld [vmem:[%s169 + $0xa88] sm:$0xff]
        %v1057 = vld [vmem:[%s169 + $0xa90] sm:$0xff]
        %v1058 = vld [vmem:[%s169 + $0xa98] sm:$0xff]
        %v1059 = vld [vmem:[%s169 + $0xaa0] sm:$0xff]
        %v1060 = vld [vmem:[%s169 + $0xaa8] sm:$0xff]
        %v1061 = vld [vmem:[%s169 + $0xab0] sm:$0xff]
        %v1062 = vld [vmem:[%s169 + $0xab8] sm:$0xff]
        %v1063 = vld [vmem:[%s169 + $0xac0] sm:$0xff]
        %v1064 = vld [vmem:[%s169 + $0xac8] sm:$0xff]
        %v1065 = vld [vmem:[%s169 + $0xad0] sm:$0xff]
        %v1066 = vld [vmem:[%s169 + $0xad8] sm:$0xff]
        %v1067 = vld [vmem:[%s169 + $0xae0] sm:$0xff]
        %v1068 = vld [vmem:[%s169 + $0xae8] sm:$0xff]
        %v1069 = vld [vmem:[%s169 + $0xaf0] sm:$0xff]
        %v1070 = vld [vmem:[%s169 + $0xaf8] sm:$0xff]
        %v1071 = vld [vmem:[%s169 + $0xb00] sm:$0xff]
        %v1072 = vld [vmem:[%s169 + $0xb08] sm:$0xff]
        %v1073 = vld [vmem:[%s169 + $0xb10] sm:$0xff]
        %v1074 = vld [vmem:[%s169 + $0xb18] sm:$0xff]
        %v1075 = vld [vmem:[%s169 + $0xb20] sm:$0xff]
        %v1076 = vld [vmem:[%s169 + $0xb28] sm:$0xff]
        %v1077 = vld [vmem:[%s169 + $0xb30] sm:$0xff]
        %v1078 = vld [vmem:[%s169 + $0xb38] sm:$0xff]
        %v1079 = vld [vmem:[%s169 + $0xb40] sm:$0xff]
        %v1080 = vld [vmem:[%s169 + $0xb48] sm:$0xff]
        %v1081 = vld [vmem:[%s169 + $0xb50] sm:$0xff]
        %v1082 = vld [vmem:[%s169 + $0xb58] sm:$0xff]
        %v1083 = vld [vmem:[%s169 + $0xb60] sm:$0xff]
        %v1084 = vld [vmem:[%s169 + $0xb68] sm:$0xff]
        %v1085 = vld [vmem:[%s169 + $0xb70] sm:$0xff]
        %v1086 = vld [vmem:[%s169 + $0xb78] sm:$0xff]
        %v1087 = vld [vmem:[%s169 + $0xb80] sm:$0xff]
        %v1088 = vld [vmem:[%s169 + $0xb88] sm:$0xff]
        %v1089 = vld [vmem:[%s169 + $0xb90] sm:$0xff]
        %v1090 = vld [vmem:[%s169 + $0xb98] sm:$0xff]
        %v1091 = vld [vmem:[%s169 + $0xba0] sm:$0xff]
        %v1092 = vld [vmem:[%s169 + $0xba8] sm:$0xff]
        %v1093 = vld [vmem:[%s169 + $0xbb0] sm:$0xff]
        %v1094 = vld [vmem:[%s169 + $0xbb8] sm:$0xff]
        %v1095 = vld [vmem:[%s169 + $0xbc0] sm:$0xff]
        %v1096 = vld [vmem:[%s169 + $0xbc8] sm:$0xff]
        %v1097 = vld [vmem:[%s169 + $0xbd0] sm:$0xff]
        %v1098 = vld [vmem:[%s169 + $0xbd8] sm:$0xff]
        %v1099 = vld [vmem:[%s169 + $0xbe0] sm:$0xff]
        %v1100 = vld [vmem:[%s169 + $0xbe8] sm:$0xff]
        %v1101 = vld [vmem:[%s169 + $0xbf0] sm:$0xff]
        %v1102 = vld [vmem:[%s169 + $0xbf8] sm:$0xff]
        %v1103 = vld [vmem:[%s169 + $0xc00] sm:$0xff]
        %v1104 = vld [vmem:[%s169 + $0xc08] sm:$0xff]
        %v1105 = vld [vmem:[%s169 + $0xc10] sm:$0xff]
        %v1106 = vld [vmem:[%s169 + $0xc18] sm:$0xff]
        %v1107 = vld [vmem:[%s169 + $0xc20] sm:$0xff]
        %v1108 = vld [vmem:[%s169 + $0xc28] sm:$0xff]
        %v1109 = vld [vmem:[%s169 + $0xc30] sm:$0xff]
        %v1110 = vld [vmem:[%s169 + $0xc38] sm:$0xff]
        %v1111 = vld [vmem:[%s169 + $0xc40] sm:$0xff]
        %v1112 = vld [vmem:[%s169 + $0xc48] sm:$0xff]
        %v1113 = vld [vmem:[%s169 + $0xc50] sm:$0xff]
        %v1114 = vld [vmem:[%s169 + $0xc58] sm:$0xff]
        %v1115 = vld [vmem:[%s169 + $0xc60] sm:$0xff]
        %v1116 = vld [vmem:[%s169 + $0xc68] sm:$0xff]
        %v1117 = vld [vmem:[%s169 + $0xc70] sm:$0xff]
        %v1118 = vld [vmem:[%s169 + $0xc78] sm:$0xff]
        %v1119 = vld [vmem:[%s169 + $0xc80] sm:$0xff]
        %v1120 = vld [vmem:[%s169 + $0xc88] sm:$0xff]
        %v1121 = vld [vmem:[%s169 + $0xc90] sm:$0xff]
        %v1122 = vld [vmem:[%s169 + $0xc98] sm:$0xff]
        %v1123 = vld [vmem:[%s169 + $0xca0] sm:$0xff]
        %v1124 = vld [vmem:[%s169 + $0xca8] sm:$0xff]
        %v1125 = vld [vmem:[%s169 + $0xcb0] sm:$0xff]
        %v1126 = vld [vmem:[%s169 + $0xcb8] sm:$0xff]
        %v1127 = vld [vmem:[%s169 + $0xcc0] sm:$0xff]
        %v1128 = vld [vmem:[%s169 + $0xcc8] sm:$0xff]
        %v1129 = vld [vmem:[%s169 + $0xcd0] sm:$0xff]
        %v1130 = vld [vmem:[%s169 + $0xcd8] sm:$0xff]
        %v1131 = vld [vmem:[%s169 + $0xce0] sm:$0xff]
        %v1132 = vld [vmem:[%s169 + $0xce8] sm:$0xff]
        %v1133 = vld [vmem:[%s169 + $0xcf0] sm:$0xff]
        %v1134 = vld [vmem:[%s169 + $0xcf8] sm:$0xff]
        %v1135 = vld [vmem:[%s169 + $0xd00] sm:$0xff]
        %v1136 = vld [vmem:[%s169 + $0xd08] sm:$0xff]
        %v1137 = vld [vmem:[%s169 + $0xd10] sm:$0xff]
        %v1138 = vld [vmem:[%s169 + $0xd18] sm:$0xff]
        %v1139 = vld [vmem:[%s169 + $0xd20] sm:$0xff]
        %v1140 = vld [vmem:[%s169 + $0xd28] sm:$0xff]
        %v1141 = vld [vmem:[%s169 + $0xd30] sm:$0xff]
        %v1142 = vld [vmem:[%s169 + $0xd38] sm:$0xff]
        %v1143 = vld [vmem:[%s169 + $0xd40] sm:$0xff]
        %v1144 = vld [vmem:[%s169 + $0xd48] sm:$0xff]
        %v1145 = vld [vmem:[%s169 + $0xd50] sm:$0xff]
        %v1146 = vld [vmem:[%s169 + $0xd58] sm:$0xff]
        %v1147 = vld [vmem:[%s169 + $0xd60] sm:$0xff]
        %v1148 = vld [vmem:[%s169 + $0xd68] sm:$0xff]
        %v1149 = vld [vmem:[%s169 + $0xd70] sm:$0xff]
        %v1150 = vld [vmem:[%s169 + $0xd78] sm:$0xff]
        %v1151 = vld [vmem:[%s169 + $0xd80] sm:$0xff]
        %v1152 = vld [vmem:[%s169 + $0xd88] sm:$0xff]
        %v1153 = vld [vmem:[%s169 + $0xd90] sm:$0xff]
        %v1154 = vld [vmem:[%s169 + $0xd98] sm:$0xff]
        %v1155 = vld [vmem:[%s169 + $0xda0] sm:$0xff]
        %v1156 = vld [vmem:[%s169 + $0xda8] sm:$0xff]
        %v1157 = vld [vmem:[%s169 + $0xdb0] sm:$0xff]
        %v1158 = vld [vmem:[%s169 + $0xdb8] sm:$0xff]
        %v1159 = vld [vmem:[%s169 + $0xdc0] sm:$0xff]
        %v1160 = vld [vmem:[%s169 + $0xdc8] sm:$0xff]
        %v1161 = vld [vmem:[%s169 + $0xdd0] sm:$0xff]
        %v1162 = vld [vmem:[%s169 + $0xdd8] sm:$0xff]
        %v1163 = vld [vmem:[%s169 + $0xde0] sm:$0xff]
        %v1164 = vld [vmem:[%s169 + $0xde8] sm:$0xff]
        %v1165 = vld [vmem:[%s169 + $0xdf0] sm:$0xff]
        %v1166 = vld [vmem:[%s169 + $0xdf8] sm:$0xff]
        %v1167 = vld [vmem:[%s169 + $0xe00] sm:$0xff]
        %v1168 = vld [vmem:[%s169 + $0xe08] sm:$0xff]
        %v1169 = vld [vmem:[%s169 + $0xe10] sm:$0xff]
        %v1170 = vld [vmem:[%s169 + $0xe18] sm:$0xff]
        %v1171 = vld [vmem:[%s169 + $0xe20] sm:$0xff]
        %v1172 = vld [vmem:[%s169 + $0xe28] sm:$0xff]
        %v1173 = vld [vmem:[%s169 + $0xe30] sm:$0xff]
        %v1174 = vld [vmem:[%s169 + $0xe38] sm:$0xff]
        %v1175 = vld [vmem:[%s169 + $0xe40] sm:$0xff]
        %v1176 = vld [vmem:[%s169 + $0xe48] sm:$0xff]
        %v1177 = vld [vmem:[%s169 + $0xe50] sm:$0xff]
        %v1178 = vld [vmem:[%s169 + $0xe58] sm:$0xff]
        %v1179 = vld [vmem:[%s169 + $0xe60] sm:$0xff]
        %v1180 = vld [vmem:[%s169 + $0xe68] sm:$0xff]
        %v1181 = vld [vmem:[%s169 + $0xe70] sm:$0xff]
        %v1182 = vld [vmem:[%s169 + $0xe78] sm:$0xff]
        %v1183 = vld [vmem:[%s169 + $0xe80] sm:$0xff]
        %v1184 = vld [vmem:[%s169 + $0xe88] sm:$0xff]
        %v1185 = vld [vmem:[%s169 + $0xe90] sm:$0xff]
        %v1186 = vld [vmem:[%s169 + $0xe98] sm:$0xff]
        %v1187 = vld [vmem:[%s169 + $0xea0] sm:$0xff]
        %v1188 = vld [vmem:[%s169 + $0xea8] sm:$0xff]
        %v1189 = vld [vmem:[%s169 + $0xeb0] sm:$0xff]
        %v1190 = vld [vmem:[%s169 + $0xeb8] sm:$0xff]
        %v1191 = vld [vmem:[%s169 + $0xec0] sm:$0xff]
        %v1192 = vld [vmem:[%s169 + $0xec8] sm:$0xff]
        %v1193 = vld [vmem:[%s169 + $0xed0] sm:$0xff]
        %v1194 = vld [vmem:[%s169 + $0xed8] sm:$0xff]
        %v1195 = vld [vmem:[%s169 + $0xee0] sm:$0xff]
        %v1196 = vld [vmem:[%s169 + $0xee8] sm:$0xff]
        %v1197 = vld [vmem:[%s169 + $0xef0] sm:$0xff]
        %v1198 = vld [vmem:[%s169 + $0xef8] sm:$0xff]
        %v1199 = vld [vmem:[%s169 + $0xf00] sm:$0xff]
        %v1200 = vld [vmem:[%s169 + $0xf08] sm:$0xff]
        %v1201 = vld [vmem:[%s169 + $0xf10] sm:$0xff]
        %v1202 = vld [vmem:[%s169 + $0xf18] sm:$0xff]
        %v1203 = vld [vmem:[%s169 + $0xf20] sm:$0xff]
        %v1204 = vld [vmem:[%s169 + $0xf28] sm:$0xff]
        %v1205 = vld [vmem:[%s169 + $0xf30] sm:$0xff]
        %v1206 = vld [vmem:[%s169 + $0xf38] sm:$0xff]
        %v1207 = vld [vmem:[%s169 + $0xf40] sm:$0xff]
        %v1208 = vld [vmem:[%s169 + $0xf48] sm:$0xff]
        %v1209 = vld [vmem:[%s169 + $0xf50] sm:$0xff]
        %v1210 = vld [vmem:[%s169 + $0xf58] sm:$0xff]
        %v1211 = vld [vmem:[%s169 + $0xf60] sm:$0xff]
        %v1212 = vld [vmem:[%s169 + $0xf68] sm:$0xff]
        %v1213 = vld [vmem:[%s169 + $0xf70] sm:$0xff]
        %v1214 = vld [vmem:[%s169 + $0xf78] sm:$0xff]
        %v1215 = vld [vmem:[%s169 + $0xf80] sm:$0xff]
        %v1216 = vld [vmem:[%s169 + $0xf88] sm:$0xff]
        %v1217 = vld [vmem:[%s169 + $0xf90] sm:$0xff]
        %v1218 = vld [vmem:[%s169 + $0xf98] sm:$0xff]
        %v1219 = vld [vmem:[%s169 + $0xfa0] sm:$0xff]
        %v1220 = vld [vmem:[%s169 + $0xfa8] sm:$0xff]
        %v1221 = vld [vmem:[%s169 + $0xfb0] sm:$0xff]
        %v1222 = vld [vmem:[%s169 + $0xfb8] sm:$0xff]
        %v1223 = vld [vmem:[%s169 + $0xfc0] sm:$0xff]
        %v1224 = vld [vmem:[%s169 + $0xfc8] sm:$0xff]
        %v1225 = vld [vmem:[%s169 + $0xfd0] sm:$0xff]
        %v1226 = vld [vmem:[%s169 + $0xfd8] sm:$0xff]
        %v1227 = vld [vmem:[%s169 + $0xfe0] sm:$0xff]
        %v1228 = vld [vmem:[%s169 + $0xfe8] sm:$0xff]
        %v1229 = vld [vmem:[%s169 + $0xff0] sm:$0xff]
        %v1230 = vld [vmem:[%s169 + $0xff8] sm:$0xff]
        %v1231 = vmul.f32 %v719, %v207
        %v1232 = vmul.f32 %v720, %v208
        %v1233 = vmul.f32 %v721, %v209
        %v1234 = vmul.f32 %v722, %v210
        %v1235 = vmul.f32 %v723, %v211
        %v1236 = vmul.f32 %v724, %v212
        %v1237 = vmul.f32 %v725, %v213
        %v1238 = vmul.f32 %v726, %v214
        %v1239 = vmul.f32 %v727, %v215
        %v1240 = vmul.f32 %v728, %v216
        %v1241 = vmul.f32 %v729, %v217
        %v1242 = vmul.f32 %v730, %v218
        %v1243 = vmul.f32 %v731, %v219
        %v1244 = vmul.f32 %v732, %v220
        %v1245 = vmul.f32 %v733, %v221
        %v1246 = vmul.f32 %v734, %v222
        %v1247 = vmul.f32 %v735, %v223
        %v1248 = vmul.f32 %v736, %v224
        %v1249 = vmul.f32 %v737, %v225
        %v1250 = vmul.f32 %v738, %v226
        %v1251 = vmul.f32 %v739, %v227
        %v1252 = vmul.f32 %v740, %v228
        %v1253 = vmul.f32 %v741, %v229
        %v1254 = vmul.f32 %v742, %v230
        %v1255 = vmul.f32 %v743, %v231
        %v1256 = vmul.f32 %v744, %v232
        %v1257 = vmul.f32 %v745, %v233
        %v1258 = vmul.f32 %v746, %v234
        %v1259 = vmul.f32 %v747, %v235
        %v1260 = vmul.f32 %v748, %v236
        %v1261 = vmul.f32 %v749, %v237
        %v1262 = vmul.f32 %v750, %v238
        %v1263 = vmul.f32 %v751, %v239
        %v1264 = vmul.f32 %v752, %v240
        %v1265 = vmul.f32 %v753, %v241
        %v1266 = vmul.f32 %v754, %v242
        %v1267 = vmul.f32 %v755, %v243
        %v1268 = vmul.f32 %v756, %v244
        %v1269 = vmul.f32 %v757, %v245
        %v1270 = vmul.f32 %v758, %v246
        %v1271 = vmul.f32 %v759, %v247
        %v1272 = vmul.f32 %v760, %v248
        %v1273 = vmul.f32 %v761, %v249
        %v1274 = vmul.f32 %v762, %v250
        %v1275 = vmul.f32 %v763, %v251
        %v1276 = vmul.f32 %v764, %v252
        %v1277 = vmul.f32 %v765, %v253
        %v1278 = vmul.f32 %v766, %v254
        %v1279 = vmul.f32 %v767, %v255
        %v1280 = vmul.f32 %v768, %v256
        %v1281 = vmul.f32 %v769, %v257
        %v1282 = vmul.f32 %v770, %v258
        %v1283 = vmul.f32 %v771, %v259
        %v1284 = vmul.f32 %v772, %v260
        %v1285 = vmul.f32 %v773, %v261
        %v1286 = vmul.f32 %v774, %v262
        %v1287 = vmul.f32 %v775, %v263
        %v1288 = vmul.f32 %v776, %v264
        %v1289 = vmul.f32 %v777, %v265
        %v1290 = vmul.f32 %v778, %v266
        %v1291 = vmul.f32 %v779, %v267
        %v1292 = vmul.f32 %v780, %v268
        %v1293 = vmul.f32 %v781, %v269
        %v1294 = vmul.f32 %v782, %v270
        %v1295 = vmul.f32 %v783, %v271
        %v1296 = vmul.f32 %v784, %v272
        %v1297 = vmul.f32 %v785, %v273
        %v1298 = vmul.f32 %v786, %v274
        %v1299 = vmul.f32 %v787, %v275
        %v1300 = vmul.f32 %v788, %v276
        %v1301 = vmul.f32 %v789, %v277
        %v1302 = vmul.f32 %v790, %v278
        %v1303 = vmul.f32 %v791, %v279
        %v1304 = vmul.f32 %v792, %v280
        %v1305 = vmul.f32 %v793, %v281
        %v1306 = vmul.f32 %v794, %v282
        %v1307 = vmul.f32 %v795, %v283
        %v1308 = vmul.f32 %v796, %v284
        %v1309 = vmul.f32 %v797, %v285
        %v1310 = vmul.f32 %v798, %v286
        %v1311 = vmul.f32 %v799, %v287
        %v1312 = vmul.f32 %v800, %v288
        %v1313 = vmul.f32 %v801, %v289
        %v1314 = vmul.f32 %v802, %v290
        %v1315 = vmul.f32 %v803, %v291
        %v1316 = vmul.f32 %v804, %v292
        %v1317 = vmul.f32 %v805, %v293
        %v1318 = vmul.f32 %v806, %v294
        %v1319 = vmul.f32 %v807, %v295
        %v1320 = vmul.f32 %v808, %v296
        %v1321 = vmul.f32 %v809, %v297
        %v1322 = vmul.f32 %v810, %v298
        %v1323 = vmul.f32 %v811, %v299
        %v1324 = vmul.f32 %v812, %v300
        %v1325 = vmul.f32 %v813, %v301
        %v1326 = vmul.f32 %v814, %v302
        %v1327 = vmul.f32 %v815, %v303
        %v1328 = vmul.f32 %v816, %v304
        %v1329 = vmul.f32 %v817, %v305
        %v1330 = vmul.f32 %v818, %v306
        %v1331 = vmul.f32 %v819, %v307
        %v1332 = vmul.f32 %v820, %v308
        %v1333 = vmul.f32 %v821, %v309
        %v1334 = vmul.f32 %v822, %v310
        %v1335 = vmul.f32 %v823, %v311
        %v1336 = vmul.f32 %v824, %v312
        %v1337 = vmul.f32 %v825, %v313
        %v1338 = vmul.f32 %v826, %v314
        %v1339 = vmul.f32 %v827, %v315
        %v1340 = vmul.f32 %v828, %v316
        %v1341 = vmul.f32 %v829, %v317
        %v1342 = vmul.f32 %v830, %v318
        %v1343 = vmul.f32 %v831, %v319
        %v1344 = vmul.f32 %v832, %v320
        %v1345 = vmul.f32 %v833, %v321
        %v1346 = vmul.f32 %v834, %v322
        %v1347 = vmul.f32 %v835, %v323
        %v1348 = vmul.f32 %v836, %v324
        %v1349 = vmul.f32 %v837, %v325
        %v1350 = vmul.f32 %v838, %v326
        %v1351 = vmul.f32 %v839, %v327
        %v1352 = vmul.f32 %v840, %v328
        %v1353 = vmul.f32 %v841, %v329
        %v1354 = vmul.f32 %v842, %v330
        %v1355 = vmul.f32 %v843, %v331
        %v1356 = vmul.f32 %v844, %v332
        %v1357 = vmul.f32 %v845, %v333
        %v1358 = vmul.f32 %v846, %v334
        %v1359 = vmul.f32 %v847, %v335
        %v1360 = vmul.f32 %v848, %v336
        %v1361 = vmul.f32 %v849, %v337
        %v1362 = vmul.f32 %v850, %v338
        %v1363 = vmul.f32 %v851, %v339
        %v1364 = vmul.f32 %v852, %v340
        %v1365 = vmul.f32 %v853, %v341
        %v1366 = vmul.f32 %v854, %v342
        %v1367 = vmul.f32 %v855, %v343
        %v1368 = vmul.f32 %v856, %v344
        %v1369 = vmul.f32 %v857, %v345
        %v1370 = vmul.f32 %v858, %v346
        %v1371 = vmul.f32 %v859, %v347
        %v1372 = vmul.f32 %v860, %v348
        %v1373 = vmul.f32 %v861, %v349
        %v1374 = vmul.f32 %v862, %v350
        %v1375 = vmul.f32 %v863, %v351
        %v1376 = vmul.f32 %v864, %v352
        %v1377 = vmul.f32 %v865, %v353
        %v1378 = vmul.f32 %v866, %v354
        %v1379 = vmul.f32 %v867, %v355
        %v1380 = vmul.f32 %v868, %v356
        %v1381 = vmul.f32 %v869, %v357
        %v1382 = vmul.f32 %v870, %v358
        %v1383 = vmul.f32 %v871, %v359
        %v1384 = vmul.f32 %v872, %v360
        %v1385 = vmul.f32 %v873, %v361
        %v1386 = vmul.f32 %v874, %v362
        %v1387 = vmul.f32 %v875, %v363
        %v1388 = vmul.f32 %v876, %v364
        %v1389 = vmul.f32 %v877, %v365
        %v1390 = vmul.f32 %v878, %v366
        %v1391 = vmul.f32 %v879, %v367
        %v1392 = vmul.f32 %v880, %v368
        %v1393 = vmul.f32 %v881, %v369
        %v1394 = vmul.f32 %v882, %v370
        %v1395 = vmul.f32 %v883, %v371
        %v1396 = vmul.f32 %v884, %v372
        %v1397 = vmul.f32 %v885, %v373
        %v1398 = vmul.f32 %v886, %v374
        %v1399 = vmul.f32 %v887, %v375
        %v1400 = vmul.f32 %v888, %v376
        %v1401 = vmul.f32 %v889, %v377
        %v1402 = vmul.f32 %v890, %v378
        %v1403 = vmul.f32 %v891, %v379
        %v1404 = vmul.f32 %v892, %v380
        %v1405 = vmul.f32 %v893, %v381
        %v1406 = vmul.f32 %v894, %v382
        %v1407 = vmul.f32 %v895, %v383
        %v1408 = vmul.f32 %v896, %v384
        %v1409 = vmul.f32 %v897, %v385
        %v1410 = vmul.f32 %v898, %v386
        %v1411 = vmul.f32 %v899, %v387
        %v1412 = vmul.f32 %v900, %v388
        %v1413 = vmul.f32 %v901, %v389
        %v1414 = vmul.f32 %v902, %v390
        %v1415 = vmul.f32 %v903, %v391
        %v1416 = vmul.f32 %v904, %v392
        %v1417 = vmul.f32 %v905, %v393
        %v1418 = vmul.f32 %v906, %v394
        %v1419 = vmul.f32 %v907, %v395
        %v1420 = vmul.f32 %v908, %v396
        %v1421 = vmul.f32 %v909, %v397
        %v1422 = vmul.f32 %v910, %v398
        %v1423 = vmul.f32 %v911, %v399
        %v1424 = vmul.f32 %v912, %v400
        %v1425 = vmul.f32 %v913, %v401
        %v1426 = vmul.f32 %v914, %v402
        %v1427 = vmul.f32 %v915, %v403
        %v1428 = vmul.f32 %v916, %v404
        %v1429 = vmul.f32 %v917, %v405
        %v1430 = vmul.f32 %v918, %v406
        %v1431 = vmul.f32 %v919, %v407
        %v1432 = vmul.f32 %v920, %v408
        %v1433 = vmul.f32 %v921, %v409
        %v1434 = vmul.f32 %v922, %v410
        %v1435 = vmul.f32 %v923, %v411
        %v1436 = vmul.f32 %v924, %v412
        %v1437 = vmul.f32 %v925, %v413
        %v1438 = vmul.f32 %v926, %v414
        %v1439 = vmul.f32 %v927, %v415
        %v1440 = vmul.f32 %v928, %v416
        %v1441 = vmul.f32 %v929, %v417
        %v1442 = vmul.f32 %v930, %v418
        %v1443 = vmul.f32 %v931, %v419
        %v1444 = vmul.f32 %v932, %v420
        %v1445 = vmul.f32 %v933, %v421
        %v1446 = vmul.f32 %v934, %v422
        %v1447 = vmul.f32 %v935, %v423
        %v1448 = vmul.f32 %v936, %v424
        %v1449 = vmul.f32 %v937, %v425
        %v1450 = vmul.f32 %v938, %v426
        %v1451 = vmul.f32 %v939, %v427
        %v1452 = vmul.f32 %v940, %v428
        %v1453 = vmul.f32 %v941, %v429
        %v1454 = vmul.f32 %v942, %v430
        %v1455 = vmul.f32 %v943, %v431
        %v1456 = vmul.f32 %v944, %v432
        %v1457 = vmul.f32 %v945, %v433
        %v1458 = vmul.f32 %v946, %v434
        %v1459 = vmul.f32 %v947, %v435
        %v1460 = vmul.f32 %v948, %v436
        %v1461 = vmul.f32 %v949, %v437
        %v1462 = vmul.f32 %v950, %v438
        %v1463 = vmul.f32 %v951, %v439
        %v1464 = vmul.f32 %v952, %v440
        %v1465 = vmul.f32 %v953, %v441
        %v1466 = vmul.f32 %v954, %v442
        %v1467 = vmul.f32 %v955, %v443
        %v1468 = vmul.f32 %v956, %v444
        %v1469 = vmul.f32 %v957, %v445
        %v1470 = vmul.f32 %v958, %v446
        %v1471 = vmul.f32 %v959, %v447
        %v1472 = vmul.f32 %v960, %v448
        %v1473 = vmul.f32 %v961, %v449
        %v1474 = vmul.f32 %v962, %v450
        %v1475 = vmul.f32 %v963, %v451
        %v1476 = vmul.f32 %v964, %v452
        %v1477 = vmul.f32 %v965, %v453
        %v1478 = vmul.f32 %v966, %v454
        %v1479 = vmul.f32 %v967, %v455
        %v1480 = vmul.f32 %v968, %v456
        %v1481 = vmul.f32 %v969, %v457
        %v1482 = vmul.f32 %v970, %v458
        %v1483 = vmul.f32 %v971, %v459
        %v1484 = vmul.f32 %v972, %v460
        %v1485 = vmul.f32 %v973, %v461
        %v1486 = vmul.f32 %v974, %v462
        %v1487 = vmul.f32 %v975, %v463
        %v1488 = vmul.f32 %v976, %v464
        %v1489 = vmul.f32 %v977, %v465
        %v1490 = vmul.f32 %v978, %v466
        %v1491 = vmul.f32 %v979, %v467
        %v1492 = vmul.f32 %v980, %v468
        %v1493 = vmul.f32 %v981, %v469
        %v1494 = vmul.f32 %v982, %v470
        %v1495 = vmul.f32 %v983, %v471
        %v1496 = vmul.f32 %v984, %v472
        %v1497 = vmul.f32 %v985, %v473
        %v1498 = vmul.f32 %v986, %v474
        %v1499 = vmul.f32 %v987, %v475
        %v1500 = vmul.f32 %v988, %v476
        %v1501 = vmul.f32 %v989, %v477
        %v1502 = vmul.f32 %v990, %v478
        %v1503 = vmul.f32 %v991, %v479
        %v1504 = vmul.f32 %v992, %v480
        %v1505 = vmul.f32 %v993, %v481
        %v1506 = vmul.f32 %v994, %v482
        %v1507 = vmul.f32 %v995, %v483
        %v1508 = vmul.f32 %v996, %v484
        %v1509 = vmul.f32 %v997, %v485
        %v1510 = vmul.f32 %v998, %v486
        %v1511 = vmul.f32 %v999, %v487
        %v1512 = vmul.f32 %v1000, %v488
        %v1513 = vmul.f32 %v1001, %v489
        %v1514 = vmul.f32 %v1002, %v490
        %v1515 = vmul.f32 %v1003, %v491
        %v1516 = vmul.f32 %v1004, %v492
        %v1517 = vmul.f32 %v1005, %v493
        %v1518 = vmul.f32 %v1006, %v494
        %v1519 = vmul.f32 %v1007, %v495
        %v1520 = vmul.f32 %v1008, %v496
        %v1521 = vmul.f32 %v1009, %v497
        %v1522 = vmul.f32 %v1010, %v498
        %v1523 = vmul.f32 %v1011, %v499
        %v1524 = vmul.f32 %v1012, %v500
        %v1525 = vmul.f32 %v1013, %v501
        %v1526 = vmul.f32 %v1014, %v502
        %v1527 = vmul.f32 %v1015, %v503
        %v1528 = vmul.f32 %v1016, %v504
        %v1529 = vmul.f32 %v1017, %v505
        %v1530 = vmul.f32 %v1018, %v506
        %v1531 = vmul.f32 %v1019, %v507
        %v1532 = vmul.f32 %v1020, %v508
        %v1533 = vmul.f32 %v1021, %v509
        %v1534 = vmul.f32 %v1022, %v510
        %v1535 = vmul.f32 %v1023, %v511
        %v1536 = vmul.f32 %v1024, %v512
        %v1537 = vmul.f32 %v1025, %v513
        %v1538 = vmul.f32 %v1026, %v514
        %v1539 = vmul.f32 %v1027, %v515
        %v1540 = vmul.f32 %v1028, %v516
        %v1541 = vmul.f32 %v1029, %v517
        %v1542 = vmul.f32 %v1030, %v518
        %v1543 = vmul.f32 %v1031, %v519
        %v1544 = vmul.f32 %v1032, %v520
        %v1545 = vmul.f32 %v1033, %v521
        %v1546 = vmul.f32 %v1034, %v522
        %v1547 = vmul.f32 %v1035, %v523
        %v1548 = vmul.f32 %v1036, %v524
        %v1549 = vmul.f32 %v1037, %v525
        %v1550 = vmul.f32 %v1038, %v526
        %v1551 = vmul.f32 %v1039, %v527
        %v1552 = vmul.f32 %v1040, %v528
        %v1553 = vmul.f32 %v1041, %v529
        %v1554 = vmul.f32 %v1042, %v530
        %v1555 = vmul.f32 %v1043, %v531
        %v1556 = vmul.f32 %v1044, %v532
        %v1557 = vmul.f32 %v1045, %v533
        %v1558 = vmul.f32 %v1046, %v534
        %v1559 = vmul.f32 %v1047, %v535
        %v1560 = vmul.f32 %v1048, %v536
        %v1561 = vmul.f32 %v1049, %v537
        %v1562 = vmul.f32 %v1050, %v538
        %v1563 = vmul.f32 %v1051, %v539
        %v1564 = vmul.f32 %v1052, %v540
        %v1565 = vmul.f32 %v1053, %v541
        %v1566 = vmul.f32 %v1054, %v542
        %v1567 = vmul.f32 %v1055, %v543
        %v1568 = vmul.f32 %v1056, %v544
        %v1569 = vmul.f32 %v1057, %v545
        %v1570 = vmul.f32 %v1058, %v546
        %v1571 = vmul.f32 %v1059, %v547
        %v1572 = vmul.f32 %v1060, %v548
        %v1573 = vmul.f32 %v1061, %v549
        %v1574 = vmul.f32 %v1062, %v550
        %v1575 = vmul.f32 %v1063, %v551
        %v1576 = vmul.f32 %v1064, %v552
        %v1577 = vmul.f32 %v1065, %v553
        %v1578 = vmul.f32 %v1066, %v554
        %v1579 = vmul.f32 %v1067, %v555
        %v1580 = vmul.f32 %v1068, %v556
        %v1581 = vmul.f32 %v1069, %v557
        %v1582 = vmul.f32 %v1070, %v558
        %v1583 = vmul.f32 %v1071, %v559
        %v1584 = vmul.f32 %v1072, %v560
        %v1585 = vmul.f32 %v1073, %v561
        %v1586 = vmul.f32 %v1074, %v562
        %v1587 = vmul.f32 %v1075, %v563
        %v1588 = vmul.f32 %v1076, %v564
        %v1589 = vmul.f32 %v1077, %v565
        %v1590 = vmul.f32 %v1078, %v566
        %v1591 = vmul.f32 %v1079, %v567
        %v1592 = vmul.f32 %v1080, %v568
        %v1593 = vmul.f32 %v1081, %v569
        %v1594 = vmul.f32 %v1082, %v570
        %v1595 = vmul.f32 %v1083, %v571
        %v1596 = vmul.f32 %v1084, %v572
        %v1597 = vmul.f32 %v1085, %v573
        %v1598 = vmul.f32 %v1086, %v574
        %v1599 = vmul.f32 %v1087, %v575
        %v1600 = vmul.f32 %v1088, %v576
        %v1601 = vmul.f32 %v1089, %v577
        %v1602 = vmul.f32 %v1090, %v578
        %v1603 = vmul.f32 %v1091, %v579
        %v1604 = vmul.f32 %v1092, %v580
        %v1605 = vmul.f32 %v1093, %v581
        %v1606 = vmul.f32 %v1094, %v582
        %v1607 = vmul.f32 %v1095, %v583
        %v1608 = vmul.f32 %v1096, %v584
        %v1609 = vmul.f32 %v1097, %v585
        %v1610 = vmul.f32 %v1098, %v586
        %v1611 = vmul.f32 %v1099, %v587
        %v1612 = vmul.f32 %v1100, %v588
        %v1613 = vmul.f32 %v1101, %v589
        %v1614 = vmul.f32 %v1102, %v590
        %v1615 = vmul.f32 %v1103, %v591
        %v1616 = vmul.f32 %v1104, %v592
        %v1617 = vmul.f32 %v1105, %v593
        %v1618 = vmul.f32 %v1106, %v594
        %v1619 = vmul.f32 %v1107, %v595
        %v1620 = vmul.f32 %v1108, %v596
        %v1621 = vmul.f32 %v1109, %v597
        %v1622 = vmul.f32 %v1110, %v598
        %v1623 = vmul.f32 %v1111, %v599
        %v1624 = vmul.f32 %v1112, %v600
        %v1625 = vmul.f32 %v1113, %v601
        %v1626 = vmul.f32 %v1114, %v602
        %v1627 = vmul.f32 %v1115, %v603
        %v1628 = vmul.f32 %v1116, %v604
        %v1629 = vmul.f32 %v1117, %v605
        %v1630 = vmul.f32 %v1118, %v606
        %v1631 = vmul.f32 %v1119, %v607
        %v1632 = vmul.f32 %v1120, %v608
        %v1633 = vmul.f32 %v1121, %v609
        %v1634 = vmul.f32 %v1122, %v610
        %v1635 = vmul.f32 %v1123, %v611
        %v1636 = vmul.f32 %v1124, %v612
        %v1637 = vmul.f32 %v1125, %v613
        %v1638 = vmul.f32 %v1126, %v614
        %v1639 = vmul.f32 %v1127, %v615
        %v1640 = vmul.f32 %v1128, %v616
        %v1641 = vmul.f32 %v1129, %v617
        %v1642 = vmul.f32 %v1130, %v618
        %v1643 = vmul.f32 %v1131, %v619
        %v1644 = vmul.f32 %v1132, %v620
        %v1645 = vmul.f32 %v1133, %v621
        %v1646 = vmul.f32 %v1134, %v622
        %v1647 = vmul.f32 %v1135, %v623
        %v1648 = vmul.f32 %v1136, %v624
        %v1649 = vmul.f32 %v1137, %v625
        %v1650 = vmul.f32 %v1138, %v626
        %v1651 = vmul.f32 %v1139, %v627
        %v1652 = vmul.f32 %v1140, %v628
        %v1653 = vmul.f32 %v1141, %v629
        %v1654 = vmul.f32 %v1142, %v630
        %v1655 = vmul.f32 %v1143, %v631
        %v1656 = vmul.f32 %v1144, %v632
        %v1657 = vmul.f32 %v1145, %v633
        %v1658 = vmul.f32 %v1146, %v634
        %v1659 = vmul.f32 %v1147, %v635
        %v1660 = vmul.f32 %v1148, %v636
        %v1661 = vmul.f32 %v1149, %v637
        %v1662 = vmul.f32 %v1150, %v638
        %v1663 = vmul.f32 %v1151, %v639
        %v1664 = vmul.f32 %v1152, %v640
        %v1665 = vmul.f32 %v1153, %v641
        %v1666 = vmul.f32 %v1154, %v642
        %v1667 = vmul.f32 %v1155, %v643
        %v1668 = vmul.f32 %v1156, %v644
        %v1669 = vmul.f32 %v1157, %v645
        %v1670 = vmul.f32 %v1158, %v646
        %v1671 = vmul.f32 %v1159, %v647
        %v1672 = vmul.f32 %v1160, %v648
        %v1673 = vmul.f32 %v1161, %v649
        %v1674 = vmul.f32 %v1162, %v650
        %v1675 = vmul.f32 %v1163, %v651
        %v1676 = vmul.f32 %v1164, %v652
        %v1677 = vmul.f32 %v1165, %v653
        %v1678 = vmul.f32 %v1166, %v654
        %v1679 = vmul.f32 %v1167, %v655
        %v1680 = vmul.f32 %v1168, %v656
        %v1681 = vmul.f32 %v1169, %v657
        %v1682 = vmul.f32 %v1170, %v658
        %v1683 = vmul.f32 %v1171, %v659
        %v1684 = vmul.f32 %v1172, %v660
        %v1685 = vmul.f32 %v1173, %v661
        %v1686 = vmul.f32 %v1174, %v662
        %v1687 = vmul.f32 %v1175, %v663
        %v1688 = vmul.f32 %v1176, %v664
        %v1689 = vmul.f32 %v1177, %v665
        %v1690 = vmul.f32 %v1178, %v666
        %v1691 = vmul.f32 %v1179, %v667
        %v1692 = vmul.f32 %v1180, %v668
        %v1693 = vmul.f32 %v1181, %v669
        %v1694 = vmul.f32 %v1182, %v670
        %v1695 = vmul.f32 %v1183, %v671
        %v1696 = vmul.f32 %v1184, %v672
        %v1697 = vmul.f32 %v1185, %v673
        %v1698 = vmul.f32 %v1186, %v674
        %v1699 = vmul.f32 %v1187, %v675
        %v1700 = vmul.f32 %v1188, %v676
        %v1701 = vmul.f32 %v1189, %v677
        %v1702 = vmul.f32 %v1190, %v678
        %v1703 = vmul.f32 %v1191, %v679
        %v1704 = vmul.f32 %v1192, %v680
        %v1705 = vmul.f32 %v1193, %v681
        %v1706 = vmul.f32 %v1194, %v682
        %v1707 = vmul.f32 %v1195, %v683
        %v1708 = vmul.f32 %v1196, %v684
        %v1709 = vmul.f32 %v1197, %v685
        %v1710 = vmul.f32 %v1198, %v686
        %v1711 = vmul.f32 %v1199, %v687
        %v1712 = vmul.f32 %v1200, %v688
        %v1713 = vmul.f32 %v1201, %v689
        %v1714 = vmul.f32 %v1202, %v690
        %v1715 = vmul.f32 %v1203, %v691
        %v1716 = vmul.f32 %v1204, %v692
        %v1717 = vmul.f32 %v1205, %v693
        %v1718 = vmul.f32 %v1206, %v694
        %v1719 = vmul.f32 %v1207, %v695
        %v1720 = vmul.f32 %v1208, %v696
        %v1721 = vmul.f32 %v1209, %v697
        %v1722 = vmul.f32 %v1210, %v698
        %v1723 = vmul.f32 %v1211, %v699
        %v1724 = vmul.f32 %v1212, %v700
        %v1725 = vmul.f32 %v1213, %v701
        %v1726 = vmul.f32 %v1214, %v702
        %v1727 = vmul.f32 %v1215, %v703
        %v1728 = vmul.f32 %v1216, %v704
        %v1729 = vmul.f32 %v1217, %v705
        %v1730 = vmul.f32 %v1218, %v706
        %v1731 = vmul.f32 %v1219, %v707
        %v1732 = vmul.f32 %v1220, %v708
        %v1733 = vmul.f32 %v1221, %v709
        %v1734 = vmul.f32 %v1222, %v710
        %v1735 = vmul.f32 %v1223, %v711
        %v1736 = vmul.f32 %v1224, %v712
        %v1737 = vmul.f32 %v1225, %v713
        %v1738 = vmul.f32 %v1226, %v714
        %v1739 = vmul.f32 %v1227, %v715
        %v1740 = vmul.f32 %v1228, %v716
        %v1741 = vmul.f32 %v1229, %v717
        %v1742 = vmul.f32 %v1230, %v718
        %v1743 = vadd.f32 %v1231, %v207
        %v1744 = vadd.f32 %v1232, %v208
        %v1745 = vadd.f32 %v1233, %v209
        %v1746 = vadd.f32 %v1234, %v210
        %v1747 = vadd.f32 %v1235, %v211
        %v1748 = vadd.f32 %v1236, %v212
        %v1749 = vadd.f32 %v1237, %v213
        %v1750 = vadd.f32 %v1238, %v214
        %v1751 = vadd.f32 %v1239, %v215
        %v1752 = vadd.f32 %v1240, %v216
        %v1753 = vadd.f32 %v1241, %v217
        %v1754 = vadd.f32 %v1242, %v218
        %v1755 = vadd.f32 %v1243, %v219
        %v1756 = vadd.f32 %v1244, %v220
        %v1757 = vadd.f32 %v1245, %v221
        %v1758 = vadd.f32 %v1246, %v222
        %v1759 = vadd.f32 %v1247, %v223
        %v1760 = vadd.f32 %v1248, %v224
        %v1761 = vadd.f32 %v1249, %v225
        %v1762 = vadd.f32 %v1250, %v226
        %v1763 = vadd.f32 %v1251, %v227
        %v1764 = vadd.f32 %v1252, %v228
        %v1765 = vadd.f32 %v1253, %v229
        %v1766 = vadd.f32 %v1254, %v230
        %v1767 = vadd.f32 %v1255, %v231
        %v1768 = vadd.f32 %v1256, %v232
        %v1769 = vadd.f32 %v1257, %v233
        %v1770 = vadd.f32 %v1258, %v234
        %v1771 = vadd.f32 %v1259, %v235
        %v1772 = vadd.f32 %v1260, %v236
        %v1773 = vadd.f32 %v1261, %v237
        %v1774 = vadd.f32 %v1262, %v238
        %v1775 = vadd.f32 %v1263, %v239
        %v1776 = vadd.f32 %v1264, %v240
        %v1777 = vadd.f32 %v1265, %v241
        %v1778 = vadd.f32 %v1266, %v242
        %v1779 = vadd.f32 %v1267, %v243
        %v1780 = vadd.f32 %v1268, %v244
        %v1781 = vadd.f32 %v1269, %v245
        %v1782 = vadd.f32 %v1270, %v246
        %v1783 = vadd.f32 %v1271, %v247
        %v1784 = vadd.f32 %v1272, %v248
        %v1785 = vadd.f32 %v1273, %v249
        %v1786 = vadd.f32 %v1274, %v250
        %v1787 = vadd.f32 %v1275, %v251
        %v1788 = vadd.f32 %v1276, %v252
        %v1789 = vadd.f32 %v1277, %v253
        %v1790 = vadd.f32 %v1278, %v254
        %v1791 = vadd.f32 %v1279, %v255
        %v1792 = vadd.f32 %v1280, %v256
        %v1793 = vadd.f32 %v1281, %v257
        %v1794 = vadd.f32 %v1282, %v258
        %v1795 = vadd.f32 %v1283, %v259
        %v1796 = vadd.f32 %v1284, %v260
        %v1797 = vadd.f32 %v1285, %v261
        %v1798 = vadd.f32 %v1286, %v262
        %v1799 = vadd.f32 %v1287, %v263
        %v1800 = vadd.f32 %v1288, %v264
        %v1801 = vadd.f32 %v1289, %v265
        %v1802 = vadd.f32 %v1290, %v266
        %v1803 = vadd.f32 %v1291, %v267
        %v1804 = vadd.f32 %v1292, %v268
        %v1805 = vadd.f32 %v1293, %v269
        %v1806 = vadd.f32 %v1294, %v270
        %v1807 = vadd.f32 %v1295, %v271
        %v1808 = vadd.f32 %v1296, %v272
        %v1809 = vadd.f32 %v1297, %v273
        %v1810 = vadd.f32 %v1298, %v274
        %v1811 = vadd.f32 %v1299, %v275
        %v1812 = vadd.f32 %v1300, %v276
        %v1813 = vadd.f32 %v1301, %v277
        %v1814 = vadd.f32 %v1302, %v278
        %v1815 = vadd.f32 %v1303, %v279
        %v1816 = vadd.f32 %v1304, %v280
        %v1817 = vadd.f32 %v1305, %v281
        %v1818 = vadd.f32 %v1306, %v282
        %v1819 = vadd.f32 %v1307, %v283
        %v1820 = vadd.f32 %v1308, %v284
        %v1821 = vadd.f32 %v1309, %v285
        %v1822 = vadd.f32 %v1310, %v286
        %v1823 = vadd.f32 %v1311, %v287
        %v1824 = vadd.f32 %v1312, %v288
        %v1825 = vadd.f32 %v1313, %v289
        %v1826 = vadd.f32 %v1314, %v290
        %v1827 = vadd.f32 %v1315, %v291
        %v1828 = vadd.f32 %v1316, %v292
        %v1829 = vadd.f32 %v1317, %v293
        %v1830 = vadd.f32 %v1318, %v294
        %v1831 = vadd.f32 %v1319, %v295
        %v1832 = vadd.f32 %v1320, %v296
        %v1833 = vadd.f32 %v1321, %v297
        %v1834 = vadd.f32 %v1322, %v298
        %v1835 = vadd.f32 %v1323, %v299
        %v1836 = vadd.f32 %v1324, %v300
        %v1837 = vadd.f32 %v1325, %v301
        %v1838 = vadd.f32 %v1326, %v302
        %v1839 = vadd.f32 %v1327, %v303
        %v1840 = vadd.f32 %v1328, %v304
        %v1841 = vadd.f32 %v1329, %v305
        %v1842 = vadd.f32 %v1330, %v306
        %v1843 = vadd.f32 %v1331, %v307
        %v1844 = vadd.f32 %v1332, %v308
        %v1845 = vadd.f32 %v1333, %v309
        %v1846 = vadd.f32 %v1334, %v310
        %v1847 = vadd.f32 %v1335, %v311
        %v1848 = vadd.f32 %v1336, %v312
        %v1849 = vadd.f32 %v1337, %v313
        %v1850 = vadd.f32 %v1338, %v314
        %v1851 = vadd.f32 %v1339, %v315
        %v1852 = vadd.f32 %v1340, %v316
        %v1853 = vadd.f32 %v1341, %v317
        %v1854 = vadd.f32 %v1342, %v318
        %v1855 = vadd.f32 %v1343, %v319
        %v1856 = vadd.f32 %v1344, %v320
        %v1857 = vadd.f32 %v1345, %v321
        %v1858 = vadd.f32 %v1346, %v322
        %v1859 = vadd.f32 %v1347, %v323
        %v1860 = vadd.f32 %v1348, %v324
        %v1861 = vadd.f32 %v1349, %v325
        %v1862 = vadd.f32 %v1350, %v326
        %v1863 = vadd.f32 %v1351, %v327
        %v1864 = vadd.f32 %v1352, %v328
        %v1865 = vadd.f32 %v1353, %v329
        %v1866 = vadd.f32 %v1354, %v330
        %v1867 = vadd.f32 %v1355, %v331
        %v1868 = vadd.f32 %v1356, %v332
        %v1869 = vadd.f32 %v1357, %v333
        %v1870 = vadd.f32 %v1358, %v334
        %v1871 = vadd.f32 %v1359, %v335
        %v1872 = vadd.f32 %v1360, %v336
        %v1873 = vadd.f32 %v1361, %v337
        %v1874 = vadd.f32 %v1362, %v338
        %v1875 = vadd.f32 %v1363, %v339
        %v1876 = vadd.f32 %v1364, %v340
        %v1877 = vadd.f32 %v1365, %v341
        %v1878 = vadd.f32 %v1366, %v342
        %v1879 = vadd.f32 %v1367, %v343
        %v1880 = vadd.f32 %v1368, %v344
        %v1881 = vadd.f32 %v1369, %v345
        %v1882 = vadd.f32 %v1370, %v346
        %v1883 = vadd.f32 %v1371, %v347
        %v1884 = vadd.f32 %v1372, %v348
        %v1885 = vadd.f32 %v1373, %v349
        %v1886 = vadd.f32 %v1374, %v350
        %v1887 = vadd.f32 %v1375, %v351
        %v1888 = vadd.f32 %v1376, %v352
        %v1889 = vadd.f32 %v1377, %v353
        %v1890 = vadd.f32 %v1378, %v354
        %v1891 = vadd.f32 %v1379, %v355
        %v1892 = vadd.f32 %v1380, %v356
        %v1893 = vadd.f32 %v1381, %v357
        %v1894 = vadd.f32 %v1382, %v358
        %v1895 = vadd.f32 %v1383, %v359
        %v1896 = vadd.f32 %v1384, %v360
        %v1897 = vadd.f32 %v1385, %v361
        %v1898 = vadd.f32 %v1386, %v362
        %v1899 = vadd.f32 %v1387, %v363
        %v1900 = vadd.f32 %v1388, %v364
        %v1901 = vadd.f32 %v1389, %v365
        %v1902 = vadd.f32 %v1390, %v366
        %v1903 = vadd.f32 %v1391, %v367
        %v1904 = vadd.f32 %v1392, %v368
        %v1905 = vadd.f32 %v1393, %v369
        %v1906 = vadd.f32 %v1394, %v370
        %v1907 = vadd.f32 %v1395, %v371
        %v1908 = vadd.f32 %v1396, %v372
        %v1909 = vadd.f32 %v1397, %v373
        %v1910 = vadd.f32 %v1398, %v374
        %v1911 = vadd.f32 %v1399, %v375
        %v1912 = vadd.f32 %v1400, %v376
        %v1913 = vadd.f32 %v1401, %v377
        %v1914 = vadd.f32 %v1402, %v378
        %v1915 = vadd.f32 %v1403, %v379
        %v1916 = vadd.f32 %v1404, %v380
        %v1917 = vadd.f32 %v1405, %v381
        %v1918 = vadd.f32 %v1406, %v382
        %v1919 = vadd.f32 %v1407, %v383
        %v1920 = vadd.f32 %v1408, %v384
        %v1921 = vadd.f32 %v1409, %v385
        %v1922 = vadd.f32 %v1410, %v386
        %v1923 = vadd.f32 %v1411, %v387
        %v1924 = vadd.f32 %v1412, %v388
        %v1925 = vadd.f32 %v1413, %v389
        %v1926 = vadd.f32 %v1414, %v390
        %v1927 = vadd.f32 %v1415, %v391
        %v1928 = vadd.f32 %v1416, %v392
        %v1929 = vadd.f32 %v1417, %v393
        %v1930 = vadd.f32 %v1418, %v394
        %v1931 = vadd.f32 %v1419, %v395
        %v1932 = vadd.f32 %v1420, %v396
        %v1933 = vadd.f32 %v1421, %v397
        %v1934 = vadd.f32 %v1422, %v398
        %v1935 = vadd.f32 %v1423, %v399
        %v1936 = vadd.f32 %v1424, %v400
        %v1937 = vadd.f32 %v1425, %v401
        %v1938 = vadd.f32 %v1426, %v402
        %v1939 = vadd.f32 %v1427, %v403
        %v1940 = vadd.f32 %v1428, %v404
        %v1941 = vadd.f32 %v1429, %v405
        %v1942 = vadd.f32 %v1430, %v406
        %v1943 = vadd.f32 %v1431, %v407
        %v1944 = vadd.f32 %v1432, %v408
        %v1945 = vadd.f32 %v1433, %v409
        %v1946 = vadd.f32 %v1434, %v410
        %v1947 = vadd.f32 %v1435, %v411
        %v1948 = vadd.f32 %v1436, %v412
        %v1949 = vadd.f32 %v1437, %v413
        %v1950 = vadd.f32 %v1438, %v414
        %v1951 = vadd.f32 %v1439, %v415
        %v1952 = vadd.f32 %v1440, %v416
        %v1953 = vadd.f32 %v1441, %v417
        %v1954 = vadd.f32 %v1442, %v418
        %v1955 = vadd.f32 %v1443, %v419
        %v1956 = vadd.f32 %v1444, %v420
        %v1957 = vadd.f32 %v1445, %v421
        %v1958 = vadd.f32 %v1446, %v422
        %v1959 = vadd.f32 %v1447, %v423
        %v1960 = vadd.f32 %v1448, %v424
        %v1961 = vadd.f32 %v1449, %v425
        %v1962 = vadd.f32 %v1450, %v426
        %v1963 = vadd.f32 %v1451, %v427
        %v1964 = vadd.f32 %v1452, %v428
        %v1965 = vadd.f32 %v1453, %v429
        %v1966 = vadd.f32 %v1454, %v430
        %v1967 = vadd.f32 %v1455, %v431
        %v1968 = vadd.f32 %v1456, %v432
        %v1969 = vadd.f32 %v1457, %v433
        %v1970 = vadd.f32 %v1458, %v434
        %v1971 = vadd.f32 %v1459, %v435
        %v1972 = vadd.f32 %v1460, %v436
        %v1973 = vadd.f32 %v1461, %v437
        %v1974 = vadd.f32 %v1462, %v438
        %v1975 = vadd.f32 %v1463, %v439
        %v1976 = vadd.f32 %v1464, %v440
        %v1977 = vadd.f32 %v1465, %v441
        %v1978 = vadd.f32 %v1466, %v442
        %v1979 = vadd.f32 %v1467, %v443
        %v1980 = vadd.f32 %v1468, %v444
        %v1981 = vadd.f32 %v1469, %v445
        %v1982 = vadd.f32 %v1470, %v446
        %v1983 = vadd.f32 %v1471, %v447
        %v1984 = vadd.f32 %v1472, %v448
        %v1985 = vadd.f32 %v1473, %v449
        %v1986 = vadd.f32 %v1474, %v450
        %v1987 = vadd.f32 %v1475, %v451
        %v1988 = vadd.f32 %v1476, %v452
        %v1989 = vadd.f32 %v1477, %v453
        %v1990 = vadd.f32 %v1478, %v454
        %v1991 = vadd.f32 %v1479, %v455
        %v1992 = vadd.f32 %v1480, %v456
        %v1993 = vadd.f32 %v1481, %v457
        %v1994 = vadd.f32 %v1482, %v458
        %v1995 = vadd.f32 %v1483, %v459
        %v1996 = vadd.f32 %v1484, %v460
        %v1997 = vadd.f32 %v1485, %v461
        %v1998 = vadd.f32 %v1486, %v462
        %v1999 = vadd.f32 %v1487, %v463
        %v2000 = vadd.f32 %v1488, %v464
        %v2001 = vadd.f32 %v1489, %v465
        %v2002 = vadd.f32 %v1490, %v466
        %v2003 = vadd.f32 %v1491, %v467
        %v2004 = vadd.f32 %v1492, %v468
        %v2005 = vadd.f32 %v1493, %v469
        %v2006 = vadd.f32 %v1494, %v470
        %v2007 = vadd.f32 %v1495, %v471
        %v2008 = vadd.f32 %v1496, %v472
        %v2009 = vadd.f32 %v1497, %v473
        %v2010 = vadd.f32 %v1498, %v474
        %v2011 = vadd.f32 %v1499, %v475
        %v2012 = vadd.f32 %v1500, %v476
        %v2013 = vadd.f32 %v1501, %v477
        %v2014 = vadd.f32 %v1502, %v478
        %v2015 = vadd.f32 %v1503, %v479
        %v2016 = vadd.f32 %v1504, %v480
        %v2017 = vadd.f32 %v1505, %v481
        %v2018 = vadd.f32 %v1506, %v482
        %v2019 = vadd.f32 %v1507, %v483
        %v2020 = vadd.f32 %v1508, %v484
        %v2021 = vadd.f32 %v1509, %v485
        %v2022 = vadd.f32 %v1510, %v486
        %v2023 = vadd.f32 %v1511, %v487
        %v2024 = vadd.f32 %v1512, %v488
        %v2025 = vadd.f32 %v1513, %v489
        %v2026 = vadd.f32 %v1514, %v490
        %v2027 = vadd.f32 %v1515, %v491
        %v2028 = vadd.f32 %v1516, %v492
        %v2029 = vadd.f32 %v1517, %v493
        %v2030 = vadd.f32 %v1518, %v494
        %v2031 = vadd.f32 %v1519, %v495
        %v2032 = vadd.f32 %v1520, %v496
        %v2033 = vadd.f32 %v1521, %v497
        %v2034 = vadd.f32 %v1522, %v498
        %v2035 = vadd.f32 %v1523, %v499
        %v2036 = vadd.f32 %v1524, %v500
        %v2037 = vadd.f32 %v1525, %v501
        %v2038 = vadd.f32 %v1526, %v502
        %v2039 = vadd.f32 %v1527, %v503
        %v2040 = vadd.f32 %v1528, %v504
        %v2041 = vadd.f32 %v1529, %v505
        %v2042 = vadd.f32 %v1530, %v506
        %v2043 = vadd.f32 %v1531, %v507
        %v2044 = vadd.f32 %v1532, %v508
        %v2045 = vadd.f32 %v1533, %v509
        %v2046 = vadd.f32 %v1534, %v510
        %v2047 = vadd.f32 %v1535, %v511
        %v2048 = vadd.f32 %v1536, %v512
        %v2049 = vadd.f32 %v1537, %v513
        %v2050 = vadd.f32 %v1538, %v514
        %v2051 = vadd.f32 %v1539, %v515
        %v2052 = vadd.f32 %v1540, %v516
        %v2053 = vadd.f32 %v1541, %v517
        %v2054 = vadd.f32 %v1542, %v518
        %v2055 = vadd.f32 %v1543, %v519
        %v2056 = vadd.f32 %v1544, %v520
        %v2057 = vadd.f32 %v1545, %v521
        %v2058 = vadd.f32 %v1546, %v522
        %v2059 = vadd.f32 %v1547, %v523
        %v2060 = vadd.f32 %v1548, %v524
        %v2061 = vadd.f32 %v1549, %v525
        %v2062 = vadd.f32 %v1550, %v526
        %v2063 = vadd.f32 %v1551, %v527
        %v2064 = vadd.f32 %v1552, %v528
        %v2065 = vadd.f32 %v1553, %v529
        %v2066 = vadd.f32 %v1554, %v530
        %v2067 = vadd.f32 %v1555, %v531
        %v2068 = vadd.f32 %v1556, %v532
        %v2069 = vadd.f32 %v1557, %v533
        %v2070 = vadd.f32 %v1558, %v534
        %v2071 = vadd.f32 %v1559, %v535
        %v2072 = vadd.f32 %v1560, %v536
        %v2073 = vadd.f32 %v1561, %v537
        %v2074 = vadd.f32 %v1562, %v538
        %v2075 = vadd.f32 %v1563, %v539
        %v2076 = vadd.f32 %v1564, %v540
        %v2077 = vadd.f32 %v1565, %v541
        %v2078 = vadd.f32 %v1566, %v542
        %v2079 = vadd.f32 %v1567, %v543
        %v2080 = vadd.f32 %v1568, %v544
        %v2081 = vadd.f32 %v1569, %v545
        %v2082 = vadd.f32 %v1570, %v546
        %v2083 = vadd.f32 %v1571, %v547
        %v2084 = vadd.f32 %v1572, %v548
        %v2085 = vadd.f32 %v1573, %v549
        %v2086 = vadd.f32 %v1574, %v550
        %v2087 = vadd.f32 %v1575, %v551
        %v2088 = vadd.f32 %v1576, %v552
        %v2089 = vadd.f32 %v1577, %v553
        %v2090 = vadd.f32 %v1578, %v554
        %v2091 = vadd.f32 %v1579, %v555
        %v2092 = vadd.f32 %v1580, %v556
        %v2093 = vadd.f32 %v1581, %v557
        %v2094 = vadd.f32 %v1582, %v558
        %v2095 = vadd.f32 %v1583, %v559
        %v2096 = vadd.f32 %v1584, %v560
        %v2097 = vadd.f32 %v1585, %v561
        %v2098 = vadd.f32 %v1586, %v562
        %v2099 = vadd.f32 %v1587, %v563
        %v2100 = vadd.f32 %v1588, %v564
        %v2101 = vadd.f32 %v1589, %v565
        %v2102 = vadd.f32 %v1590, %v566
        %v2103 = vadd.f32 %v1591, %v567
        %v2104 = vadd.f32 %v1592, %v568
        %v2105 = vadd.f32 %v1593, %v569
        %v2106 = vadd.f32 %v1594, %v570
        %v2107 = vadd.f32 %v1595, %v571
        %v2108 = vadd.f32 %v1596, %v572
        %v2109 = vadd.f32 %v1597, %v573
        %v2110 = vadd.f32 %v1598, %v574
        %v2111 = vadd.f32 %v1599, %v575
        %v2112 = vadd.f32 %v1600, %v576
        %v2113 = vadd.f32 %v1601, %v577
        %v2114 = vadd.f32 %v1602, %v578
        %v2115 = vadd.f32 %v1603, %v579
        %v2116 = vadd.f32 %v1604, %v580
        %v2117 = vadd.f32 %v1605, %v581
        %v2118 = vadd.f32 %v1606, %v582
        %v2119 = vadd.f32 %v1607, %v583
        %v2120 = vadd.f32 %v1608, %v584
        %v2121 = vadd.f32 %v1609, %v585
        %v2122 = vadd.f32 %v1610, %v586
        %v2123 = vadd.f32 %v1611, %v587
        %v2124 = vadd.f32 %v1612, %v588
        %v2125 = vadd.f32 %v1613, %v589
        %v2126 = vadd.f32 %v1614, %v590
        %v2127 = vadd.f32 %v1615, %v591
        %v2128 = vadd.f32 %v1616, %v592
        %v2129 = vadd.f32 %v1617, %v593
        %v2130 = vadd.f32 %v1618, %v594
        %v2131 = vadd.f32 %v1619, %v595
        %v2132 = vadd.f32 %v1620, %v596
        %v2133 = vadd.f32 %v1621, %v597
        %v2134 = vadd.f32 %v1622, %v598
        %v2135 = vadd.f32 %v1623, %v599
        %v2136 = vadd.f32 %v1624, %v600
        %v2137 = vadd.f32 %v1625, %v601
        %v2138 = vadd.f32 %v1626, %v602
        %v2139 = vadd.f32 %v1627, %v603
        %v2140 = vadd.f32 %v1628, %v604
        %v2141 = vadd.f32 %v1629, %v605
        %v2142 = vadd.f32 %v1630, %v606
        %v2143 = vadd.f32 %v1631, %v607
        %v2144 = vadd.f32 %v1632, %v608
        %v2145 = vadd.f32 %v1633, %v609
        %v2146 = vadd.f32 %v1634, %v610
        %v2147 = vadd.f32 %v1635, %v611
        %v2148 = vadd.f32 %v1636, %v612
        %v2149 = vadd.f32 %v1637, %v613
        %v2150 = vadd.f32 %v1638, %v614
        %v2151 = vadd.f32 %v1639, %v615
        %v2152 = vadd.f32 %v1640, %v616
        %v2153 = vadd.f32 %v1641, %v617
        %v2154 = vadd.f32 %v1642, %v618
        %v2155 = vadd.f32 %v1643, %v619
        %v2156 = vadd.f32 %v1644, %v620
        %v2157 = vadd.f32 %v1645, %v621
        %v2158 = vadd.f32 %v1646, %v622
        %v2159 = vadd.f32 %v1647, %v623
        %v2160 = vadd.f32 %v1648, %v624
        %v2161 = vadd.f32 %v1649, %v625
        %v2162 = vadd.f32 %v1650, %v626
        %v2163 = vadd.f32 %v1651, %v627
        %v2164 = vadd.f32 %v1652, %v628
        %v2165 = vadd.f32 %v1653, %v629
        %v2166 = vadd.f32 %v1654, %v630
        %v2167 = vadd.f32 %v1655, %v631
        %v2168 = vadd.f32 %v1656, %v632
        %v2169 = vadd.f32 %v1657, %v633
        %v2170 = vadd.f32 %v1658, %v634
        %v2171 = vadd.f32 %v1659, %v635
        %v2172 = vadd.f32 %v1660, %v636
        %v2173 = vadd.f32 %v1661, %v637
        %v2174 = vadd.f32 %v1662, %v638
        %v2175 = vadd.f32 %v1663, %v639
        %v2176 = vadd.f32 %v1664, %v640
        %v2177 = vadd.f32 %v1665, %v641
        %v2178 = vadd.f32 %v1666, %v642
        %v2179 = vadd.f32 %v1667, %v643
        %v2180 = vadd.f32 %v1668, %v644
        %v2181 = vadd.f32 %v1669, %v645
        %v2182 = vadd.f32 %v1670, %v646
        %v2183 = vadd.f32 %v1671, %v647
        %v2184 = vadd.f32 %v1672, %v648
        %v2185 = vadd.f32 %v1673, %v649
        %v2186 = vadd.f32 %v1674, %v650
        %v2187 = vadd.f32 %v1675, %v651
        %v2188 = vadd.f32 %v1676, %v652
        %v2189 = vadd.f32 %v1677, %v653
        %v2190 = vadd.f32 %v1678, %v654
        %v2191 = vadd.f32 %v1679, %v655
        %v2192 = vadd.f32 %v1680, %v656
        %v2193 = vadd.f32 %v1681, %v657
        %v2194 = vadd.f32 %v1682, %v658
        %v2195 = vadd.f32 %v1683, %v659
        %v2196 = vadd.f32 %v1684, %v660
        %v2197 = vadd.f32 %v1685, %v661
        %v2198 = vadd.f32 %v1686, %v662
        %v2199 = vadd.f32 %v1687, %v663
        %v2200 = vadd.f32 %v1688, %v664
        %v2201 = vadd.f32 %v1689, %v665
        %v2202 = vadd.f32 %v1690, %v666
        %v2203 = vadd.f32 %v1691, %v667
        %v2204 = vadd.f32 %v1692, %v668
        %v2205 = vadd.f32 %v1693, %v669
        %v2206 = vadd.f32 %v1694, %v670
        %v2207 = vadd.f32 %v1695, %v671
        %v2208 = vadd.f32 %v1696, %v672
        %v2209 = vadd.f32 %v1697, %v673
        %v2210 = vadd.f32 %v1698, %v674
        %v2211 = vadd.f32 %v1699, %v675
        %v2212 = vadd.f32 %v1700, %v676
        %v2213 = vadd.f32 %v1701, %v677
        %v2214 = vadd.f32 %v1702, %v678
        %v2215 = vadd.f32 %v1703, %v679
        %v2216 = vadd.f32 %v1704, %v680
        %v2217 = vadd.f32 %v1705, %v681
        %v2218 = vadd.f32 %v1706, %v682
        %v2219 = vadd.f32 %v1707, %v683
        %v2220 = vadd.f32 %v1708, %v684
        %v2221 = vadd.f32 %v1709, %v685
        %v2222 = vadd.f32 %v1710, %v686
        %v2223 = vadd.f32 %v1711, %v687
        %v2224 = vadd.f32 %v1712, %v688
        %v2225 = vadd.f32 %v1713, %v689
        %v2226 = vadd.f32 %v1714, %v690
        %v2227 = vadd.f32 %v1715, %v691
        %v2228 = vadd.f32 %v1716, %v692
        %v2229 = vadd.f32 %v1717, %v693
        %v2230 = vadd.f32 %v1718, %v694
        %v2231 = vadd.f32 %v1719, %v695
        %v2232 = vadd.f32 %v1720, %v696
        %v2233 = vadd.f32 %v1721, %v697
        %v2234 = vadd.f32 %v1722, %v698
        %v2235 = vadd.f32 %v1723, %v699
        %v2236 = vadd.f32 %v1724, %v700
        %v2237 = vadd.f32 %v1725, %v701
        %v2238 = vadd.f32 %v1726, %v702
        %v2239 = vadd.f32 %v1727, %v703
        %v2240 = vadd.f32 %v1728, %v704
        %v2241 = vadd.f32 %v1729, %v705
        %v2242 = vadd.f32 %v1730, %v706
        %v2243 = vadd.f32 %v1731, %v707
        %v2244 = vadd.f32 %v1732, %v708
        %v2245 = vadd.f32 %v1733, %v709
        %v2246 = vadd.f32 %v1734, %v710
        %v2247 = vadd.f32 %v1735, %v711
        %v2248 = vadd.f32 %v1736, %v712
        %v2249 = vadd.f32 %v1737, %v713
        %v2250 = vadd.f32 %v1738, %v714
        %v2251 = vadd.f32 %v1739, %v715
        %v2252 = vadd.f32 %v1740, %v716
        %v2253 = vadd.f32 %v1741, %v717
        %v2254 = vadd.f32 %v1742, %v718
        %2255 = vst [vmem:[%s203] sm:$0xff] %v1743
        %2256 = vst [vmem:[%s203 + $0x8] sm:$0xff] %v1744
        %2257 = vst [vmem:[%s203 + $0x10] sm:$0xff] %v1745
        %2258 = vst [vmem:[%s203 + $0x18] sm:$0xff] %v1746
        %2259 = vst [vmem:[%s203 + $0x20] sm:$0xff] %v1747
        %2260 = vst [vmem:[%s203 + $0x28] sm:$0xff] %v1748
        %2261 = vst [vmem:[%s203 + $0x30] sm:$0xff] %v1749
        %2262 = vst [vmem:[%s203 + $0x38] sm:$0xff] %v1750
        %2263 = vst [vmem:[%s203 + $0x40] sm:$0xff] %v1751
        %2264 = vst [vmem:[%s203 + $0x48] sm:$0xff] %v1752
        %2265 = vst [vmem:[%s203 + $0x50] sm:$0xff] %v1753
        %2266 = vst [vmem:[%s203 + $0x58] sm:$0xff] %v1754
        %2267 = vst [vmem:[%s203 + $0x60] sm:$0xff] %v1755
        %2268 = vst [vmem:[%s203 + $0x68] sm:$0xff] %v1756
        %2269 = vst [vmem:[%s203 + $0x70] sm:$0xff] %v1757
        %2270 = vst [vmem:[%s203 + $0x78] sm:$0xff] %v1758
        %2271 = vst [vmem:[%s203 + $0x80] sm:$0xff] %v1759
        %2272 = vst [vmem:[%s203 + $0x88] sm:$0xff] %v1760
        %2273 = vst [vmem:[%s203 + $0x90] sm:$0xff] %v1761
        %2274 = vst [vmem:[%s203 + $0x98] sm:$0xff] %v1762
        %2275 = vst [vmem:[%s203 + $0xa0] sm:$0xff] %v1763
        %2276 = vst [vmem:[%s203 + $0xa8] sm:$0xff] %v1764
        %2277 = vst [vmem:[%s203 + $0xb0] sm:$0xff] %v1765
        %2278 = vst [vmem:[%s203 + $0xb8] sm:$0xff] %v1766
        %2279 = vst [vmem:[%s203 + $0xc0] sm:$0xff] %v1767
        %2280 = vst [vmem:[%s203 + $0xc8] sm:$0xff] %v1768
        %2281 = vst [vmem:[%s203 + $0xd0] sm:$0xff] %v1769
        %2282 = vst [vmem:[%s203 + $0xd8] sm:$0xff] %v1770
        %2283 = vst [vmem:[%s203 + $0xe0] sm:$0xff] %v1771
        %2284 = vst [vmem:[%s203 + $0xe8] sm:$0xff] %v1772
        %2285 = vst [vmem:[%s203 + $0xf0] sm:$0xff] %v1773
        %2286 = vst [vmem:[%s203 + $0xf8] sm:$0xff] %v1774
        %2287 = vst [vmem:[%s203 + $0x100] sm:$0xff] %v1775
        %2288 = vst [vmem:[%s203 + $0x108] sm:$0xff] %v1776
        %2289 = vst [vmem:[%s203 + $0x110] sm:$0xff] %v1777
        %2290 = vst [vmem:[%s203 + $0x118] sm:$0xff] %v1778
        %2291 = vst [vmem:[%s203 + $0x120] sm:$0xff] %v1779
        %2292 = vst [vmem:[%s203 + $0x128] sm:$0xff] %v1780
        %2293 = vst [vmem:[%s203 + $0x130] sm:$0xff] %v1781
        %2294 = vst [vmem:[%s203 + $0x138] sm:$0xff] %v1782
        %2295 = vst [vmem:[%s203 + $0x140] sm:$0xff] %v1783
        %2296 = vst [vmem:[%s203 + $0x148] sm:$0xff] %v1784
        %2297 = vst [vmem:[%s203 + $0x150] sm:$0xff] %v1785
        %2298 = vst [vmem:[%s203 + $0x158] sm:$0xff] %v1786
        %2299 = vst [vmem:[%s203 + $0x160] sm:$0xff] %v1787
        %2300 = vst [vmem:[%s203 + $0x168] sm:$0xff] %v1788
        %2301 = vst [vmem:[%s203 + $0x170] sm:$0xff] %v1789
        %2302 = vst [vmem:[%s203 + $0x178] sm:$0xff] %v1790
        %2303 = vst [vmem:[%s203 + $0x180] sm:$0xff] %v1791
        %2304 = vst [vmem:[%s203 + $0x188] sm:$0xff] %v1792
        %2305 = vst [vmem:[%s203 + $0x190] sm:$0xff] %v1793
        %2306 = vst [vmem:[%s203 + $0x198] sm:$0xff] %v1794
        %2307 = vst [vmem:[%s203 + $0x1a0] sm:$0xff] %v1795
        %2308 = vst [vmem:[%s203 + $0x1a8] sm:$0xff] %v1796
        %2309 = vst [vmem:[%s203 + $0x1b0] sm:$0xff] %v1797
        %2310 = vst [vmem:[%s203 + $0x1b8] sm:$0xff] %v1798
        %2311 = vst [vmem:[%s203 + $0x1c0] sm:$0xff] %v1799
        %2312 = vst [vmem:[%s203 + $0x1c8] sm:$0xff] %v1800
        %2313 = vst [vmem:[%s203 + $0x1d0] sm:$0xff] %v1801
        %2314 = vst [vmem:[%s203 + $0x1d8] sm:$0xff] %v1802
        %2315 = vst [vmem:[%s203 + $0x1e0] sm:$0xff] %v1803
        %2316 = vst [vmem:[%s203 + $0x1e8] sm:$0xff] %v1804
        %2317 = vst [vmem:[%s203 + $0x1f0] sm:$0xff] %v1805
        %2318 = vst [vmem:[%s203 + $0x1f8] sm:$0xff] %v1806
        %2319 = vst [vmem:[%s203 + $0x200] sm:$0xff] %v1807
        %2320 = vst [vmem:[%s203 + $0x208] sm:$0xff] %v1808
        %2321 = vst [vmem:[%s203 + $0x210] sm:$0xff] %v1809
        %2322 = vst [vmem:[%s203 + $0x218] sm:$0xff] %v1810
        %2323 = vst [vmem:[%s203 + $0x220] sm:$0xff] %v1811
        %2324 = vst [vmem:[%s203 + $0x228] sm:$0xff] %v1812
        %2325 = vst [vmem:[%s203 + $0x230] sm:$0xff] %v1813
        %2326 = vst [vmem:[%s203 + $0x238] sm:$0xff] %v1814
        %2327 = vst [vmem:[%s203 + $0x240] sm:$0xff] %v1815
        %2328 = vst [vmem:[%s203 + $0x248] sm:$0xff] %v1816
        %2329 = vst [vmem:[%s203 + $0x250] sm:$0xff] %v1817
        %2330 = vst [vmem:[%s203 + $0x258] sm:$0xff] %v1818
        %2331 = vst [vmem:[%s203 + $0x260] sm:$0xff] %v1819
        %2332 = vst [vmem:[%s203 + $0x268] sm:$0xff] %v1820
        %2333 = vst [vmem:[%s203 + $0x270] sm:$0xff] %v1821
        %2334 = vst [vmem:[%s203 + $0x278] sm:$0xff] %v1822
        %2335 = vst [vmem:[%s203 + $0x280] sm:$0xff] %v1823
        %2336 = vst [vmem:[%s203 + $0x288] sm:$0xff] %v1824
        %2337 = vst [vmem:[%s203 + $0x290] sm:$0xff] %v1825
        %2338 = vst [vmem:[%s203 + $0x298] sm:$0xff] %v1826
        %2339 = vst [vmem:[%s203 + $0x2a0] sm:$0xff] %v1827
        %2340 = vst [vmem:[%s203 + $0x2a8] sm:$0xff] %v1828
        %2341 = vst [vmem:[%s203 + $0x2b0] sm:$0xff] %v1829
        %2342 = vst [vmem:[%s203 + $0x2b8] sm:$0xff] %v1830
        %2343 = vst [vmem:[%s203 + $0x2c0] sm:$0xff] %v1831
        %2344 = vst [vmem:[%s203 + $0x2c8] sm:$0xff] %v1832
        %2345 = vst [vmem:[%s203 + $0x2d0] sm:$0xff] %v1833
        %2346 = vst [vmem:[%s203 + $0x2d8] sm:$0xff] %v1834
        %2347 = vst [vmem:[%s203 + $0x2e0] sm:$0xff] %v1835
        %2348 = vst [vmem:[%s203 + $0x2e8] sm:$0xff] %v1836
        %2349 = vst [vmem:[%s203 + $0x2f0] sm:$0xff] %v1837
        %2350 = vst [vmem:[%s203 + $0x2f8] sm:$0xff] %v1838
        %2351 = vst [vmem:[%s203 + $0x300] sm:$0xff] %v1839
        %2352 = vst [vmem:[%s203 + $0x308] sm:$0xff] %v1840
        %2353 = vst [vmem:[%s203 + $0x310] sm:$0xff] %v1841
        %2354 = vst [vmem:[%s203 + $0x318] sm:$0xff] %v1842
        %2355 = vst [vmem:[%s203 + $0x320] sm:$0xff] %v1843
        %2356 = vst [vmem:[%s203 + $0x328] sm:$0xff] %v1844
        %2357 = vst [vmem:[%s203 + $0x330] sm:$0xff] %v1845
        %2358 = vst [vmem:[%s203 + $0x338] sm:$0xff] %v1846
        %2359 = vst [vmem:[%s203 + $0x340] sm:$0xff] %v1847
        %2360 = vst [vmem:[%s203 + $0x348] sm:$0xff] %v1848
        %2361 = vst [vmem:[%s203 + $0x350] sm:$0xff] %v1849
        %2362 = vst [vmem:[%s203 + $0x358] sm:$0xff] %v1850
        %2363 = vst [vmem:[%s203 + $0x360] sm:$0xff] %v1851
        %2364 = vst [vmem:[%s203 + $0x368] sm:$0xff] %v1852
        %2365 = vst [vmem:[%s203 + $0x370] sm:$0xff] %v1853
        %2366 = vst [vmem:[%s203 + $0x378] sm:$0xff] %v1854
        %2367 = vst [vmem:[%s203 + $0x380] sm:$0xff] %v1855
        %2368 = vst [vmem:[%s203 + $0x388] sm:$0xff] %v1856
        %2369 = vst [vmem:[%s203 + $0x390] sm:$0xff] %v1857
        %2370 = vst [vmem:[%s203 + $0x398] sm:$0xff] %v1858
        %2371 = vst [vmem:[%s203 + $0x3a0] sm:$0xff] %v1859
        %2372 = vst [vmem:[%s203 + $0x3a8] sm:$0xff] %v1860
        %2373 = vst [vmem:[%s203 + $0x3b0] sm:$0xff] %v1861
        %2374 = vst [vmem:[%s203 + $0x3b8] sm:$0xff] %v1862
        %2375 = vst [vmem:[%s203 + $0x3c0] sm:$0xff] %v1863
        %2376 = vst [vmem:[%s203 + $0x3c8] sm:$0xff] %v1864
        %2377 = vst [vmem:[%s203 + $0x3d0] sm:$0xff] %v1865
        %2378 = vst [vmem:[%s203 + $0x3d8] sm:$0xff] %v1866
        %2379 = vst [vmem:[%s203 + $0x3e0] sm:$0xff] %v1867
        %2380 = vst [vmem:[%s203 + $0x3e8] sm:$0xff] %v1868
        %2381 = vst [vmem:[%s203 + $0x3f0] sm:$0xff] %v1869
        %2382 = vst [vmem:[%s203 + $0x3f8] sm:$0xff] %v1870
        %2383 = vst [vmem:[%s203 + $0x400] sm:$0xff] %v1871
        %2384 = vst [vmem:[%s203 + $0x408] sm:$0xff] %v1872
        %2385 = vst [vmem:[%s203 + $0x410] sm:$0xff] %v1873
        %2386 = vst [vmem:[%s203 + $0x418] sm:$0xff] %v1874
        %2387 = vst [vmem:[%s203 + $0x420] sm:$0xff] %v1875
        %2388 = vst [vmem:[%s203 + $0x428] sm:$0xff] %v1876
        %2389 = vst [vmem:[%s203 + $0x430] sm:$0xff] %v1877
        %2390 = vst [vmem:[%s203 + $0x438] sm:$0xff] %v1878
        %2391 = vst [vmem:[%s203 + $0x440] sm:$0xff] %v1879
        %2392 = vst [vmem:[%s203 + $0x448] sm:$0xff] %v1880
        %2393 = vst [vmem:[%s203 + $0x450] sm:$0xff] %v1881
        %2394 = vst [vmem:[%s203 + $0x458] sm:$0xff] %v1882
        %2395 = vst [vmem:[%s203 + $0x460] sm:$0xff] %v1883
        %2396 = vst [vmem:[%s203 + $0x468] sm:$0xff] %v1884
        %2397 = vst [vmem:[%s203 + $0x470] sm:$0xff] %v1885
        %2398 = vst [vmem:[%s203 + $0x478] sm:$0xff] %v1886
        %2399 = vst [vmem:[%s203 + $0x480] sm:$0xff] %v1887
        %2400 = vst [vmem:[%s203 + $0x488] sm:$0xff] %v1888
        %2401 = vst [vmem:[%s203 + $0x490] sm:$0xff] %v1889
        %2402 = vst [vmem:[%s203 + $0x498] sm:$0xff] %v1890
        %2403 = vst [vmem:[%s203 + $0x4a0] sm:$0xff] %v1891
        %2404 = vst [vmem:[%s203 + $0x4a8] sm:$0xff] %v1892
        %2405 = vst [vmem:[%s203 + $0x4b0] sm:$0xff] %v1893
        %2406 = vst [vmem:[%s203 + $0x4b8] sm:$0xff] %v1894
        %2407 = vst [vmem:[%s203 + $0x4c0] sm:$0xff] %v1895
        %2408 = vst [vmem:[%s203 + $0x4c8] sm:$0xff] %v1896
        %2409 = vst [vmem:[%s203 + $0x4d0] sm:$0xff] %v1897
        %2410 = vst [vmem:[%s203 + $0x4d8] sm:$0xff] %v1898
        %2411 = vst [vmem:[%s203 + $0x4e0] sm:$0xff] %v1899
        %2412 = vst [vmem:[%s203 + $0x4e8] sm:$0xff] %v1900
        %2413 = vst [vmem:[%s203 + $0x4f0] sm:$0xff] %v1901
        %2414 = vst [vmem:[%s203 + $0x4f8] sm:$0xff] %v1902
        %2415 = vst [vmem:[%s203 + $0x500] sm:$0xff] %v1903
        %2416 = vst [vmem:[%s203 + $0x508] sm:$0xff] %v1904
        %2417 = vst [vmem:[%s203 + $0x510] sm:$0xff] %v1905
        %2418 = vst [vmem:[%s203 + $0x518] sm:$0xff] %v1906
        %2419 = vst [vmem:[%s203 + $0x520] sm:$0xff] %v1907
        %2420 = vst [vmem:[%s203 + $0x528] sm:$0xff] %v1908
        %2421 = vst [vmem:[%s203 + $0x530] sm:$0xff] %v1909
        %2422 = vst [vmem:[%s203 + $0x538] sm:$0xff] %v1910
        %2423 = vst [vmem:[%s203 + $0x540] sm:$0xff] %v1911
        %2424 = vst [vmem:[%s203 + $0x548] sm:$0xff] %v1912
        %2425 = vst [vmem:[%s203 + $0x550] sm:$0xff] %v1913
        %2426 = vst [vmem:[%s203 + $0x558] sm:$0xff] %v1914
        %2427 = vst [vmem:[%s203 + $0x560] sm:$0xff] %v1915
        %2428 = vst [vmem:[%s203 + $0x568] sm:$0xff] %v1916
        %2429 = vst [vmem:[%s203 + $0x570] sm:$0xff] %v1917
        %2430 = vst [vmem:[%s203 + $0x578] sm:$0xff] %v1918
        %2431 = vst [vmem:[%s203 + $0x580] sm:$0xff] %v1919
        %2432 = vst [vmem:[%s203 + $0x588] sm:$0xff] %v1920
        %2433 = vst [vmem:[%s203 + $0x590] sm:$0xff] %v1921
        %2434 = vst [vmem:[%s203 + $0x598] sm:$0xff] %v1922
        %2435 = vst [vmem:[%s203 + $0x5a0] sm:$0xff] %v1923
        %2436 = vst [vmem:[%s203 + $0x5a8] sm:$0xff] %v1924
        %2437 = vst [vmem:[%s203 + $0x5b0] sm:$0xff] %v1925
        %2438 = vst [vmem:[%s203 + $0x5b8] sm:$0xff] %v1926
        %2439 = vst [vmem:[%s203 + $0x5c0] sm:$0xff] %v1927
        %2440 = vst [vmem:[%s203 + $0x5c8] sm:$0xff] %v1928
        %2441 = vst [vmem:[%s203 + $0x5d0] sm:$0xff] %v1929
        %2442 = vst [vmem:[%s203 + $0x5d8] sm:$0xff] %v1930
        %2443 = vst [vmem:[%s203 + $0x5e0] sm:$0xff] %v1931
        %2444 = vst [vmem:[%s203 + $0x5e8] sm:$0xff] %v1932
        %2445 = vst [vmem:[%s203 + $0x5f0] sm:$0xff] %v1933
        %2446 = vst [vmem:[%s203 + $0x5f8] sm:$0xff] %v1934
        %2447 = vst [vmem:[%s203 + $0x600] sm:$0xff] %v1935
        %2448 = vst [vmem:[%s203 + $0x608] sm:$0xff] %v1936
        %2449 = vst [vmem:[%s203 + $0x610] sm:$0xff] %v1937
        %2450 = vst [vmem:[%s203 + $0x618] sm:$0xff] %v1938
        %2451 = vst [vmem:[%s203 + $0x620] sm:$0xff] %v1939
        %2452 = vst [vmem:[%s203 + $0x628] sm:$0xff] %v1940
        %2453 = vst [vmem:[%s203 + $0x630] sm:$0xff] %v1941
        %2454 = vst [vmem:[%s203 + $0x638] sm:$0xff] %v1942
        %2455 = vst [vmem:[%s203 + $0x640] sm:$0xff] %v1943
        %2456 = vst [vmem:[%s203 + $0x648] sm:$0xff] %v1944
        %2457 = vst [vmem:[%s203 + $0x650] sm:$0xff] %v1945
        %2458 = vst [vmem:[%s203 + $0x658] sm:$0xff] %v1946
        %2459 = vst [vmem:[%s203 + $0x660] sm:$0xff] %v1947
        %2460 = vst [vmem:[%s203 + $0x668] sm:$0xff] %v1948
        %2461 = vst [vmem:[%s203 + $0x670] sm:$0xff] %v1949
        %2462 = vst [vmem:[%s203 + $0x678] sm:$0xff] %v1950
        %2463 = vst [vmem:[%s203 + $0x680] sm:$0xff] %v1951
        %2464 = vst [vmem:[%s203 + $0x688] sm:$0xff] %v1952
        %2465 = vst [vmem:[%s203 + $0x690] sm:$0xff] %v1953
        %2466 = vst [vmem:[%s203 + $0x698] sm:$0xff] %v1954
        %2467 = vst [vmem:[%s203 + $0x6a0] sm:$0xff] %v1955
        %2468 = vst [vmem:[%s203 + $0x6a8] sm:$0xff] %v1956
        %2469 = vst [vmem:[%s203 + $0x6b0] sm:$0xff] %v1957
        %2470 = vst [vmem:[%s203 + $0x6b8] sm:$0xff] %v1958
        %2471 = vst [vmem:[%s203 + $0x6c0] sm:$0xff] %v1959
        %2472 = vst [vmem:[%s203 + $0x6c8] sm:$0xff] %v1960
        %2473 = vst [vmem:[%s203 + $0x6d0] sm:$0xff] %v1961
        %2474 = vst [vmem:[%s203 + $0x6d8] sm:$0xff] %v1962
        %2475 = vst [vmem:[%s203 + $0x6e0] sm:$0xff] %v1963
        %2476 = vst [vmem:[%s203 + $0x6e8] sm:$0xff] %v1964
        %2477 = vst [vmem:[%s203 + $0x6f0] sm:$0xff] %v1965
        %2478 = vst [vmem:[%s203 + $0x6f8] sm:$0xff] %v1966
        %2479 = vst [vmem:[%s203 + $0x700] sm:$0xff] %v1967
        %2480 = vst [vmem:[%s203 + $0x708] sm:$0xff] %v1968
        %2481 = vst [vmem:[%s203 + $0x710] sm:$0xff] %v1969
        %2482 = vst [vmem:[%s203 + $0x718] sm:$0xff] %v1970
        %2483 = vst [vmem:[%s203 + $0x720] sm:$0xff] %v1971
        %2484 = vst [vmem:[%s203 + $0x728] sm:$0xff] %v1972
        %2485 = vst [vmem:[%s203 + $0x730] sm:$0xff] %v1973
        %2486 = vst [vmem:[%s203 + $0x738] sm:$0xff] %v1974
        %2487 = vst [vmem:[%s203 + $0x740] sm:$0xff] %v1975
        %2488 = vst [vmem:[%s203 + $0x748] sm:$0xff] %v1976
        %2489 = vst [vmem:[%s203 + $0x750] sm:$0xff] %v1977
        %2490 = vst [vmem:[%s203 + $0x758] sm:$0xff] %v1978
        %2491 = vst [vmem:[%s203 + $0x760] sm:$0xff] %v1979
        %2492 = vst [vmem:[%s203 + $0x768] sm:$0xff] %v1980
        %2493 = vst [vmem:[%s203 + $0x770] sm:$0xff] %v1981
        %2494 = vst [vmem:[%s203 + $0x778] sm:$0xff] %v1982
        %2495 = vst [vmem:[%s203 + $0x780] sm:$0xff] %v1983
        %2496 = vst [vmem:[%s203 + $0x788] sm:$0xff] %v1984
        %2497 = vst [vmem:[%s203 + $0x790] sm:$0xff] %v1985
        %2498 = vst [vmem:[%s203 + $0x798] sm:$0xff] %v1986
        %2499 = vst [vmem:[%s203 + $0x7a0] sm:$0xff] %v1987
        %2500 = vst [vmem:[%s203 + $0x7a8] sm:$0xff] %v1988
        %2501 = vst [vmem:[%s203 + $0x7b0] sm:$0xff] %v1989
        %2502 = vst [vmem:[%s203 + $0x7b8] sm:$0xff] %v1990
        %2503 = vst [vmem:[%s203 + $0x7c0] sm:$0xff] %v1991
        %2504 = vst [vmem:[%s203 + $0x7c8] sm:$0xff] %v1992
        %2505 = vst [vmem:[%s203 + $0x7d0] sm:$0xff] %v1993
        %2506 = vst [vmem:[%s203 + $0x7d8] sm:$0xff] %v1994
        %2507 = vst [vmem:[%s203 + $0x7e0] sm:$0xff] %v1995
        %2508 = vst [vmem:[%s203 + $0x7e8] sm:$0xff] %v1996
        %2509 = vst [vmem:[%s203 + $0x7f0] sm:$0xff] %v1997
        %2510 = vst [vmem:[%s203 + $0x7f8] sm:$0xff] %v1998
        %2511 = vst [vmem:[%s203 + $0x800] sm:$0xff] %v1999
        %2512 = vst [vmem:[%s203 + $0x808] sm:$0xff] %v2000
        %2513 = vst [vmem:[%s203 + $0x810] sm:$0xff] %v2001
        %2514 = vst [vmem:[%s203 + $0x818] sm:$0xff] %v2002
        %2515 = vst [vmem:[%s203 + $0x820] sm:$0xff] %v2003
        %2516 = vst [vmem:[%s203 + $0x828] sm:$0xff] %v2004
        %2517 = vst [vmem:[%s203 + $0x830] sm:$0xff] %v2005
        %2518 = vst [vmem:[%s203 + $0x838] sm:$0xff] %v2006
        %2519 = vst [vmem:[%s203 + $0x840] sm:$0xff] %v2007
        %2520 = vst [vmem:[%s203 + $0x848] sm:$0xff] %v2008
        %2521 = vst [vmem:[%s203 + $0x850] sm:$0xff] %v2009
        %2522 = vst [vmem:[%s203 + $0x858] sm:$0xff] %v2010
        %2523 = vst [vmem:[%s203 + $0x860] sm:$0xff] %v2011
        %2524 = vst [vmem:[%s203 + $0x868] sm:$0xff] %v2012
        %2525 = vst [vmem:[%s203 + $0x870] sm:$0xff] %v2013
        %2526 = vst [vmem:[%s203 + $0x878] sm:$0xff] %v2014
        %2527 = vst [vmem:[%s203 + $0x880] sm:$0xff] %v2015
        %2528 = vst [vmem:[%s203 + $0x888] sm:$0xff] %v2016
        %2529 = vst [vmem:[%s203 + $0x890] sm:$0xff] %v2017
        %2530 = vst [vmem:[%s203 + $0x898] sm:$0xff] %v2018
        %2531 = vst [vmem:[%s203 + $0x8a0] sm:$0xff] %v2019
        %2532 = vst [vmem:[%s203 + $0x8a8] sm:$0xff] %v2020
        %2533 = vst [vmem:[%s203 + $0x8b0] sm:$0xff] %v2021
        %2534 = vst [vmem:[%s203 + $0x8b8] sm:$0xff] %v2022
        %2535 = vst [vmem:[%s203 + $0x8c0] sm:$0xff] %v2023
        %2536 = vst [vmem:[%s203 + $0x8c8] sm:$0xff] %v2024
        %2537 = vst [vmem:[%s203 + $0x8d0] sm:$0xff] %v2025
        %2538 = vst [vmem:[%s203 + $0x8d8] sm:$0xff] %v2026
        %2539 = vst [vmem:[%s203 + $0x8e0] sm:$0xff] %v2027
        %2540 = vst [vmem:[%s203 + $0x8e8] sm:$0xff] %v2028
        %2541 = vst [vmem:[%s203 + $0x8f0] sm:$0xff] %v2029
        %2542 = vst [vmem:[%s203 + $0x8f8] sm:$0xff] %v2030
        %2543 = vst [vmem:[%s203 + $0x900] sm:$0xff] %v2031
        %2544 = vst [vmem:[%s203 + $0x908] sm:$0xff] %v2032
        %2545 = vst [vmem:[%s203 + $0x910] sm:$0xff] %v2033
        %2546 = vst [vmem:[%s203 + $0x918] sm:$0xff] %v2034
        %2547 = vst [vmem:[%s203 + $0x920] sm:$0xff] %v2035
        %2548 = vst [vmem:[%s203 + $0x928] sm:$0xff] %v2036
        %2549 = vst [vmem:[%s203 + $0x930] sm:$0xff] %v2037
        %2550 = vst [vmem:[%s203 + $0x938] sm:$0xff] %v2038
        %2551 = vst [vmem:[%s203 + $0x940] sm:$0xff] %v2039
        %2552 = vst [vmem:[%s203 + $0x948] sm:$0xff] %v2040
        %2553 = vst [vmem:[%s203 + $0x950] sm:$0xff] %v2041
        %2554 = vst [vmem:[%s203 + $0x958] sm:$0xff] %v2042
        %2555 = vst [vmem:[%s203 + $0x960] sm:$0xff] %v2043
        %2556 = vst [vmem:[%s203 + $0x968] sm:$0xff] %v2044
        %2557 = vst [vmem:[%s203 + $0x970] sm:$0xff] %v2045
        %2558 = vst [vmem:[%s203 + $0x978] sm:$0xff] %v2046
        %2559 = vst [vmem:[%s203 + $0x980] sm:$0xff] %v2047
        %2560 = vst [vmem:[%s203 + $0x988] sm:$0xff] %v2048
        %2561 = vst [vmem:[%s203 + $0x990] sm:$0xff] %v2049
        %2562 = vst [vmem:[%s203 + $0x998] sm:$0xff] %v2050
        %2563 = vst [vmem:[%s203 + $0x9a0] sm:$0xff] %v2051
        %2564 = vst [vmem:[%s203 + $0x9a8] sm:$0xff] %v2052
        %2565 = vst [vmem:[%s203 + $0x9b0] sm:$0xff] %v2053
        %2566 = vst [vmem:[%s203 + $0x9b8] sm:$0xff] %v2054
        %2567 = vst [vmem:[%s203 + $0x9c0] sm:$0xff] %v2055
        %2568 = vst [vmem:[%s203 + $0x9c8] sm:$0xff] %v2056
        %2569 = vst [vmem:[%s203 + $0x9d0] sm:$0xff] %v2057
        %2570 = vst [vmem:[%s203 + $0x9d8] sm:$0xff] %v2058
        %2571 = vst [vmem:[%s203 + $0x9e0] sm:$0xff] %v2059
        %2572 = vst [vmem:[%s203 + $0x9e8] sm:$0xff] %v2060
        %2573 = vst [vmem:[%s203 + $0x9f0] sm:$0xff] %v2061
        %2574 = vst [vmem:[%s203 + $0x9f8] sm:$0xff] %v2062
        %2575 = vst [vmem:[%s203 + $0xa00] sm:$0xff] %v2063
        %2576 = vst [vmem:[%s203 + $0xa08] sm:$0xff] %v2064
        %2577 = vst [vmem:[%s203 + $0xa10] sm:$0xff] %v2065
        %2578 = vst [vmem:[%s203 + $0xa18] sm:$0xff] %v2066
        %2579 = vst [vmem:[%s203 + $0xa20] sm:$0xff] %v2067
        %2580 = vst [vmem:[%s203 + $0xa28] sm:$0xff] %v2068
        %2581 = vst [vmem:[%s203 + $0xa30] sm:$0xff] %v2069
        %2582 = vst [vmem:[%s203 + $0xa38] sm:$0xff] %v2070
        %2583 = vst [vmem:[%s203 + $0xa40] sm:$0xff] %v2071
        %2584 = vst [vmem:[%s203 + $0xa48] sm:$0xff] %v2072
        %2585 = vst [vmem:[%s203 + $0xa50] sm:$0xff] %v2073
        %2586 = vst [vmem:[%s203 + $0xa58] sm:$0xff] %v2074
        %2587 = vst [vmem:[%s203 + $0xa60] sm:$0xff] %v2075
        %2588 = vst [vmem:[%s203 + $0xa68] sm:$0xff] %v2076
        %2589 = vst [vmem:[%s203 + $0xa70] sm:$0xff] %v2077
        %2590 = vst [vmem:[%s203 + $0xa78] sm:$0xff] %v2078
        %2591 = vst [vmem:[%s203 + $0xa80] sm:$0xff] %v2079
        %2592 = vst [vmem:[%s203 + $0xa88] sm:$0xff] %v2080
        %2593 = vst [vmem:[%s203 + $0xa90] sm:$0xff] %v2081
        %2594 = vst [vmem:[%s203 + $0xa98] sm:$0xff] %v2082
        %2595 = vst [vmem:[%s203 + $0xaa0] sm:$0xff] %v2083
        %2596 = vst [vmem:[%s203 + $0xaa8] sm:$0xff] %v2084
        %2597 = vst [vmem:[%s203 + $0xab0] sm:$0xff] %v2085
        %2598 = vst [vmem:[%s203 + $0xab8] sm:$0xff] %v2086
        %2599 = vst [vmem:[%s203 + $0xac0] sm:$0xff] %v2087
        %2600 = vst [vmem:[%s203 + $0xac8] sm:$0xff] %v2088
        %2601 = vst [vmem:[%s203 + $0xad0] sm:$0xff] %v2089
        %2602 = vst [vmem:[%s203 + $0xad8] sm:$0xff] %v2090
        %2603 = vst [vmem:[%s203 + $0xae0] sm:$0xff] %v2091
        %2604 = vst [vmem:[%s203 + $0xae8] sm:$0xff] %v2092
        %2605 = vst [vmem:[%s203 + $0xaf0] sm:$0xff] %v2093
        %2606 = vst [vmem:[%s203 + $0xaf8] sm:$0xff] %v2094
        %2607 = vst [vmem:[%s203 + $0xb00] sm:$0xff] %v2095
        %2608 = vst [vmem:[%s203 + $0xb08] sm:$0xff] %v2096
        %2609 = vst [vmem:[%s203 + $0xb10] sm:$0xff] %v2097
        %2610 = vst [vmem:[%s203 + $0xb18] sm:$0xff] %v2098
        %2611 = vst [vmem:[%s203 + $0xb20] sm:$0xff] %v2099
        %2612 = vst [vmem:[%s203 + $0xb28] sm:$0xff] %v2100
        %2613 = vst [vmem:[%s203 + $0xb30] sm:$0xff] %v2101
        %2614 = vst [vmem:[%s203 + $0xb38] sm:$0xff] %v2102
        %2615 = vst [vmem:[%s203 + $0xb40] sm:$0xff] %v2103
        %2616 = vst [vmem:[%s203 + $0xb48] sm:$0xff] %v2104
        %2617 = vst [vmem:[%s203 + $0xb50] sm:$0xff] %v2105
        %2618 = vst [vmem:[%s203 + $0xb58] sm:$0xff] %v2106
        %2619 = vst [vmem:[%s203 + $0xb60] sm:$0xff] %v2107
        %2620 = vst [vmem:[%s203 + $0xb68] sm:$0xff] %v2108
        %2621 = vst [vmem:[%s203 + $0xb70] sm:$0xff] %v2109
        %2622 = vst [vmem:[%s203 + $0xb78] sm:$0xff] %v2110
        %2623 = vst [vmem:[%s203 + $0xb80] sm:$0xff] %v2111
        %2624 = vst [vmem:[%s203 + $0xb88] sm:$0xff] %v2112
        %2625 = vst [vmem:[%s203 + $0xb90] sm:$0xff] %v2113
        %2626 = vst [vmem:[%s203 + $0xb98] sm:$0xff] %v2114
        %2627 = vst [vmem:[%s203 + $0xba0] sm:$0xff] %v2115
        %2628 = vst [vmem:[%s203 + $0xba8] sm:$0xff] %v2116
        %2629 = vst [vmem:[%s203 + $0xbb0] sm:$0xff] %v2117
        %2630 = vst [vmem:[%s203 + $0xbb8] sm:$0xff] %v2118
        %2631 = vst [vmem:[%s203 + $0xbc0] sm:$0xff] %v2119
        %2632 = vst [vmem:[%s203 + $0xbc8] sm:$0xff] %v2120
        %2633 = vst [vmem:[%s203 + $0xbd0] sm:$0xff] %v2121
        %2634 = vst [vmem:[%s203 + $0xbd8] sm:$0xff] %v2122
        %2635 = vst [vmem:[%s203 + $0xbe0] sm:$0xff] %v2123
        %2636 = vst [vmem:[%s203 + $0xbe8] sm:$0xff] %v2124
        %2637 = vst [vmem:[%s203 + $0xbf0] sm:$0xff] %v2125
        %2638 = vst [vmem:[%s203 + $0xbf8] sm:$0xff] %v2126
        %2639 = vst [vmem:[%s203 + $0xc00] sm:$0xff] %v2127
        %2640 = vst [vmem:[%s203 + $0xc08] sm:$0xff] %v2128
        %2641 = vst [vmem:[%s203 + $0xc10] sm:$0xff] %v2129
        %2642 = vst [vmem:[%s203 + $0xc18] sm:$0xff] %v2130
        %2643 = vst [vmem:[%s203 + $0xc20] sm:$0xff] %v2131
        %2644 = vst [vmem:[%s203 + $0xc28] sm:$0xff] %v2132
        %2645 = vst [vmem:[%s203 + $0xc30] sm:$0xff] %v2133
        %2646 = vst [vmem:[%s203 + $0xc38] sm:$0xff] %v2134
        %2647 = vst [vmem:[%s203 + $0xc40] sm:$0xff] %v2135
        %2648 = vst [vmem:[%s203 + $0xc48] sm:$0xff] %v2136
        %2649 = vst [vmem:[%s203 + $0xc50] sm:$0xff] %v2137
        %2650 = vst [vmem:[%s203 + $0xc58] sm:$0xff] %v2138
        %2651 = vst [vmem:[%s203 + $0xc60] sm:$0xff] %v2139
        %2652 = vst [vmem:[%s203 + $0xc68] sm:$0xff] %v2140
        %2653 = vst [vmem:[%s203 + $0xc70] sm:$0xff] %v2141
        %2654 = vst [vmem:[%s203 + $0xc78] sm:$0xff] %v2142
        %2655 = vst [vmem:[%s203 + $0xc80] sm:$0xff] %v2143
        %2656 = vst [vmem:[%s203 + $0xc88] sm:$0xff] %v2144
        %2657 = vst [vmem:[%s203 + $0xc90] sm:$0xff] %v2145
        %2658 = vst [vmem:[%s203 + $0xc98] sm:$0xff] %v2146
        %2659 = vst [vmem:[%s203 + $0xca0] sm:$0xff] %v2147
        %2660 = vst [vmem:[%s203 + $0xca8] sm:$0xff] %v2148
        %2661 = vst [vmem:[%s203 + $0xcb0] sm:$0xff] %v2149
        %2662 = vst [vmem:[%s203 + $0xcb8] sm:$0xff] %v2150
        %2663 = vst [vmem:[%s203 + $0xcc0] sm:$0xff] %v2151
        %2664 = vst [vmem:[%s203 + $0xcc8] sm:$0xff] %v2152
        %2665 = vst [vmem:[%s203 + $0xcd0] sm:$0xff] %v2153
        %2666 = vst [vmem:[%s203 + $0xcd8] sm:$0xff] %v2154
        %2667 = vst [vmem:[%s203 + $0xce0] sm:$0xff] %v2155
        %2668 = vst [vmem:[%s203 + $0xce8] sm:$0xff] %v2156
        %2669 = vst [vmem:[%s203 + $0xcf0] sm:$0xff] %v2157
        %2670 = vst [vmem:[%s203 + $0xcf8] sm:$0xff] %v2158
        %2671 = vst [vmem:[%s203 + $0xd00] sm:$0xff] %v2159
        %2672 = vst [vmem:[%s203 + $0xd08] sm:$0xff] %v2160
        %2673 = vst [vmem:[%s203 + $0xd10] sm:$0xff] %v2161
        %2674 = vst [vmem:[%s203 + $0xd18] sm:$0xff] %v2162
        %2675 = vst [vmem:[%s203 + $0xd20] sm:$0xff] %v2163
        %2676 = vst [vmem:[%s203 + $0xd28] sm:$0xff] %v2164
        %2677 = vst [vmem:[%s203 + $0xd30] sm:$0xff] %v2165
        %2678 = vst [vmem:[%s203 + $0xd38] sm:$0xff] %v2166
        %2679 = vst [vmem:[%s203 + $0xd40] sm:$0xff] %v2167
        %2680 = vst [vmem:[%s203 + $0xd48] sm:$0xff] %v2168
        %2681 = vst [vmem:[%s203 + $0xd50] sm:$0xff] %v2169
        %2682 = vst [vmem:[%s203 + $0xd58] sm:$0xff] %v2170
        %2683 = vst [vmem:[%s203 + $0xd60] sm:$0xff] %v2171
        %2684 = vst [vmem:[%s203 + $0xd68] sm:$0xff] %v2172
        %2685 = vst [vmem:[%s203 + $0xd70] sm:$0xff] %v2173
        %2686 = vst [vmem:[%s203 + $0xd78] sm:$0xff] %v2174
        %2687 = vst [vmem:[%s203 + $0xd80] sm:$0xff] %v2175
        %2688 = vst [vmem:[%s203 + $0xd88] sm:$0xff] %v2176
        %2689 = vst [vmem:[%s203 + $0xd90] sm:$0xff] %v2177
        %2690 = vst [vmem:[%s203 + $0xd98] sm:$0xff] %v2178
        %2691 = vst [vmem:[%s203 + $0xda0] sm:$0xff] %v2179
        %2692 = vst [vmem:[%s203 + $0xda8] sm:$0xff] %v2180
        %2693 = vst [vmem:[%s203 + $0xdb0] sm:$0xff] %v2181
        %2694 = vst [vmem:[%s203 + $0xdb8] sm:$0xff] %v2182
        %2695 = vst [vmem:[%s203 + $0xdc0] sm:$0xff] %v2183
        %2696 = vst [vmem:[%s203 + $0xdc8] sm:$0xff] %v2184
        %2697 = vst [vmem:[%s203 + $0xdd0] sm:$0xff] %v2185
        %2698 = vst [vmem:[%s203 + $0xdd8] sm:$0xff] %v2186
        %2699 = vst [vmem:[%s203 + $0xde0] sm:$0xff] %v2187
        %2700 = vst [vmem:[%s203 + $0xde8] sm:$0xff] %v2188
        %2701 = vst [vmem:[%s203 + $0xdf0] sm:$0xff] %v2189
        %2702 = vst [vmem:[%s203 + $0xdf8] sm:$0xff] %v2190
        %2703 = vst [vmem:[%s203 + $0xe00] sm:$0xff] %v2191
        %2704 = vst [vmem:[%s203 + $0xe08] sm:$0xff] %v2192
        %2705 = vst [vmem:[%s203 + $0xe10] sm:$0xff] %v2193
        %2706 = vst [vmem:[%s203 + $0xe18] sm:$0xff] %v2194
        %2707 = vst [vmem:[%s203 + $0xe20] sm:$0xff] %v2195
        %2708 = vst [vmem:[%s203 + $0xe28] sm:$0xff] %v2196
        %2709 = vst [vmem:[%s203 + $0xe30] sm:$0xff] %v2197
        %2710 = vst [vmem:[%s203 + $0xe38] sm:$0xff] %v2198
        %2711 = vst [vmem:[%s203 + $0xe40] sm:$0xff] %v2199
        %2712 = vst [vmem:[%s203 + $0xe48] sm:$0xff] %v2200
        %2713 = vst [vmem:[%s203 + $0xe50] sm:$0xff] %v2201
        %2714 = vst [vmem:[%s203 + $0xe58] sm:$0xff] %v2202
        %2715 = vst [vmem:[%s203 + $0xe60] sm:$0xff] %v2203
        %2716 = vst [vmem:[%s203 + $0xe68] sm:$0xff] %v2204
        %2717 = vst [vmem:[%s203 + $0xe70] sm:$0xff] %v2205
        %2718 = vst [vmem:[%s203 + $0xe78] sm:$0xff] %v2206
        %2719 = vst [vmem:[%s203 + $0xe80] sm:$0xff] %v2207
        %2720 = vst [vmem:[%s203 + $0xe88] sm:$0xff] %v2208
        %2721 = vst [vmem:[%s203 + $0xe90] sm:$0xff] %v2209
        %2722 = vst [vmem:[%s203 + $0xe98] sm:$0xff] %v2210
        %2723 = vst [vmem:[%s203 + $0xea0] sm:$0xff] %v2211
        %2724 = vst [vmem:[%s203 + $0xea8] sm:$0xff] %v2212
        %2725 = vst [vmem:[%s203 + $0xeb0] sm:$0xff] %v2213
        %2726 = vst [vmem:[%s203 + $0xeb8] sm:$0xff] %v2214
        %2727 = vst [vmem:[%s203 + $0xec0] sm:$0xff] %v2215
        %2728 = vst [vmem:[%s203 + $0xec8] sm:$0xff] %v2216
        %2729 = vst [vmem:[%s203 + $0xed0] sm:$0xff] %v2217
        %2730 = vst [vmem:[%s203 + $0xed8] sm:$0xff] %v2218
        %2731 = vst [vmem:[%s203 + $0xee0] sm:$0xff] %v2219
        %2732 = vst [vmem:[%s203 + $0xee8] sm:$0xff] %v2220
        %2733 = vst [vmem:[%s203 + $0xef0] sm:$0xff] %v2221
        %2734 = vst [vmem:[%s203 + $0xef8] sm:$0xff] %v2222
        %2735 = vst [vmem:[%s203 + $0xf00] sm:$0xff] %v2223
        %2736 = vst [vmem:[%s203 + $0xf08] sm:$0xff] %v2224
        %2737 = vst [vmem:[%s203 + $0xf10] sm:$0xff] %v2225
        %2738 = vst [vmem:[%s203 + $0xf18] sm:$0xff] %v2226
        %2739 = vst [vmem:[%s203 + $0xf20] sm:$0xff] %v2227
        %2740 = vst [vmem:[%s203 + $0xf28] sm:$0xff] %v2228
        %2741 = vst [vmem:[%s203 + $0xf30] sm:$0xff] %v2229
        %2742 = vst [vmem:[%s203 + $0xf38] sm:$0xff] %v2230
        %2743 = vst [vmem:[%s203 + $0xf40] sm:$0xff] %v2231
        %2744 = vst [vmem:[%s203 + $0xf48] sm:$0xff] %v2232
        %2745 = vst [vmem:[%s203 + $0xf50] sm:$0xff] %v2233
        %2746 = vst [vmem:[%s203 + $0xf58] sm:$0xff] %v2234
        %2747 = vst [vmem:[%s203 + $0xf60] sm:$0xff] %v2235
        %2748 = vst [vmem:[%s203 + $0xf68] sm:$0xff] %v2236
        %2749 = vst [vmem:[%s203 + $0xf70] sm:$0xff] %v2237
        %2750 = vst [vmem:[%s203 + $0xf78] sm:$0xff] %v2238
        %2751 = vst [vmem:[%s203 + $0xf80] sm:$0xff] %v2239
        %2752 = vst [vmem:[%s203 + $0xf88] sm:$0xff] %v2240
        %2753 = vst [vmem:[%s203 + $0xf90] sm:$0xff] %v2241
        %2754 = vst [vmem:[%s203 + $0xf98] sm:$0xff] %v2242
        %2755 = vst [vmem:[%s203 + $0xfa0] sm:$0xff] %v2243
        %2756 = vst [vmem:[%s203 + $0xfa8] sm:$0xff] %v2244
        %2757 = vst [vmem:[%s203 + $0xfb0] sm:$0xff] %v2245
        %2758 = vst [vmem:[%s203 + $0xfb8] sm:$0xff] %v2246
        %2759 = vst [vmem:[%s203 + $0xfc0] sm:$0xff] %v2247
        %2760 = vst [vmem:[%s203 + $0xfc8] sm:$0xff] %v2248
        %2761 = vst [vmem:[%s203 + $0xfd0] sm:$0xff] %v2249
        %2762 = vst [vmem:[%s203 + $0xfd8] sm:$0xff] %v2250
        %2763 = vst [vmem:[%s203 + $0xfe0] sm:$0xff] %v2251
        %2764 = vst [vmem:[%s203 + $0xfe8] sm:$0xff] %v2252
        %2765 = vst [vmem:[%s203 + $0xff0] sm:$0xff] %v2253
        %2766 = vst [vmem:[%s203 + $0xff8] sm:$0xff] %v2254
        %s2767 = sand.u32 %s82, 1
        %s2768 = scalar_lea.sflag [#allocation4], %s2767
        %s2769 = sand.u32 %s82, 1
        %s2770 = smul.addr %s2769, 4096
        %s2771 = scalar_lea.vmem [#allocation7], %s2770
        // Predicated region
        $region37: #{tpu_custom_call.1} parent=27 // pred_check
          %p2772 = pneg %p92
        $region38: #{tpu_custom_call.1} parent=27 // pred_check_branch
          %2774 = sbr.rel (%p2772) target = $region40
        $region39: #{tpu_custom_call.1} parent=27 // pred_region
          %s2775 = smul.u32 64, %s22
          %s2777 = ssub.s32 65536, 65536
          %2778 = vsyncadd %s2768, %s2777
          %s2779 = smul.addr %s2775, 8
          %s2780 = smul.addr %s2779, 128
          %s2781 = scalar_lea.hbm %s2, %s2780
          %s2782 = sshll.u32 %s2771, 4
          %s2783 = int_to_ptr.vmem [resolvable:$true] %s2782
          %2788 = dma.vmem_to_hbm [thread:$0]  %s2783, 65536, %s2781, %s2768, 1024, 1024, 64
        $region40: #{tpu_custom_call.1} parent=27 // pred_fallthru
          _
      $region28: #{tpu_custom_call.1} parent=5 // pred_fallthru
        _
      %p2789 = scmp.le.s32.totalorder 2, %s17
      // Predicated region
      $region41: #{tpu_custom_call.1} parent=5 // pred_check
        %p2790 = pneg %p2789
      $region42: #{tpu_custom_call.1} parent=5 // pred_check_branch
        %2792 = sbr.rel (%p2790) target = $region44
      $region43: #{tpu_custom_call.1} parent=5 // pred_region
        %s2793 = ssub.s32 %s17, 2
        // Predicated region
        $region45: #{tpu_custom_call.1} parent=43 // pred_check
          %p2794 = pneg %p98
        $region46: #{tpu_custom_call.1} parent=43 // pred_check_branch
          %2796 = sbr.rel (%p2794) target = $region48
        $region47: #{tpu_custom_call.1} parent=43 // pred_region
          %s2797 = sand.u32 %s83, 1
          %s2798 = scalar_lea.sflag [#allocation4], %s2797
          %s2799 = sand.u32 %s83, 1
          %s2800 = smul.addr %s2799, 4096
          %s2801 = scalar_lea.vmem [#allocation7], %s2800
          %2802 = dma.done %s2798, 65536
        $region48: #{tpu_custom_call.1} parent=43 // pred_fallthru
          _
      $region44: #{tpu_custom_call.1} parent=5 // pred_fallthru
        _
    $region6: #{tpu_custom_call.1} parent=1 // loop_footer
      %s21 = sadd.s32 1, %s17
    $region7: #{tpu_custom_call.1} parent=1 // loop_footer_branch
      %16 = sbr.rel target = $region3
    $region8: #{tpu_custom_call.1} parent=1 // loop_exit
      _
    %2803 = vsyncpa [#allocation3], 1
    %s2804 = scalar_lea.sflag [#allocation3], 1
    %2805 = vsyncpa %s2804, 1
    %2806 = vsyncpa [#allocation6], 1
    %s2807 = scalar_lea.sflag [#allocation6], 1
    %2808 = vsyncpa %s2807, 1
    %2809 = vsyncpa [#allocation4], 1
    %s2810 = scalar_lea.sflag [#allocation4], 1
    %2811 = vsyncpa %s2810, 1

</llo_original>
